<compile_context>
chip_gen: v7x
topology: tpu7x:2x2x1
jax: 0.10.0
libtpu: 0.0.40
codegen_flags: <defaults>
</compile_context>

<pallas_src>
import jax
import jax.numpy as jnp
from jax import lax
from jax.experimental import pallas as pl
from jax.experimental.pallas import tpu as pltpu

BN_EPS = 1e-5
NEG_SLOPE = 0.1


def _make_fused_kernel(num_layers, N, C, Hp, Wp, OFF, Lw, count):
    """All layers fused: conv3x3('same') + bias + leaky_relu + residual + BatchNorm."""
    Sp = Hp * Wp                      # flattened padded image (pad ring included)
    inv_count = 1.0 / float(count)    # BN denominator = N*H*W (pad ring kept exactly 0)

    def kernel(x_ref, m_ref, w_ref, b_ref, g_ref, be_ref, o_ref):
        mask = m_ref[...]                                    # (1, Sp): 1 at real pixels
        act = x_ref[...]                                     # (C, N, Lw), zero outside image
        zl = jnp.zeros((C, N, OFF), jnp.float32)             # lane guards (kept zero)
        zr = jnp.zeros((C, N, Lw - OFF - Sp), jnp.float32)

        for l in range(num_layers):
            # 9 shifted taps per input channel: static lane slices, guards are zero.
            taps = []
            for ci in range(C):
                per_k = []
                for k in range(9):
                    dy, dx = divmod(k, 3)
                    off = OFF + (dy - 1) * Wp + (dx - 1)
                    per_k.append(act[ci, :, off:off + Sp])   # (N, Sp)
                taps.append(per_k)

            outs = []
            for co in range(C):
                # Conv via 27 scalar-weight VPU FMAs (C=3 -> MXU would be <2% utilized).
                acc = jnp.zeros((N, Sp), jnp.float32)
                for ci in range(C):
                    base = ((l * C + co) * C + ci) * 9
                    for k in range(9):
                        acc = acc + w_ref[base + k] * taps[ci][k]
                conv = acc + b_ref[l * C + co]
                a = jnp.where(conv >= 0.0, conv, NEG_SLOPE * conv)   # leaky_relu(0.1)
                y = (act[co, :, OFF:OFF + Sp] + a) * mask            # residual; zero ring

                # Training-mode BatchNorm with exact batch stats (two-pass variance).
                mean = jnp.sum(y, keepdims=True) * inv_count           # (1, 1)
                cen = (y - mean) * mask
                var = jnp.sum(cen * cen, keepdims=True) * inv_count    # (1, 1), biased
                scale = g_ref[l * C + co] * lax.rsqrt(var + BN_EPS)
                outs.append((cen * scale + be_ref[l * C + co]) * mask)

            inner = jnp.stack(outs, axis=0)                  # (C, N, Sp)
            act = jnp.concatenate([zl, inner, zr], axis=2)   # restore zero lane guards

        o_ref[...] = act                                     # single lane-dense HBM store

    return kernel


@jax.jit
def decoder_layer(x_nchw, layer_params):
    """Forward pass of DecoderLayer (stack of DecoderPerLayer blocks).

    x_nchw:       (N, C, H, W) float32
    layer_params: tuple of (weight (C,C,3,3), bias (C,), gamma (C,), beta (C,)) per layer
    returns       (N, C, H, W) float32
    """
    N, C, H, W = x_nchw.shape
    Hp, Wp = H + 2, W + 2
    Sp = Hp * Wp
    G = Wp + 1                                   # largest |tap offset| in flattened coords
    Lw = ((Sp + 2 * G + 127) // 128) * 128       # lane width: multiple of 128, room for guards
    OFF = (Lw - Sp) // 2                         # image start lane (>= G on both sides)
    num_layers = len(layer_params)
    count = N * H * W

    # Glue: NCHW -> zero-padded, spatially-flattened, channel-major (C, N, Lw).
    xf = x_nchw.astype(jnp.float32)
    xp = jnp.pad(xf, ((0, 0), (0, 0), (1, 1), (1, 1))).reshape(N, C, Sp)
    x_cnl = jnp.transpose(xp, (1, 0, 2))
    x_cnl = jnp.pad(x_cnl, ((0, 0), (0, 0), (OFF, Lw - OFF - Sp)))

    # Interior mask: 1.0 at real pixels of the padded image, 0.0 on the padding ring.
    pos = jnp.arange(Sp, dtype=jnp.int32)
    hh, ww = pos // Wp, pos % Wp
    mask = (((hh >= 1) & (hh <= H) & (ww >= 1) & (ww <= W))
            .astype(jnp.float32).reshape(1, Sp))

    # Per-layer parameters, flattened 1-D for SMEM scalar reads.
    w_all = jnp.stack([w.astype(jnp.float32).reshape(C, C, 9)
                       for (w, b, g, be) in layer_params]).reshape(-1)     # (L*C*C*9,)
    b_all = jnp.stack([b.astype(jnp.float32)
                       for (w, b, g, be) in layer_params]).reshape(-1)     # (L*C,)
    g_all = jnp.stack([g.astype(jnp.float32)
                       for (w, b, g, be) in layer_params]).reshape(-1)     # (L*C,)
    be_all = jnp.stack([be.astype(jnp.float32)
                        for (w, b, g, be) in layer_params]).reshape(-1)    # (L*C,)

    vmem = pl.BlockSpec(memory_space=pltpu.MemorySpace.VMEM)
    smem = pl.BlockSpec(memory_space=pltpu.MemorySpace.SMEM)

    out_cnl = pl.pallas_call(
        _make_fused_kernel(num_layers, N, C, Hp, Wp, OFF, Lw, count),
        out_shape=jax.ShapeDtypeStruct((C, N, Lw), jnp.float32),
        in_specs=[vmem, vmem, smem, smem, smem, smem],
        out_specs=vmem,
        compiler_params=pltpu.CompilerParams(vmem_limit_bytes=16 * 1024 * 1024),
        cost_estimate=pl.CostEstimate(
            flops=num_layers * N * Sp * C * (18 * C + 12),
            transcendentals=num_layers * C,
            bytes_accessed=4 * (2 * C * N * Lw + Sp
                                + num_layers * C * (9 * C + 3))),
    )(x_cnl, mask, w_all, b_all, g_all, be_all)

    # Glue: back to NCHW, dropping guards and the padding ring.
    out = out_cnl[:, :, OFF:OFF + Sp].reshape(C, N, Hp, Wp)
    out = jnp.transpose(out, (1, 0, 2, 3))
    return out[:, :, 1:H + 1, 1:W + 1]


def _reference(x_nchw, layer_params):
    """Pure-JAX reference matching the PyTorch forward (training-mode BatchNorm)."""
    out = x_nchw.astype(jnp.float32)
    for weight, bias, gamma, beta in layer_params:
        conv = lax.conv_general_dilated(
            out, weight, window_strides=(1, 1), padding="SAME",
            dimension_numbers=("NCHW", "OIHW", "NCHW"))
        conv = conv + bias[None, :, None, None]
        act = jnp.where(conv >= 0, conv, NEG_SLOPE * conv)
        y = out + act
        mean = jnp.mean(y, axis=(0, 2, 3), keepdims=True)
        var = jnp.mean(jnp.square(y - mean), axis=(0, 2, 3), keepdims=True)
        out = ((y - mean) / jnp.sqrt(var + BN_EPS)
               * gamma[None, :, None, None] + beta[None, :, None, None])
    return out


if __name__ == "__main__":
    # DecoderPerLayer is hard-wired to 3 channels (Conv2d(3, 3, ...), BatchNorm2d(3)).
    N, C, H, W = 2, 3, 16, 16
    LAYERS = 2

    key = jax.random.PRNGKey(0)
    keys = jax.random.split(key, 1 + 4 * LAYERS)
    x = jax.random.normal(keys[0], (N, C, H, W), dtype=jnp.float32)

    layer_params = []
    for i in range(LAYERS):
        k_w, k_b, k_g, k_be = keys[1 + 4 * i: 5 + 4 * i]
        weight = 0.1 * jax.random.normal(k_w, (C, C, 3, 3), dtype=jnp.float32)
        bias = 0.1 * jax.random.normal(k_b, (C,), dtype=jnp.float32)
        gamma = 1.0 + 0.1 * jax.random.normal(k_g, (C,), dtype=jnp.float32)
        beta = 0.1 * jax.random.normal(k_be, (C,), dtype=jnp.float32)
        layer_params.append((weight, bias, gamma, beta))
    layer_params = tuple(layer_params)

    out = jax.block_until_ready(decoder_layer(x, layer_params))
    ref = jax.block_until_ready(_reference(x, layer_params))

    assert out.shape == (N, C, H, W)
    max_err = float(jnp.max(jnp.abs(out - ref)))
    assert jnp.allclose(out, ref, atol=1e-3, rtol=1e-3), f"max abs err = {max_err}"
    print("KERNEL_OK")
</pallas_src>

<mosaic_0001>
module attributes {stable_mosaic.version = 11 : i64} {
  func.func @kernel(%arg0: memref<3x2x384xf32, #tpu.memory_space<vmem>>, %arg1: memref<1x324xf32, #tpu.memory_space<vmem>>, %arg2: memref<162xf32, #tpu.memory_space<smem>>, %arg3: memref<6xf32, #tpu.memory_space<smem>>, %arg4: memref<6xf32, #tpu.memory_space<smem>>, %arg5: memref<6xf32, #tpu.memory_space<smem>>, %arg6: memref<3x2x384xf32, #tpu.memory_space<vmem>>) attributes {dimension_semantics = [], scalar_prefetch = 0 : i64, scratch_operands = 0 : i64, tpu.core_type = #tpu.core_type<tc>} {
    %c0 = arith.constant 0 : index
    %c0_0 = arith.constant 0 : index
    %0 = vector.load %arg1[%c0, %c0_0] : memref<1x324xf32, #tpu.memory_space<vmem>>, vector<1x324xf32>
    %c0_1 = arith.constant 0 : index
    %c0_2 = arith.constant 0 : index
    %c0_3 = arith.constant 0 : index
    %1 = vector.load %arg0[%c0_1, %c0_2, %c0_3] : memref<3x2x384xf32, #tpu.memory_space<vmem>>, vector<3x2x384xf32>
    %cst = arith.constant 0.000000e+00 : f32
    %2 = vector.broadcast %cst : f32 to vector<3x2x30xf32>
    %cst_4 = arith.constant 0.000000e+00 : f32
    %3 = vector.broadcast %cst_4 : f32 to vector<3x2x30xf32>
    %4 = vector.extract_strided_slice %1 {offsets = [0, 0, 11], sizes = [1, 2, 324], strides = [1, 1, 1]} : vector<3x2x384xf32> to vector<1x2x324xf32>
    %5 = vector.shape_cast %4 : vector<1x2x324xf32> to vector<2x324xf32>
    %6 = vector.extract_strided_slice %1 {offsets = [0, 0, 12], sizes = [1, 2, 324], strides = [1, 1, 1]} : vector<3x2x384xf32> to vector<1x2x324xf32>
    %7 = vector.shape_cast %6 : vector<1x2x324xf32> to vector<2x324xf32>
    %8 = vector.extract_strided_slice %1 {offsets = [0, 0, 13], sizes = [1, 2, 324], strides = [1, 1, 1]} : vector<3x2x384xf32> to vector<1x2x324xf32>
    %9 = vector.shape_cast %8 : vector<1x2x324xf32> to vector<2x324xf32>
    %10 = vector.extract_strided_slice %1 {offsets = [0, 0, 29], sizes = [1, 2, 324], strides = [1, 1, 1]} : vector<3x2x384xf32> to vector<1x2x324xf32>
    %11 = vector.shape_cast %10 : vector<1x2x324xf32> to vector<2x324xf32>
    %12 = vector.extract_strided_slice %1 {offsets = [0, 0, 30], sizes = [1, 2, 324], strides = [1, 1, 1]} : vector<3x2x384xf32> to vector<1x2x324xf32>
    %13 = vector.shape_cast %12 : vector<1x2x324xf32> to vector<2x324xf32>
    %14 = vector.extract_strided_slice %1 {offsets = [0, 0, 31], sizes = [1, 2, 324], strides = [1, 1, 1]} : vector<3x2x384xf32> to vector<1x2x324xf32>
    %15 = vector.shape_cast %14 : vector<1x2x324xf32> to vector<2x324xf32>
    %16 = vector.extract_strided_slice %1 {offsets = [0, 0, 47], sizes = [1, 2, 324], strides = [1, 1, 1]} : vector<3x2x384xf32> to vector<1x2x324xf32>
    %17 = vector.shape_cast %16 : vector<1x2x324xf32> to vector<2x324xf32>
    %18 = vector.extract_strided_slice %1 {offsets = [0, 0, 48], sizes = [1, 2, 324], strides = [1, 1, 1]} : vector<3x2x384xf32> to vector<1x2x324xf32>
    %19 = vector.shape_cast %18 : vector<1x2x324xf32> to vector<2x324xf32>
    %20 = vector.extract_strided_slice %1 {offsets = [0, 0, 49], sizes = [1, 2, 324], strides = [1, 1, 1]} : vector<3x2x384xf32> to vector<1x2x324xf32>
    %21 = vector.shape_cast %20 : vector<1x2x324xf32> to vector<2x324xf32>
    %22 = vector.extract_strided_slice %1 {offsets = [1, 0, 11], sizes = [1, 2, 324], strides = [1, 1, 1]} : vector<3x2x384xf32> to vector<1x2x324xf32>
    %23 = vector.shape_cast %22 : vector<1x2x324xf32> to vector<2x324xf32>
    %24 = vector.extract_strided_slice %1 {offsets = [1, 0, 12], sizes = [1, 2, 324], strides = [1, 1, 1]} : vector<3x2x384xf32> to vector<1x2x324xf32>
    %25 = vector.shape_cast %24 : vector<1x2x324xf32> to vector<2x324xf32>
    %26 = vector.extract_strided_slice %1 {offsets = [1, 0, 13], sizes = [1, 2, 324], strides = [1, 1, 1]} : vector<3x2x384xf32> to vector<1x2x324xf32>
    %27 = vector.shape_cast %26 : vector<1x2x324xf32> to vector<2x324xf32>
    %28 = vector.extract_strided_slice %1 {offsets = [1, 0, 29], sizes = [1, 2, 324], strides = [1, 1, 1]} : vector<3x2x384xf32> to vector<1x2x324xf32>
    %29 = vector.shape_cast %28 : vector<1x2x324xf32> to vector<2x324xf32>
    %30 = vector.extract_strided_slice %1 {offsets = [1, 0, 30], sizes = [1, 2, 324], strides = [1, 1, 1]} : vector<3x2x384xf32> to vector<1x2x324xf32>
    %31 = vector.shape_cast %30 : vector<1x2x324xf32> to vector<2x324xf32>
    %32 = vector.extract_strided_slice %1 {offsets = [1, 0, 31], sizes = [1, 2, 324], strides = [1, 1, 1]} : vector<3x2x384xf32> to vector<1x2x324xf32>
    %33 = vector.shape_cast %32 : vector<1x2x324xf32> to vector<2x324xf32>
    %34 = vector.extract_strided_slice %1 {offsets = [1, 0, 47], sizes = [1, 2, 324], strides = [1, 1, 1]} : vector<3x2x384xf32> to vector<1x2x324xf32>
    %35 = vector.shape_cast %34 : vector<1x2x324xf32> to vector<2x324xf32>
    %36 = vector.extract_strided_slice %1 {offsets = [1, 0, 48], sizes = [1, 2, 324], strides = [1, 1, 1]} : vector<3x2x384xf32> to vector<1x2x324xf32>
    %37 = vector.shape_cast %36 : vector<1x2x324xf32> to vector<2x324xf32>
    %38 = vector.extract_strided_slice %1 {offsets = [1, 0, 49], sizes = [1, 2, 324], strides = [1, 1, 1]} : vector<3x2x384xf32> to vector<1x2x324xf32>
    %39 = vector.shape_cast %38 : vector<1x2x324xf32> to vector<2x324xf32>
    %40 = vector.extract_strided_slice %1 {offsets = [2, 0, 11], sizes = [1, 2, 324], strides = [1, 1, 1]} : vector<3x2x384xf32> to vector<1x2x324xf32>
    %41 = vector.shape_cast %40 : vector<1x2x324xf32> to vector<2x324xf32>
    %42 = vector.extract_strided_slice %1 {offsets = [2, 0, 12], sizes = [1, 2, 324], strides = [1, 1, 1]} : vector<3x2x384xf32> to vector<1x2x324xf32>
    %43 = vector.shape_cast %42 : vector<1x2x324xf32> to vector<2x324xf32>
    %44 = vector.extract_strided_slice %1 {offsets = [2, 0, 13], sizes = [1, 2, 324], strides = [1, 1, 1]} : vector<3x2x384xf32> to vector<1x2x324xf32>
    %45 = vector.shape_cast %44 : vector<1x2x324xf32> to vector<2x324xf32>
    %46 = vector.extract_strided_slice %1 {offsets = [2, 0, 29], sizes = [1, 2, 324], strides = [1, 1, 1]} : vector<3x2x384xf32> to vector<1x2x324xf32>
    %47 = vector.shape_cast %46 : vector<1x2x324xf32> to vector<2x324xf32>
    %48 = vector.extract_strided_slice %1 {offsets = [2, 0, 30], sizes = [1, 2, 324], strides = [1, 1, 1]} : vector<3x2x384xf32> to vector<1x2x324xf32>
    %49 = vector.shape_cast %48 : vector<1x2x324xf32> to vector<2x324xf32>
    %50 = vector.extract_strided_slice %1 {offsets = [2, 0, 31], sizes = [1, 2, 324], strides = [1, 1, 1]} : vector<3x2x384xf32> to vector<1x2x324xf32>
    %51 = vector.shape_cast %50 : vector<1x2x324xf32> to vector<2x324xf32>
    %52 = vector.extract_strided_slice %1 {offsets = [2, 0, 47], sizes = [1, 2, 324], strides = [1, 1, 1]} : vector<3x2x384xf32> to vector<1x2x324xf32>
    %53 = vector.shape_cast %52 : vector<1x2x324xf32> to vector<2x324xf32>
    %54 = vector.extract_strided_slice %1 {offsets = [2, 0, 48], sizes = [1, 2, 324], strides = [1, 1, 1]} : vector<3x2x384xf32> to vector<1x2x324xf32>
    %55 = vector.shape_cast %54 : vector<1x2x324xf32> to vector<2x324xf32>
    %56 = vector.extract_strided_slice %1 {offsets = [2, 0, 49], sizes = [1, 2, 324], strides = [1, 1, 1]} : vector<3x2x384xf32> to vector<1x2x324xf32>
    %57 = vector.shape_cast %56 : vector<1x2x324xf32> to vector<2x324xf32>
    %cst_5 = arith.constant 0.000000e+00 : f32
    %58 = vector.broadcast %cst_5 : f32 to vector<2x324xf32>
    %c0_6 = arith.constant 0 : index
    %59 = memref.load %arg2[%c0_6] : memref<162xf32, #tpu.memory_space<smem>>
    %60 = vector.broadcast %59 : f32 to vector<2x324xf32>
    %61 = arith.mulf %60, %5 : vector<2x324xf32>
    %62 = arith.addf %58, %61 : vector<2x324xf32>
    %c1 = arith.constant 1 : index
    %63 = memref.load %arg2[%c1] : memref<162xf32, #tpu.memory_space<smem>>
    %64 = vector.broadcast %63 : f32 to vector<2x324xf32>
    %65 = arith.mulf %64, %7 : vector<2x324xf32>
    %66 = arith.addf %62, %65 : vector<2x324xf32>
    %c2 = arith.constant 2 : index
    %67 = memref.load %arg2[%c2] : memref<162xf32, #tpu.memory_space<smem>>
    %68 = vector.broadcast %67 : f32 to vector<2x324xf32>
    %69 = arith.mulf %68, %9 : vector<2x324xf32>
    %70 = arith.addf %66, %69 : vector<2x324xf32>
    %c3 = arith.constant 3 : index
    %71 = memref.load %arg2[%c3] : memref<162xf32, #tpu.memory_space<smem>>
    %72 = vector.broadcast %71 : f32 to vector<2x324xf32>
    %73 = arith.mulf %72, %11 : vector<2x324xf32>
    %74 = arith.addf %70, %73 : vector<2x324xf32>
    %c4 = arith.constant 4 : index
    %75 = memref.load %arg2[%c4] : memref<162xf32, #tpu.memory_space<smem>>
    %76 = vector.broadcast %75 : f32 to vector<2x324xf32>
    %77 = arith.mulf %76, %13 : vector<2x324xf32>
    %78 = arith.addf %74, %77 : vector<2x324xf32>
    %c5 = arith.constant 5 : index
    %79 = memref.load %arg2[%c5] : memref<162xf32, #tpu.memory_space<smem>>
    %80 = vector.broadcast %79 : f32 to vector<2x324xf32>
    %81 = arith.mulf %80, %15 : vector<2x324xf32>
    %82 = arith.addf %78, %81 : vector<2x324xf32>
    %c6 = arith.constant 6 : index
    %83 = memref.load %arg2[%c6] : memref<162xf32, #tpu.memory_space<smem>>
    %84 = vector.broadcast %83 : f32 to vector<2x324xf32>
    %85 = arith.mulf %84, %17 : vector<2x324xf32>
    %86 = arith.addf %82, %85 : vector<2x324xf32>
    %c7 = arith.constant 7 : index
    %87 = memref.load %arg2[%c7] : memref<162xf32, #tpu.memory_space<smem>>
    %88 = vector.broadcast %87 : f32 to vector<2x324xf32>
    %89 = arith.mulf %88, %19 : vector<2x324xf32>
    %90 = arith.addf %86, %89 : vector<2x324xf32>
    %c8 = arith.constant 8 : index
    %91 = memref.load %arg2[%c8] : memref<162xf32, #tpu.memory_space<smem>>
    %92 = vector.broadcast %91 : f32 to vector<2x324xf32>
    %93 = arith.mulf %92, %21 : vector<2x324xf32>
    %94 = arith.addf %90, %93 : vector<2x324xf32>
    %c9 = arith.constant 9 : index
    %95 = memref.load %arg2[%c9] : memref<162xf32, #tpu.memory_space<smem>>
    %96 = vector.broadcast %95 : f32 to vector<2x324xf32>
    %97 = arith.mulf %96, %23 : vector<2x324xf32>
    %98 = arith.addf %94, %97 : vector<2x324xf32>
    %c10 = arith.constant 10 : index
    %99 = memref.load %arg2[%c10] : memref<162xf32, #tpu.memory_space<smem>>
    %100 = vector.broadcast %99 : f32 to vector<2x324xf32>
    %101 = arith.mulf %100, %25 : vector<2x324xf32>
    %102 = arith.addf %98, %101 : vector<2x324xf32>
    %c11 = arith.constant 11 : index
    %103 = memref.load %arg2[%c11] : memref<162xf32, #tpu.memory_space<smem>>
    %104 = vector.broadcast %103 : f32 to vector<2x324xf32>
    %105 = arith.mulf %104, %27 : vector<2x324xf32>
    %106 = arith.addf %102, %105 : vector<2x324xf32>
    %c12 = arith.constant 12 : index
    %107 = memref.load %arg2[%c12] : memref<162xf32, #tpu.memory_space<smem>>
    %108 = vector.broadcast %107 : f32 to vector<2x324xf32>
    %109 = arith.mulf %108, %29 : vector<2x324xf32>
    %110 = arith.addf %106, %109 : vector<2x324xf32>
    %c13 = arith.constant 13 : index
    %111 = memref.load %arg2[%c13] : memref<162xf32, #tpu.memory_space<smem>>
    %112 = vector.broadcast %111 : f32 to vector<2x324xf32>
    %113 = arith.mulf %112, %31 : vector<2x324xf32>
    %114 = arith.addf %110, %113 : vector<2x324xf32>
    %c14 = arith.constant 14 : index
    %115 = memref.load %arg2[%c14] : memref<162xf32, #tpu.memory_space<smem>>
    %116 = vector.broadcast %115 : f32 to vector<2x324xf32>
    %117 = arith.mulf %116, %33 : vector<2x324xf32>
    %118 = arith.addf %114, %117 : vector<2x324xf32>
    %c15 = arith.constant 15 : index
    %119 = memref.load %arg2[%c15] : memref<162xf32, #tpu.memory_space<smem>>
    %120 = vector.broadcast %119 : f32 to vector<2x324xf32>
    %121 = arith.mulf %120, %35 : vector<2x324xf32>
    %122 = arith.addf %118, %121 : vector<2x324xf32>
    %c16 = arith.constant 16 : index
    %123 = memref.load %arg2[%c16] : memref<162xf32, #tpu.memory_space<smem>>
    %124 = vector.broadcast %123 : f32 to vector<2x324xf32>
    %125 = arith.mulf %124, %37 : vector<2x324xf32>
    %126 = arith.addf %122, %125 : vector<2x324xf32>
    %c17 = arith.constant 17 : index
    %127 = memref.load %arg2[%c17] : memref<162xf32, #tpu.memory_space<smem>>
    %128 = vector.broadcast %127 : f32 to vector<2x324xf32>
    %129 = arith.mulf %128, %39 : vector<2x324xf32>
    %130 = arith.addf %126, %129 : vector<2x324xf32>
    %c18 = arith.constant 18 : index
    %131 = memref.load %arg2[%c18] : memref<162xf32, #tpu.memory_space<smem>>
    %132 = vector.broadcast %131 : f32 to vector<2x324xf32>
    %133 = arith.mulf %132, %41 : vector<2x324xf32>
    %134 = arith.addf %130, %133 : vector<2x324xf32>
    %c19 = arith.constant 19 : index
    %135 = memref.load %arg2[%c19] : memref<162xf32, #tpu.memory_space<smem>>
    %136 = vector.broadcast %135 : f32 to vector<2x324xf32>
    %137 = arith.mulf %136, %43 : vector<2x324xf32>
    %138 = arith.addf %134, %137 : vector<2x324xf32>
    %c20 = arith.constant 20 : index
    %139 = memref.load %arg2[%c20] : memref<162xf32, #tpu.memory_space<smem>>
    %140 = vector.broadcast %139 : f32 to vector<2x324xf32>
    %141 = arith.mulf %140, %45 : vector<2x324xf32>
    %142 = arith.addf %138, %141 : vector<2x324xf32>
    %c21 = arith.constant 21 : index
    %143 = memref.load %arg2[%c21] : memref<162xf32, #tpu.memory_space<smem>>
    %144 = vector.broadcast %143 : f32 to vector<2x324xf32>
    %145 = arith.mulf %144, %47 : vector<2x324xf32>
    %146 = arith.addf %142, %145 : vector<2x324xf32>
    %c22 = arith.constant 22 : index
    %147 = memref.load %arg2[%c22] : memref<162xf32, #tpu.memory_space<smem>>
    %148 = vector.broadcast %147 : f32 to vector<2x324xf32>
    %149 = arith.mulf %148, %49 : vector<2x324xf32>
    %150 = arith.addf %146, %149 : vector<2x324xf32>
    %c23 = arith.constant 23 : index
    %151 = memref.load %arg2[%c23] : memref<162xf32, #tpu.memory_space<smem>>
    %152 = vector.broadcast %151 : f32 to vector<2x324xf32>
    %153 = arith.mulf %152, %51 : vector<2x324xf32>
    %154 = arith.addf %150, %153 : vector<2x324xf32>
    %c24 = arith.constant 24 : index
    %155 = memref.load %arg2[%c24] : memref<162xf32, #tpu.memory_space<smem>>
    %156 = vector.broadcast %155 : f32 to vector<2x324xf32>
    %157 = arith.mulf %156, %53 : vector<2x324xf32>
    %158 = arith.addf %154, %157 : vector<2x324xf32>
    %c25 = arith.constant 25 : index
    %159 = memref.load %arg2[%c25] : memref<162xf32, #tpu.memory_space<smem>>
    %160 = vector.broadcast %159 : f32 to vector<2x324xf32>
    %161 = arith.mulf %160, %55 : vector<2x324xf32>
    %162 = arith.addf %158, %161 : vector<2x324xf32>
    %c26 = arith.constant 26 : index
    %163 = memref.load %arg2[%c26] : memref<162xf32, #tpu.memory_space<smem>>
    %164 = vector.broadcast %163 : f32 to vector<2x324xf32>
    %165 = arith.mulf %164, %57 : vector<2x324xf32>
    %166 = arith.addf %162, %165 : vector<2x324xf32>
    %c0_7 = arith.constant 0 : index
    %167 = memref.load %arg3[%c0_7] : memref<6xf32, #tpu.memory_space<smem>>
    %168 = vector.broadcast %167 : f32 to vector<2x324xf32>
    %169 = arith.addf %166, %168 : vector<2x324xf32>
    %cst_8 = arith.constant 0.000000e+00 : f32
    %170 = vector.broadcast %cst_8 : f32 to vector<2x324xf32>
    %171 = arith.cmpf oge, %169, %170 : vector<2x324xf32>
    %cst_9 = arith.constant 1.000000e-01 : f32
    %172 = vector.broadcast %cst_9 : f32 to vector<2x324xf32>
    %173 = arith.mulf %172, %169 : vector<2x324xf32>
    %174 = arith.select %171, %169, %173 : vector<2x324xi1>, vector<2x324xf32>
    %175 = vector.extract_strided_slice %1 {offsets = [0, 0, 30], sizes = [1, 2, 324], strides = [1, 1, 1]} : vector<3x2x384xf32> to vector<1x2x324xf32>
    %176 = vector.shape_cast %175 : vector<1x2x324xf32> to vector<2x324xf32>
    %177 = arith.addf %176, %174 : vector<2x324xf32>
    %178 = vector.broadcast %0 : vector<1x324xf32> to vector<2x324xf32>
    %179 = arith.mulf %177, %178 : vector<2x324xf32>
    %180 = vector.shape_cast %179 : vector<2x324xf32> to vector<1x2x324xf32>
    %cst_10 = arith.constant dense<0.000000e+00> : vector<1xf32>
    %181 = vector.multi_reduction <add>, %180, %cst_10 [1, 2] : vector<1x2x324xf32> to vector<1xf32>
    %182 = vector.shape_cast %181 : vector<1xf32> to vector<1x1x1xf32>
    %183 = vector.extract %182[0, 0, 0] : f32 from vector<1x1x1xf32>
    %184 = vector.broadcast %183 : f32 to vector<1x1xf32>
    %cst_11 = arith.constant 0.001953125 : f32
    %185 = vector.broadcast %cst_11 : f32 to vector<1x1xf32>
    %186 = arith.mulf %184, %185 : vector<1x1xf32>
    %187 = vector.broadcast %186 : vector<1x1xf32> to vector<2x324xf32>
    %188 = arith.subf %179, %187 : vector<2x324xf32>
    %189 = vector.broadcast %0 : vector<1x324xf32> to vector<2x324xf32>
    %190 = arith.mulf %188, %189 : vector<2x324xf32>
    %191 = arith.mulf %190, %190 : vector<2x324xf32>
    %192 = vector.shape_cast %191 : vector<2x324xf32> to vector<1x2x324xf32>
    %cst_12 = arith.constant dense<0.000000e+00> : vector<1xf32>
    %193 = vector.multi_reduction <add>, %192, %cst_12 [1, 2] : vector<1x2x324xf32> to vector<1xf32>
    %194 = vector.shape_cast %193 : vector<1xf32> to vector<1x1x1xf32>
    %195 = vector.extract %194[0, 0, 0] : f32 from vector<1x1x1xf32>
    %196 = vector.broadcast %195 : f32 to vector<1x1xf32>
    %cst_13 = arith.constant 0.001953125 : f32
    %197 = vector.broadcast %cst_13 : f32 to vector<1x1xf32>
    %198 = arith.mulf %196, %197 : vector<1x1xf32>
    %c0_14 = arith.constant 0 : index
    %199 = memref.load %arg4[%c0_14] : memref<6xf32, #tpu.memory_space<smem>>
    %cst_15 = arith.constant 9.99999974E-6 : f32
    %200 = vector.broadcast %cst_15 : f32 to vector<1x1xf32>
    %201 = arith.addf %198, %200 : vector<1x1xf32>
    %202 = math.rsqrt %201 : vector<1x1xf32>
    %203 = vector.broadcast %199 : f32 to vector<1x1xf32>
    %204 = arith.mulf %203, %202 : vector<1x1xf32>
    %205 = vector.broadcast %204 : vector<1x1xf32> to vector<2x324xf32>
    %206 = arith.mulf %190, %205 : vector<2x324xf32>
    %c0_16 = arith.constant 0 : index
    %207 = memref.load %arg5[%c0_16] : memref<6xf32, #tpu.memory_space<smem>>
    %208 = vector.broadcast %207 : f32 to vector<2x324xf32>
    %209 = arith.addf %206, %208 : vector<2x324xf32>
    %210 = vector.broadcast %0 : vector<1x324xf32> to vector<2x324xf32>
    %211 = arith.mulf %209, %210 : vector<2x324xf32>
    %cst_17 = arith.constant 0.000000e+00 : f32
    %212 = vector.broadcast %cst_17 : f32 to vector<2x324xf32>
    %c27 = arith.constant 27 : index
    %213 = memref.load %arg2[%c27] : memref<162xf32, #tpu.memory_space<smem>>
    %214 = vector.broadcast %213 : f32 to vector<2x324xf32>
    %215 = arith.mulf %214, %5 : vector<2x324xf32>
    %216 = arith.addf %212, %215 : vector<2x324xf32>
    %c28 = arith.constant 28 : index
    %217 = memref.load %arg2[%c28] : memref<162xf32, #tpu.memory_space<smem>>
    %218 = vector.broadcast %217 : f32 to vector<2x324xf32>
    %219 = arith.mulf %218, %7 : vector<2x324xf32>
    %220 = arith.addf %216, %219 : vector<2x324xf32>
    %c29 = arith.constant 29 : index
    %221 = memref.load %arg2[%c29] : memref<162xf32, #tpu.memory_space<smem>>
    %222 = vector.broadcast %221 : f32 to vector<2x324xf32>
    %223 = arith.mulf %222, %9 : vector<2x324xf32>
    %224 = arith.addf %220, %223 : vector<2x324xf32>
    %c30 = arith.constant 30 : index
    %225 = memref.load %arg2[%c30] : memref<162xf32, #tpu.memory_space<smem>>
    %226 = vector.broadcast %225 : f32 to vector<2x324xf32>
    %227 = arith.mulf %226, %11 : vector<2x324xf32>
    %228 = arith.addf %224, %227 : vector<2x324xf32>
    %c31 = arith.constant 31 : index
    %229 = memref.load %arg2[%c31] : memref<162xf32, #tpu.memory_space<smem>>
    %230 = vector.broadcast %229 : f32 to vector<2x324xf32>
    %231 = arith.mulf %230, %13 : vector<2x324xf32>
    %232 = arith.addf %228, %231 : vector<2x324xf32>
    %c32 = arith.constant 32 : index
    %233 = memref.load %arg2[%c32] : memref<162xf32, #tpu.memory_space<smem>>
    %234 = vector.broadcast %233 : f32 to vector<2x324xf32>
    %235 = arith.mulf %234, %15 : vector<2x324xf32>
    %236 = arith.addf %232, %235 : vector<2x324xf32>
    %c33 = arith.constant 33 : index
    %237 = memref.load %arg2[%c33] : memref<162xf32, #tpu.memory_space<smem>>
    %238 = vector.broadcast %237 : f32 to vector<2x324xf32>
    %239 = arith.mulf %238, %17 : vector<2x324xf32>
    %240 = arith.addf %236, %239 : vector<2x324xf32>
    %c34 = arith.constant 34 : index
    %241 = memref.load %arg2[%c34] : memref<162xf32, #tpu.memory_space<smem>>
    %242 = vector.broadcast %241 : f32 to vector<2x324xf32>
    %243 = arith.mulf %242, %19 : vector<2x324xf32>
    %244 = arith.addf %240, %243 : vector<2x324xf32>
    %c35 = arith.constant 35 : index
    %245 = memref.load %arg2[%c35] : memref<162xf32, #tpu.memory_space<smem>>
    %246 = vector.broadcast %245 : f32 to vector<2x324xf32>
    %247 = arith.mulf %246, %21 : vector<2x324xf32>
    %248 = arith.addf %244, %247 : vector<2x324xf32>
    %c36 = arith.constant 36 : index
    %249 = memref.load %arg2[%c36] : memref<162xf32, #tpu.memory_space<smem>>
    %250 = vector.broadcast %249 : f32 to vector<2x324xf32>
    %251 = arith.mulf %250, %23 : vector<2x324xf32>
    %252 = arith.addf %248, %251 : vector<2x324xf32>
    %c37 = arith.constant 37 : index
    %253 = memref.load %arg2[%c37] : memref<162xf32, #tpu.memory_space<smem>>
    %254 = vector.broadcast %253 : f32 to vector<2x324xf32>
    %255 = arith.mulf %254, %25 : vector<2x324xf32>
    %256 = arith.addf %252, %255 : vector<2x324xf32>
    %c38 = arith.constant 38 : index
    %257 = memref.load %arg2[%c38] : memref<162xf32, #tpu.memory_space<smem>>
    %258 = vector.broadcast %257 : f32 to vector<2x324xf32>
    %259 = arith.mulf %258, %27 : vector<2x324xf32>
    %260 = arith.addf %256, %259 : vector<2x324xf32>
    %c39 = arith.constant 39 : index
    %261 = memref.load %arg2[%c39] : memref<162xf32, #tpu.memory_space<smem>>
    %262 = vector.broadcast %261 : f32 to vector<2x324xf32>
    %263 = arith.mulf %262, %29 : vector<2x324xf32>
    %264 = arith.addf %260, %263 : vector<2x324xf32>
    %c40 = arith.constant 40 : index
    %265 = memref.load %arg2[%c40] : memref<162xf32, #tpu.memory_space<smem>>
    %266 = vector.broadcast %265 : f32 to vector<2x324xf32>
    %267 = arith.mulf %266, %31 : vector<2x324xf32>
    %268 = arith.addf %264, %267 : vector<2x324xf32>
    %c41 = arith.constant 41 : index
    %269 = memref.load %arg2[%c41] : memref<162xf32, #tpu.memory_space<smem>>
    %270 = vector.broadcast %269 : f32 to vector<2x324xf32>
    %271 = arith.mulf %270, %33 : vector<2x324xf32>
    %272 = arith.addf %268, %271 : vector<2x324xf32>
    %c42 = arith.constant 42 : index
    %273 = memref.load %arg2[%c42] : memref<162xf32, #tpu.memory_space<smem>>
    %274 = vector.broadcast %273 : f32 to vector<2x324xf32>
    %275 = arith.mulf %274, %35 : vector<2x324xf32>
    %276 = arith.addf %272, %275 : vector<2x324xf32>
    %c43 = arith.constant 43 : index
    %277 = memref.load %arg2[%c43] : memref<162xf32, #tpu.memory_space<smem>>
    %278 = vector.broadcast %277 : f32 to vector<2x324xf32>
    %279 = arith.mulf %278, %37 : vector<2x324xf32>
    %280 = arith.addf %276, %279 : vector<2x324xf32>
    %c44 = arith.constant 44 : index
    %281 = memref.load %arg2[%c44] : memref<162xf32, #tpu.memory_space<smem>>
    %282 = vector.broadcast %281 : f32 to vector<2x324xf32>
    %283 = arith.mulf %282, %39 : vector<2x324xf32>
    %284 = arith.addf %280, %283 : vector<2x324xf32>
    %c45 = arith.constant 45 : index
    %285 = memref.load %arg2[%c45] : memref<162xf32, #tpu.memory_space<smem>>
    %286 = vector.broadcast %285 : f32 to vector<2x324xf32>
    %287 = arith.mulf %286, %41 : vector<2x324xf32>
    %288 = arith.addf %284, %287 : vector<2x324xf32>
    %c46 = arith.constant 46 : index
    %289 = memref.load %arg2[%c46] : memref<162xf32, #tpu.memory_space<smem>>
    %290 = vector.broadcast %289 : f32 to vector<2x324xf32>
    %291 = arith.mulf %290, %43 : vector<2x324xf32>
    %292 = arith.addf %288, %291 : vector<2x324xf32>
    %c47 = arith.constant 47 : index
    %293 = memref.load %arg2[%c47] : memref<162xf32, #tpu.memory_space<smem>>
    %294 = vector.broadcast %293 : f32 to vector<2x324xf32>
    %295 = arith.mulf %294, %45 : vector<2x324xf32>
    %296 = arith.addf %292, %295 : vector<2x324xf32>
    %c48 = arith.constant 48 : index
    %297 = memref.load %arg2[%c48] : memref<162xf32, #tpu.memory_space<smem>>
    %298 = vector.broadcast %297 : f32 to vector<2x324xf32>
    %299 = arith.mulf %298, %47 : vector<2x324xf32>
    %300 = arith.addf %296, %299 : vector<2x324xf32>
    %c49 = arith.constant 49 : index
    %301 = memref.load %arg2[%c49] : memref<162xf32, #tpu.memory_space<smem>>
    %302 = vector.broadcast %301 : f32 to vector<2x324xf32>
    %303 = arith.mulf %302, %49 : vector<2x324xf32>
    %304 = arith.addf %300, %303 : vector<2x324xf32>
    %c50 = arith.constant 50 : index
    %305 = memref.load %arg2[%c50] : memref<162xf32, #tpu.memory_space<smem>>
    %306 = vector.broadcast %305 : f32 to vector<2x324xf32>
    %307 = arith.mulf %306, %51 : vector<2x324xf32>
    %308 = arith.addf %304, %307 : vector<2x324xf32>
    %c51 = arith.constant 51 : index
    %309 = memref.load %arg2[%c51] : memref<162xf32, #tpu.memory_space<smem>>
    %310 = vector.broadcast %309 : f32 to vector<2x324xf32>
    %311 = arith.mulf %310, %53 : vector<2x324xf32>
    %312 = arith.addf %308, %311 : vector<2x324xf32>
    %c52 = arith.constant 52 : index
    %313 = memref.load %arg2[%c52] : memref<162xf32, #tpu.memory_space<smem>>
    %314 = vector.broadcast %313 : f32 to vector<2x324xf32>
    %315 = arith.mulf %314, %55 : vector<2x324xf32>
    %316 = arith.addf %312, %315 : vector<2x324xf32>
    %c53 = arith.constant 53 : index
    %317 = memref.load %arg2[%c53] : memref<162xf32, #tpu.memory_space<smem>>
    %318 = vector.broadcast %317 : f32 to vector<2x324xf32>
    %319 = arith.mulf %318, %57 : vector<2x324xf32>
    %320 = arith.addf %316, %319 : vector<2x324xf32>
    %c1_18 = arith.constant 1 : index
    %321 = memref.load %arg3[%c1_18] : memref<6xf32, #tpu.memory_space<smem>>
    %322 = vector.broadcast %321 : f32 to vector<2x324xf32>
    %323 = arith.addf %320, %322 : vector<2x324xf32>
    %cst_19 = arith.constant 0.000000e+00 : f32
    %324 = vector.broadcast %cst_19 : f32 to vector<2x324xf32>
    %325 = arith.cmpf oge, %323, %324 : vector<2x324xf32>
    %cst_20 = arith.constant 1.000000e-01 : f32
    %326 = vector.broadcast %cst_20 : f32 to vector<2x324xf32>
    %327 = arith.mulf %326, %323 : vector<2x324xf32>
    %328 = arith.select %325, %323, %327 : vector<2x324xi1>, vector<2x324xf32>
    %329 = vector.extract_strided_slice %1 {offsets = [1, 0, 30], sizes = [1, 2, 324], strides = [1, 1, 1]} : vector<3x2x384xf32> to vector<1x2x324xf32>
    %330 = vector.shape_cast %329 : vector<1x2x324xf32> to vector<2x324xf32>
    %331 = arith.addf %330, %328 : vector<2x324xf32>
    %332 = vector.broadcast %0 : vector<1x324xf32> to vector<2x324xf32>
    %333 = arith.mulf %331, %332 : vector<2x324xf32>
    %334 = vector.shape_cast %333 : vector<2x324xf32> to vector<1x2x324xf32>
    %cst_21 = arith.constant dense<0.000000e+00> : vector<1xf32>
    %335 = vector.multi_reduction <add>, %334, %cst_21 [1, 2] : vector<1x2x324xf32> to vector<1xf32>
    %336 = vector.shape_cast %335 : vector<1xf32> to vector<1x1x1xf32>
    %337 = vector.extract %336[0, 0, 0] : f32 from vector<1x1x1xf32>
    %338 = vector.broadcast %337 : f32 to vector<1x1xf32>
    %cst_22 = arith.constant 0.001953125 : f32
    %339 = vector.broadcast %cst_22 : f32 to vector<1x1xf32>
    %340 = arith.mulf %338, %339 : vector<1x1xf32>
    %341 = vector.broadcast %340 : vector<1x1xf32> to vector<2x324xf32>
    %342 = arith.subf %333, %341 : vector<2x324xf32>
    %343 = vector.broadcast %0 : vector<1x324xf32> to vector<2x324xf32>
    %344 = arith.mulf %342, %343 : vector<2x324xf32>
    %345 = arith.mulf %344, %344 : vector<2x324xf32>
    %346 = vector.shape_cast %345 : vector<2x324xf32> to vector<1x2x324xf32>
    %cst_23 = arith.constant dense<0.000000e+00> : vector<1xf32>
    %347 = vector.multi_reduction <add>, %346, %cst_23 [1, 2] : vector<1x2x324xf32> to vector<1xf32>
    %348 = vector.shape_cast %347 : vector<1xf32> to vector<1x1x1xf32>
    %349 = vector.extract %348[0, 0, 0] : f32 from vector<1x1x1xf32>
    %350 = vector.broadcast %349 : f32 to vector<1x1xf32>
    %cst_24 = arith.constant 0.001953125 : f32
    %351 = vector.broadcast %cst_24 : f32 to vector<1x1xf32>
    %352 = arith.mulf %350, %351 : vector<1x1xf32>
    %c1_25 = arith.constant 1 : index
    %353 = memref.load %arg4[%c1_25] : memref<6xf32, #tpu.memory_space<smem>>
    %cst_26 = arith.constant 9.99999974E-6 : f32
    %354 = vector.broadcast %cst_26 : f32 to vector<1x1xf32>
    %355 = arith.addf %352, %354 : vector<1x1xf32>
    %356 = math.rsqrt %355 : vector<1x1xf32>
    %357 = vector.broadcast %353 : f32 to vector<1x1xf32>
    %358 = arith.mulf %357, %356 : vector<1x1xf32>
    %359 = vector.broadcast %358 : vector<1x1xf32> to vector<2x324xf32>
    %360 = arith.mulf %344, %359 : vector<2x324xf32>
    %c1_27 = arith.constant 1 : index
    %361 = memref.load %arg5[%c1_27] : memref<6xf32, #tpu.memory_space<smem>>
    %362 = vector.broadcast %361 : f32 to vector<2x324xf32>
    %363 = arith.addf %360, %362 : vector<2x324xf32>
    %364 = vector.broadcast %0 : vector<1x324xf32> to vector<2x324xf32>
    %365 = arith.mulf %363, %364 : vector<2x324xf32>
    %cst_28 = arith.constant 0.000000e+00 : f32
    %366 = vector.broadcast %cst_28 : f32 to vector<2x324xf32>
    %c54 = arith.constant 54 : index
    %367 = memref.load %arg2[%c54] : memref<162xf32, #tpu.memory_space<smem>>
    %368 = vector.broadcast %367 : f32 to vector<2x324xf32>
    %369 = arith.mulf %368, %5 : vector<2x324xf32>
    %370 = arith.addf %366, %369 : vector<2x324xf32>
    %c55 = arith.constant 55 : index
    %371 = memref.load %arg2[%c55] : memref<162xf32, #tpu.memory_space<smem>>
    %372 = vector.broadcast %371 : f32 to vector<2x324xf32>
    %373 = arith.mulf %372, %7 : vector<2x324xf32>
    %374 = arith.addf %370, %373 : vector<2x324xf32>
    %c56 = arith.constant 56 : index
    %375 = memref.load %arg2[%c56] : memref<162xf32, #tpu.memory_space<smem>>
    %376 = vector.broadcast %375 : f32 to vector<2x324xf32>
    %377 = arith.mulf %376, %9 : vector<2x324xf32>
    %378 = arith.addf %374, %377 : vector<2x324xf32>
    %c57 = arith.constant 57 : index
    %379 = memref.load %arg2[%c57] : memref<162xf32, #tpu.memory_space<smem>>
    %380 = vector.broadcast %379 : f32 to vector<2x324xf32>
    %381 = arith.mulf %380, %11 : vector<2x324xf32>
    %382 = arith.addf %378, %381 : vector<2x324xf32>
    %c58 = arith.constant 58 : index
    %383 = memref.load %arg2[%c58] : memref<162xf32, #tpu.memory_space<smem>>
    %384 = vector.broadcast %383 : f32 to vector<2x324xf32>
    %385 = arith.mulf %384, %13 : vector<2x324xf32>
    %386 = arith.addf %382, %385 : vector<2x324xf32>
    %c59 = arith.constant 59 : index
    %387 = memref.load %arg2[%c59] : memref<162xf32, #tpu.memory_space<smem>>
    %388 = vector.broadcast %387 : f32 to vector<2x324xf32>
    %389 = arith.mulf %388, %15 : vector<2x324xf32>
    %390 = arith.addf %386, %389 : vector<2x324xf32>
    %c60 = arith.constant 60 : index
    %391 = memref.load %arg2[%c60] : memref<162xf32, #tpu.memory_space<smem>>
    %392 = vector.broadcast %391 : f32 to vector<2x324xf32>
    %393 = arith.mulf %392, %17 : vector<2x324xf32>
    %394 = arith.addf %390, %393 : vector<2x324xf32>
    %c61 = arith.constant 61 : index
    %395 = memref.load %arg2[%c61] : memref<162xf32, #tpu.memory_space<smem>>
    %396 = vector.broadcast %395 : f32 to vector<2x324xf32>
    %397 = arith.mulf %396, %19 : vector<2x324xf32>
    %398 = arith.addf %394, %397 : vector<2x324xf32>
    %c62 = arith.constant 62 : index
    %399 = memref.load %arg2[%c62] : memref<162xf32, #tpu.memory_space<smem>>
    %400 = vector.broadcast %399 : f32 to vector<2x324xf32>
    %401 = arith.mulf %400, %21 : vector<2x324xf32>
    %402 = arith.addf %398, %401 : vector<2x324xf32>
    %c63 = arith.constant 63 : index
    %403 = memref.load %arg2[%c63] : memref<162xf32, #tpu.memory_space<smem>>
    %404 = vector.broadcast %403 : f32 to vector<2x324xf32>
    %405 = arith.mulf %404, %23 : vector<2x324xf32>
    %406 = arith.addf %402, %405 : vector<2x324xf32>
    %c64 = arith.constant 64 : index
    %407 = memref.load %arg2[%c64] : memref<162xf32, #tpu.memory_space<smem>>
    %408 = vector.broadcast %407 : f32 to vector<2x324xf32>
    %409 = arith.mulf %408, %25 : vector<2x324xf32>
    %410 = arith.addf %406, %409 : vector<2x324xf32>
    %c65 = arith.constant 65 : index
    %411 = memref.load %arg2[%c65] : memref<162xf32, #tpu.memory_space<smem>>
    %412 = vector.broadcast %411 : f32 to vector<2x324xf32>
    %413 = arith.mulf %412, %27 : vector<2x324xf32>
    %414 = arith.addf %410, %413 : vector<2x324xf32>
    %c66 = arith.constant 66 : index
    %415 = memref.load %arg2[%c66] : memref<162xf32, #tpu.memory_space<smem>>
    %416 = vector.broadcast %415 : f32 to vector<2x324xf32>
    %417 = arith.mulf %416, %29 : vector<2x324xf32>
    %418 = arith.addf %414, %417 : vector<2x324xf32>
    %c67 = arith.constant 67 : index
    %419 = memref.load %arg2[%c67] : memref<162xf32, #tpu.memory_space<smem>>
    %420 = vector.broadcast %419 : f32 to vector<2x324xf32>
    %421 = arith.mulf %420, %31 : vector<2x324xf32>
    %422 = arith.addf %418, %421 : vector<2x324xf32>
    %c68 = arith.constant 68 : index
    %423 = memref.load %arg2[%c68] : memref<162xf32, #tpu.memory_space<smem>>
    %424 = vector.broadcast %423 : f32 to vector<2x324xf32>
    %425 = arith.mulf %424, %33 : vector<2x324xf32>
    %426 = arith.addf %422, %425 : vector<2x324xf32>
    %c69 = arith.constant 69 : index
    %427 = memref.load %arg2[%c69] : memref<162xf32, #tpu.memory_space<smem>>
    %428 = vector.broadcast %427 : f32 to vector<2x324xf32>
    %429 = arith.mulf %428, %35 : vector<2x324xf32>
    %430 = arith.addf %426, %429 : vector<2x324xf32>
    %c70 = arith.constant 70 : index
    %431 = memref.load %arg2[%c70] : memref<162xf32, #tpu.memory_space<smem>>
    %432 = vector.broadcast %431 : f32 to vector<2x324xf32>
    %433 = arith.mulf %432, %37 : vector<2x324xf32>
    %434 = arith.addf %430, %433 : vector<2x324xf32>
    %c71 = arith.constant 71 : index
    %435 = memref.load %arg2[%c71] : memref<162xf32, #tpu.memory_space<smem>>
    %436 = vector.broadcast %435 : f32 to vector<2x324xf32>
    %437 = arith.mulf %436, %39 : vector<2x324xf32>
    %438 = arith.addf %434, %437 : vector<2x324xf32>
    %c72 = arith.constant 72 : index
    %439 = memref.load %arg2[%c72] : memref<162xf32, #tpu.memory_space<smem>>
    %440 = vector.broadcast %439 : f32 to vector<2x324xf32>
    %441 = arith.mulf %440, %41 : vector<2x324xf32>
    %442 = arith.addf %438, %441 : vector<2x324xf32>
    %c73 = arith.constant 73 : index
    %443 = memref.load %arg2[%c73] : memref<162xf32, #tpu.memory_space<smem>>
    %444 = vector.broadcast %443 : f32 to vector<2x324xf32>
    %445 = arith.mulf %444, %43 : vector<2x324xf32>
    %446 = arith.addf %442, %445 : vector<2x324xf32>
    %c74 = arith.constant 74 : index
    %447 = memref.load %arg2[%c74] : memref<162xf32, #tpu.memory_space<smem>>
    %448 = vector.broadcast %447 : f32 to vector<2x324xf32>
    %449 = arith.mulf %448, %45 : vector<2x324xf32>
    %450 = arith.addf %446, %449 : vector<2x324xf32>
    %c75 = arith.constant 75 : index
    %451 = memref.load %arg2[%c75] : memref<162xf32, #tpu.memory_space<smem>>
    %452 = vector.broadcast %451 : f32 to vector<2x324xf32>
    %453 = arith.mulf %452, %47 : vector<2x324xf32>
    %454 = arith.addf %450, %453 : vector<2x324xf32>
    %c76 = arith.constant 76 : index
    %455 = memref.load %arg2[%c76] : memref<162xf32, #tpu.memory_space<smem>>
    %456 = vector.broadcast %455 : f32 to vector<2x324xf32>
    %457 = arith.mulf %456, %49 : vector<2x324xf32>
    %458 = arith.addf %454, %457 : vector<2x324xf32>
    %c77 = arith.constant 77 : index
    %459 = memref.load %arg2[%c77] : memref<162xf32, #tpu.memory_space<smem>>
    %460 = vector.broadcast %459 : f32 to vector<2x324xf32>
    %461 = arith.mulf %460, %51 : vector<2x324xf32>
    %462 = arith.addf %458, %461 : vector<2x324xf32>
    %c78 = arith.constant 78 : index
    %463 = memref.load %arg2[%c78] : memref<162xf32, #tpu.memory_space<smem>>
    %464 = vector.broadcast %463 : f32 to vector<2x324xf32>
    %465 = arith.mulf %464, %53 : vector<2x324xf32>
    %466 = arith.addf %462, %465 : vector<2x324xf32>
    %c79 = arith.constant 79 : index
    %467 = memref.load %arg2[%c79] : memref<162xf32, #tpu.memory_space<smem>>
    %468 = vector.broadcast %467 : f32 to vector<2x324xf32>
    %469 = arith.mulf %468, %55 : vector<2x324xf32>
    %470 = arith.addf %466, %469 : vector<2x324xf32>
    %c80 = arith.constant 80 : index
    %471 = memref.load %arg2[%c80] : memref<162xf32, #tpu.memory_space<smem>>
    %472 = vector.broadcast %471 : f32 to vector<2x324xf32>
    %473 = arith.mulf %472, %57 : vector<2x324xf32>
    %474 = arith.addf %470, %473 : vector<2x324xf32>
    %c2_29 = arith.constant 2 : index
    %475 = memref.load %arg3[%c2_29] : memref<6xf32, #tpu.memory_space<smem>>
    %476 = vector.broadcast %475 : f32 to vector<2x324xf32>
    %477 = arith.addf %474, %476 : vector<2x324xf32>
    %cst_30 = arith.constant 0.000000e+00 : f32
    %478 = vector.broadcast %cst_30 : f32 to vector<2x324xf32>
    %479 = arith.cmpf oge, %477, %478 : vector<2x324xf32>
    %cst_31 = arith.constant 1.000000e-01 : f32
    %480 = vector.broadcast %cst_31 : f32 to vector<2x324xf32>
    %481 = arith.mulf %480, %477 : vector<2x324xf32>
    %482 = arith.select %479, %477, %481 : vector<2x324xi1>, vector<2x324xf32>
    %483 = vector.extract_strided_slice %1 {offsets = [2, 0, 30], sizes = [1, 2, 324], strides = [1, 1, 1]} : vector<3x2x384xf32> to vector<1x2x324xf32>
    %484 = vector.shape_cast %483 : vector<1x2x324xf32> to vector<2x324xf32>
    %485 = arith.addf %484, %482 : vector<2x324xf32>
    %486 = vector.broadcast %0 : vector<1x324xf32> to vector<2x324xf32>
    %487 = arith.mulf %485, %486 : vector<2x324xf32>
    %488 = vector.shape_cast %487 : vector<2x324xf32> to vector<1x2x324xf32>
    %cst_32 = arith.constant dense<0.000000e+00> : vector<1xf32>
    %489 = vector.multi_reduction <add>, %488, %cst_32 [1, 2] : vector<1x2x324xf32> to vector<1xf32>
    %490 = vector.shape_cast %489 : vector<1xf32> to vector<1x1x1xf32>
    %491 = vector.extract %490[0, 0, 0] : f32 from vector<1x1x1xf32>
    %492 = vector.broadcast %491 : f32 to vector<1x1xf32>
    %cst_33 = arith.constant 0.001953125 : f32
    %493 = vector.broadcast %cst_33 : f32 to vector<1x1xf32>
    %494 = arith.mulf %492, %493 : vector<1x1xf32>
    %495 = vector.broadcast %494 : vector<1x1xf32> to vector<2x324xf32>
    %496 = arith.subf %487, %495 : vector<2x324xf32>
    %497 = vector.broadcast %0 : vector<1x324xf32> to vector<2x324xf32>
    %498 = arith.mulf %496, %497 : vector<2x324xf32>
    %499 = arith.mulf %498, %498 : vector<2x324xf32>
    %500 = vector.shape_cast %499 : vector<2x324xf32> to vector<1x2x324xf32>
    %cst_34 = arith.constant dense<0.000000e+00> : vector<1xf32>
    %501 = vector.multi_reduction <add>, %500, %cst_34 [1, 2] : vector<1x2x324xf32> to vector<1xf32>
    %502 = vector.shape_cast %501 : vector<1xf32> to vector<1x1x1xf32>
    %503 = vector.extract %502[0, 0, 0] : f32 from vector<1x1x1xf32>
    %504 = vector.broadcast %503 : f32 to vector<1x1xf32>
    %cst_35 = arith.constant 0.001953125 : f32
    %505 = vector.broadcast %cst_35 : f32 to vector<1x1xf32>
    %506 = arith.mulf %504, %505 : vector<1x1xf32>
    %c2_36 = arith.constant 2 : index
    %507 = memref.load %arg4[%c2_36] : memref<6xf32, #tpu.memory_space<smem>>
    %cst_37 = arith.constant 9.99999974E-6 : f32
    %508 = vector.broadcast %cst_37 : f32 to vector<1x1xf32>
    %509 = arith.addf %506, %508 : vector<1x1xf32>
    %510 = math.rsqrt %509 : vector<1x1xf32>
    %511 = vector.broadcast %507 : f32 to vector<1x1xf32>
    %512 = arith.mulf %511, %510 : vector<1x1xf32>
    %513 = vector.broadcast %512 : vector<1x1xf32> to vector<2x324xf32>
    %514 = arith.mulf %498, %513 : vector<2x324xf32>
    %c2_38 = arith.constant 2 : index
    %515 = memref.load %arg5[%c2_38] : memref<6xf32, #tpu.memory_space<smem>>
    %516 = vector.broadcast %515 : f32 to vector<2x324xf32>
    %517 = arith.addf %514, %516 : vector<2x324xf32>
    %518 = vector.broadcast %0 : vector<1x324xf32> to vector<2x324xf32>
    %519 = arith.mulf %517, %518 : vector<2x324xf32>
    %520 = vector.shape_cast %211 : vector<2x324xf32> to vector<1x2x324xf32>
    %521 = vector.shape_cast %365 : vector<2x324xf32> to vector<1x2x324xf32>
    %522 = vector.shape_cast %519 : vector<2x324xf32> to vector<1x2x324xf32>
    %523 = tpu.concatenate %520, %521, %522 in 0 : vector<1x2x324xf32>, vector<1x2x324xf32>, vector<1x2x324xf32> -> vector<3x2x324xf32>
    %524 = tpu.concatenate %2, %523, %3 in 2 : vector<3x2x30xf32>, vector<3x2x324xf32>, vector<3x2x30xf32> -> vector<3x2x384xf32>
    %525 = vector.extract_strided_slice %524 {offsets = [0, 0, 11], sizes = [1, 2, 324], strides = [1, 1, 1]} : vector<3x2x384xf32> to vector<1x2x324xf32>
    %526 = vector.shape_cast %525 : vector<1x2x324xf32> to vector<2x324xf32>
    %527 = vector.extract_strided_slice %524 {offsets = [0, 0, 12], sizes = [1, 2, 324], strides = [1, 1, 1]} : vector<3x2x384xf32> to vector<1x2x324xf32>
    %528 = vector.shape_cast %527 : vector<1x2x324xf32> to vector<2x324xf32>
    %529 = vector.extract_strided_slice %524 {offsets = [0, 0, 13], sizes = [1, 2, 324], strides = [1, 1, 1]} : vector<3x2x384xf32> to vector<1x2x324xf32>
    %530 = vector.shape_cast %529 : vector<1x2x324xf32> to vector<2x324xf32>
    %531 = vector.extract_strided_slice %524 {offsets = [0, 0, 29], sizes = [1, 2, 324], strides = [1, 1, 1]} : vector<3x2x384xf32> to vector<1x2x324xf32>
    %532 = vector.shape_cast %531 : vector<1x2x324xf32> to vector<2x324xf32>
    %533 = vector.extract_strided_slice %524 {offsets = [0, 0, 30], sizes = [1, 2, 324], strides = [1, 1, 1]} : vector<3x2x384xf32> to vector<1x2x324xf32>
    %534 = vector.shape_cast %533 : vector<1x2x324xf32> to vector<2x324xf32>
    %535 = vector.extract_strided_slice %524 {offsets = [0, 0, 31], sizes = [1, 2, 324], strides = [1, 1, 1]} : vector<3x2x384xf32> to vector<1x2x324xf32>
    %536 = vector.shape_cast %535 : vector<1x2x324xf32> to vector<2x324xf32>
    %537 = vector.extract_strided_slice %524 {offsets = [0, 0, 47], sizes = [1, 2, 324], strides = [1, 1, 1]} : vector<3x2x384xf32> to vector<1x2x324xf32>
    %538 = vector.shape_cast %537 : vector<1x2x324xf32> to vector<2x324xf32>
    %539 = vector.extract_strided_slice %524 {offsets = [0, 0, 48], sizes = [1, 2, 324], strides = [1, 1, 1]} : vector<3x2x384xf32> to vector<1x2x324xf32>
    %540 = vector.shape_cast %539 : vector<1x2x324xf32> to vector<2x324xf32>
    %541 = vector.extract_strided_slice %524 {offsets = [0, 0, 49], sizes = [1, 2, 324], strides = [1, 1, 1]} : vector<3x2x384xf32> to vector<1x2x324xf32>
    %542 = vector.shape_cast %541 : vector<1x2x324xf32> to vector<2x324xf32>
    %543 = vector.extract_strided_slice %524 {offsets = [1, 0, 11], sizes = [1, 2, 324], strides = [1, 1, 1]} : vector<3x2x384xf32> to vector<1x2x324xf32>
    %544 = vector.shape_cast %543 : vector<1x2x324xf32> to vector<2x324xf32>
    %545 = vector.extract_strided_slice %524 {offsets = [1, 0, 12], sizes = [1, 2, 324], strides = [1, 1, 1]} : vector<3x2x384xf32> to vector<1x2x324xf32>
    %546 = vector.shape_cast %545 : vector<1x2x324xf32> to vector<2x324xf32>
    %547 = vector.extract_strided_slice %524 {offsets = [1, 0, 13], sizes = [1, 2, 324], strides = [1, 1, 1]} : vector<3x2x384xf32> to vector<1x2x324xf32>
    %548 = vector.shape_cast %547 : vector<1x2x324xf32> to vector<2x324xf32>
    %549 = vector.extract_strided_slice %524 {offsets = [1, 0, 29], sizes = [1, 2, 324], strides = [1, 1, 1]} : vector<3x2x384xf32> to vector<1x2x324xf32>
    %550 = vector.shape_cast %549 : vector<1x2x324xf32> to vector<2x324xf32>
    %551 = vector.extract_strided_slice %524 {offsets = [1, 0, 30], sizes = [1, 2, 324], strides = [1, 1, 1]} : vector<3x2x384xf32> to vector<1x2x324xf32>
    %552 = vector.shape_cast %551 : vector<1x2x324xf32> to vector<2x324xf32>
    %553 = vector.extract_strided_slice %524 {offsets = [1, 0, 31], sizes = [1, 2, 324], strides = [1, 1, 1]} : vector<3x2x384xf32> to vector<1x2x324xf32>
    %554 = vector.shape_cast %553 : vector<1x2x324xf32> to vector<2x324xf32>
    %555 = vector.extract_strided_slice %524 {offsets = [1, 0, 47], sizes = [1, 2, 324], strides = [1, 1, 1]} : vector<3x2x384xf32> to vector<1x2x324xf32>
    %556 = vector.shape_cast %555 : vector<1x2x324xf32> to vector<2x324xf32>
    %557 = vector.extract_strided_slice %524 {offsets = [1, 0, 48], sizes = [1, 2, 324], strides = [1, 1, 1]} : vector<3x2x384xf32> to vector<1x2x324xf32>
    %558 = vector.shape_cast %557 : vector<1x2x324xf32> to vector<2x324xf32>
    %559 = vector.extract_strided_slice %524 {offsets = [1, 0, 49], sizes = [1, 2, 324], strides = [1, 1, 1]} : vector<3x2x384xf32> to vector<1x2x324xf32>
    %560 = vector.shape_cast %559 : vector<1x2x324xf32> to vector<2x324xf32>
    %561 = vector.extract_strided_slice %524 {offsets = [2, 0, 11], sizes = [1, 2, 324], strides = [1, 1, 1]} : vector<3x2x384xf32> to vector<1x2x324xf32>
    %562 = vector.shape_cast %561 : vector<1x2x324xf32> to vector<2x324xf32>
    %563 = vector.extract_strided_slice %524 {offsets = [2, 0, 12], sizes = [1, 2, 324], strides = [1, 1, 1]} : vector<3x2x384xf32> to vector<1x2x324xf32>
    %564 = vector.shape_cast %563 : vector<1x2x324xf32> to vector<2x324xf32>
    %565 = vector.extract_strided_slice %524 {offsets = [2, 0, 13], sizes = [1, 2, 324], strides = [1, 1, 1]} : vector<3x2x384xf32> to vector<1x2x324xf32>
    %566 = vector.shape_cast %565 : vector<1x2x324xf32> to vector<2x324xf32>
    %567 = vector.extract_strided_slice %524 {offsets = [2, 0, 29], sizes = [1, 2, 324], strides = [1, 1, 1]} : vector<3x2x384xf32> to vector<1x2x324xf32>
    %568 = vector.shape_cast %567 : vector<1x2x324xf32> to vector<2x324xf32>
    %569 = vector.extract_strided_slice %524 {offsets = [2, 0, 30], sizes = [1, 2, 324], strides = [1, 1, 1]} : vector<3x2x384xf32> to vector<1x2x324xf32>
    %570 = vector.shape_cast %569 : vector<1x2x324xf32> to vector<2x324xf32>
    %571 = vector.extract_strided_slice %524 {offsets = [2, 0, 31], sizes = [1, 2, 324], strides = [1, 1, 1]} : vector<3x2x384xf32> to vector<1x2x324xf32>
    %572 = vector.shape_cast %571 : vector<1x2x324xf32> to vector<2x324xf32>
    %573 = vector.extract_strided_slice %524 {offsets = [2, 0, 47], sizes = [1, 2, 324], strides = [1, 1, 1]} : vector<3x2x384xf32> to vector<1x2x324xf32>
    %574 = vector.shape_cast %573 : vector<1x2x324xf32> to vector<2x324xf32>
    %575 = vector.extract_strided_slice %524 {offsets = [2, 0, 48], sizes = [1, 2, 324], strides = [1, 1, 1]} : vector<3x2x384xf32> to vector<1x2x324xf32>
    %576 = vector.shape_cast %575 : vector<1x2x324xf32> to vector<2x324xf32>
    %577 = vector.extract_strided_slice %524 {offsets = [2, 0, 49], sizes = [1, 2, 324], strides = [1, 1, 1]} : vector<3x2x384xf32> to vector<1x2x324xf32>
    %578 = vector.shape_cast %577 : vector<1x2x324xf32> to vector<2x324xf32>
    %cst_39 = arith.constant 0.000000e+00 : f32
    %579 = vector.broadcast %cst_39 : f32 to vector<2x324xf32>
    %c81 = arith.constant 81 : index
    %580 = memref.load %arg2[%c81] : memref<162xf32, #tpu.memory_space<smem>>
    %581 = vector.broadcast %580 : f32 to vector<2x324xf32>
    %582 = arith.mulf %581, %526 : vector<2x324xf32>
    %583 = arith.addf %579, %582 : vector<2x324xf32>
    %c82 = arith.constant 82 : index
    %584 = memref.load %arg2[%c82] : memref<162xf32, #tpu.memory_space<smem>>
    %585 = vector.broadcast %584 : f32 to vector<2x324xf32>
    %586 = arith.mulf %585, %528 : vector<2x324xf32>
    %587 = arith.addf %583, %586 : vector<2x324xf32>
    %c83 = arith.constant 83 : index
    %588 = memref.load %arg2[%c83] : memref<162xf32, #tpu.memory_space<smem>>
    %589 = vector.broadcast %588 : f32 to vector<2x324xf32>
    %590 = arith.mulf %589, %530 : vector<2x324xf32>
    %591 = arith.addf %587, %590 : vector<2x324xf32>
    %c84 = arith.constant 84 : index
    %592 = memref.load %arg2[%c84] : memref<162xf32, #tpu.memory_space<smem>>
    %593 = vector.broadcast %592 : f32 to vector<2x324xf32>
    %594 = arith.mulf %593, %532 : vector<2x324xf32>
    %595 = arith.addf %591, %594 : vector<2x324xf32>
    %c85 = arith.constant 85 : index
    %596 = memref.load %arg2[%c85] : memref<162xf32, #tpu.memory_space<smem>>
    %597 = vector.broadcast %596 : f32 to vector<2x324xf32>
    %598 = arith.mulf %597, %534 : vector<2x324xf32>
    %599 = arith.addf %595, %598 : vector<2x324xf32>
    %c86 = arith.constant 86 : index
    %600 = memref.load %arg2[%c86] : memref<162xf32, #tpu.memory_space<smem>>
    %601 = vector.broadcast %600 : f32 to vector<2x324xf32>
    %602 = arith.mulf %601, %536 : vector<2x324xf32>
    %603 = arith.addf %599, %602 : vector<2x324xf32>
    %c87 = arith.constant 87 : index
    %604 = memref.load %arg2[%c87] : memref<162xf32, #tpu.memory_space<smem>>
    %605 = vector.broadcast %604 : f32 to vector<2x324xf32>
    %606 = arith.mulf %605, %538 : vector<2x324xf32>
    %607 = arith.addf %603, %606 : vector<2x324xf32>
    %c88 = arith.constant 88 : index
    %608 = memref.load %arg2[%c88] : memref<162xf32, #tpu.memory_space<smem>>
    %609 = vector.broadcast %608 : f32 to vector<2x324xf32>
    %610 = arith.mulf %609, %540 : vector<2x324xf32>
    %611 = arith.addf %607, %610 : vector<2x324xf32>
    %c89 = arith.constant 89 : index
    %612 = memref.load %arg2[%c89] : memref<162xf32, #tpu.memory_space<smem>>
    %613 = vector.broadcast %612 : f32 to vector<2x324xf32>
    %614 = arith.mulf %613, %542 : vector<2x324xf32>
    %615 = arith.addf %611, %614 : vector<2x324xf32>
    %c90 = arith.constant 90 : index
    %616 = memref.load %arg2[%c90] : memref<162xf32, #tpu.memory_space<smem>>
    %617 = vector.broadcast %616 : f32 to vector<2x324xf32>
    %618 = arith.mulf %617, %544 : vector<2x324xf32>
    %619 = arith.addf %615, %618 : vector<2x324xf32>
    %c91 = arith.constant 91 : index
    %620 = memref.load %arg2[%c91] : memref<162xf32, #tpu.memory_space<smem>>
    %621 = vector.broadcast %620 : f32 to vector<2x324xf32>
    %622 = arith.mulf %621, %546 : vector<2x324xf32>
    %623 = arith.addf %619, %622 : vector<2x324xf32>
    %c92 = arith.constant 92 : index
    %624 = memref.load %arg2[%c92] : memref<162xf32, #tpu.memory_space<smem>>
    %625 = vector.broadcast %624 : f32 to vector<2x324xf32>
    %626 = arith.mulf %625, %548 : vector<2x324xf32>
    %627 = arith.addf %623, %626 : vector<2x324xf32>
    %c93 = arith.constant 93 : index
    %628 = memref.load %arg2[%c93] : memref<162xf32, #tpu.memory_space<smem>>
    %629 = vector.broadcast %628 : f32 to vector<2x324xf32>
    %630 = arith.mulf %629, %550 : vector<2x324xf32>
    %631 = arith.addf %627, %630 : vector<2x324xf32>
    %c94 = arith.constant 94 : index
    %632 = memref.load %arg2[%c94] : memref<162xf32, #tpu.memory_space<smem>>
    %633 = vector.broadcast %632 : f32 to vector<2x324xf32>
    %634 = arith.mulf %633, %552 : vector<2x324xf32>
    %635 = arith.addf %631, %634 : vector<2x324xf32>
    %c95 = arith.constant 95 : index
    %636 = memref.load %arg2[%c95] : memref<162xf32, #tpu.memory_space<smem>>
    %637 = vector.broadcast %636 : f32 to vector<2x324xf32>
    %638 = arith.mulf %637, %554 : vector<2x324xf32>
    %639 = arith.addf %635, %638 : vector<2x324xf32>
    %c96 = arith.constant 96 : index
    %640 = memref.load %arg2[%c96] : memref<162xf32, #tpu.memory_space<smem>>
    %641 = vector.broadcast %640 : f32 to vector<2x324xf32>
    %642 = arith.mulf %641, %556 : vector<2x324xf32>
    %643 = arith.addf %639, %642 : vector<2x324xf32>
    %c97 = arith.constant 97 : index
    %644 = memref.load %arg2[%c97] : memref<162xf32, #tpu.memory_space<smem>>
    %645 = vector.broadcast %644 : f32 to vector<2x324xf32>
    %646 = arith.mulf %645, %558 : vector<2x324xf32>
    %647 = arith.addf %643, %646 : vector<2x324xf32>
    %c98 = arith.constant 98 : index
    %648 = memref.load %arg2[%c98] : memref<162xf32, #tpu.memory_space<smem>>
    %649 = vector.broadcast %648 : f32 to vector<2x324xf32>
    %650 = arith.mulf %649, %560 : vector<2x324xf32>
    %651 = arith.addf %647, %650 : vector<2x324xf32>
    %c99 = arith.constant 99 : index
    %652 = memref.load %arg2[%c99] : memref<162xf32, #tpu.memory_space<smem>>
    %653 = vector.broadcast %652 : f32 to vector<2x324xf32>
    %654 = arith.mulf %653, %562 : vector<2x324xf32>
    %655 = arith.addf %651, %654 : vector<2x324xf32>
    %c100 = arith.constant 100 : index
    %656 = memref.load %arg2[%c100] : memref<162xf32, #tpu.memory_space<smem>>
    %657 = vector.broadcast %656 : f32 to vector<2x324xf32>
    %658 = arith.mulf %657, %564 : vector<2x324xf32>
    %659 = arith.addf %655, %658 : vector<2x324xf32>
    %c101 = arith.constant 101 : index
    %660 = memref.load %arg2[%c101] : memref<162xf32, #tpu.memory_space<smem>>
    %661 = vector.broadcast %660 : f32 to vector<2x324xf32>
    %662 = arith.mulf %661, %566 : vector<2x324xf32>
    %663 = arith.addf %659, %662 : vector<2x324xf32>
    %c102 = arith.constant 102 : index
    %664 = memref.load %arg2[%c102] : memref<162xf32, #tpu.memory_space<smem>>
    %665 = vector.broadcast %664 : f32 to vector<2x324xf32>
    %666 = arith.mulf %665, %568 : vector<2x324xf32>
    %667 = arith.addf %663, %666 : vector<2x324xf32>
    %c103 = arith.constant 103 : index
    %668 = memref.load %arg2[%c103] : memref<162xf32, #tpu.memory_space<smem>>
    %669 = vector.broadcast %668 : f32 to vector<2x324xf32>
    %670 = arith.mulf %669, %570 : vector<2x324xf32>
    %671 = arith.addf %667, %670 : vector<2x324xf32>
    %c104 = arith.constant 104 : index
    %672 = memref.load %arg2[%c104] : memref<162xf32, #tpu.memory_space<smem>>
    %673 = vector.broadcast %672 : f32 to vector<2x324xf32>
    %674 = arith.mulf %673, %572 : vector<2x324xf32>
    %675 = arith.addf %671, %674 : vector<2x324xf32>
    %c105 = arith.constant 105 : index
    %676 = memref.load %arg2[%c105] : memref<162xf32, #tpu.memory_space<smem>>
    %677 = vector.broadcast %676 : f32 to vector<2x324xf32>
    %678 = arith.mulf %677, %574 : vector<2x324xf32>
    %679 = arith.addf %675, %678 : vector<2x324xf32>
    %c106 = arith.constant 106 : index
    %680 = memref.load %arg2[%c106] : memref<162xf32, #tpu.memory_space<smem>>
    %681 = vector.broadcast %680 : f32 to vector<2x324xf32>
    %682 = arith.mulf %681, %576 : vector<2x324xf32>
    %683 = arith.addf %679, %682 : vector<2x324xf32>
    %c107 = arith.constant 107 : index
    %684 = memref.load %arg2[%c107] : memref<162xf32, #tpu.memory_space<smem>>
    %685 = vector.broadcast %684 : f32 to vector<2x324xf32>
    %686 = arith.mulf %685, %578 : vector<2x324xf32>
    %687 = arith.addf %683, %686 : vector<2x324xf32>
    %c3_40 = arith.constant 3 : index
    %688 = memref.load %arg3[%c3_40] : memref<6xf32, #tpu.memory_space<smem>>
    %689 = vector.broadcast %688 : f32 to vector<2x324xf32>
    %690 = arith.addf %687, %689 : vector<2x324xf32>
    %cst_41 = arith.constant 0.000000e+00 : f32
    %691 = vector.broadcast %cst_41 : f32 to vector<2x324xf32>
    %692 = arith.cmpf oge, %690, %691 : vector<2x324xf32>
    %cst_42 = arith.constant 1.000000e-01 : f32
    %693 = vector.broadcast %cst_42 : f32 to vector<2x324xf32>
    %694 = arith.mulf %693, %690 : vector<2x324xf32>
    %695 = arith.select %692, %690, %694 : vector<2x324xi1>, vector<2x324xf32>
    %696 = vector.extract_strided_slice %524 {offsets = [0, 0, 30], sizes = [1, 2, 324], strides = [1, 1, 1]} : vector<3x2x384xf32> to vector<1x2x324xf32>
    %697 = vector.shape_cast %696 : vector<1x2x324xf32> to vector<2x324xf32>
    %698 = arith.addf %697, %695 : vector<2x324xf32>
    %699 = vector.broadcast %0 : vector<1x324xf32> to vector<2x324xf32>
    %700 = arith.mulf %698, %699 : vector<2x324xf32>
    %701 = vector.shape_cast %700 : vector<2x324xf32> to vector<1x2x324xf32>
    %cst_43 = arith.constant dense<0.000000e+00> : vector<1xf32>
    %702 = vector.multi_reduction <add>, %701, %cst_43 [1, 2] : vector<1x2x324xf32> to vector<1xf32>
    %703 = vector.shape_cast %702 : vector<1xf32> to vector<1x1x1xf32>
    %704 = vector.extract %703[0, 0, 0] : f32 from vector<1x1x1xf32>
    %705 = vector.broadcast %704 : f32 to vector<1x1xf32>
    %cst_44 = arith.constant 0.001953125 : f32
    %706 = vector.broadcast %cst_44 : f32 to vector<1x1xf32>
    %707 = arith.mulf %705, %706 : vector<1x1xf32>
    %708 = vector.broadcast %707 : vector<1x1xf32> to vector<2x324xf32>
    %709 = arith.subf %700, %708 : vector<2x324xf32>
    %710 = vector.broadcast %0 : vector<1x324xf32> to vector<2x324xf32>
    %711 = arith.mulf %709, %710 : vector<2x324xf32>
    %712 = arith.mulf %711, %711 : vector<2x324xf32>
    %713 = vector.shape_cast %712 : vector<2x324xf32> to vector<1x2x324xf32>
    %cst_45 = arith.constant dense<0.000000e+00> : vector<1xf32>
    %714 = vector.multi_reduction <add>, %713, %cst_45 [1, 2] : vector<1x2x324xf32> to vector<1xf32>
    %715 = vector.shape_cast %714 : vector<1xf32> to vector<1x1x1xf32>
    %716 = vector.extract %715[0, 0, 0] : f32 from vector<1x1x1xf32>
    %717 = vector.broadcast %716 : f32 to vector<1x1xf32>
    %cst_46 = arith.constant 0.001953125 : f32
    %718 = vector.broadcast %cst_46 : f32 to vector<1x1xf32>
    %719 = arith.mulf %717, %718 : vector<1x1xf32>
    %c3_47 = arith.constant 3 : index
    %720 = memref.load %arg4[%c3_47] : memref<6xf32, #tpu.memory_space<smem>>
    %cst_48 = arith.constant 9.99999974E-6 : f32
    %721 = vector.broadcast %cst_48 : f32 to vector<1x1xf32>
    %722 = arith.addf %719, %721 : vector<1x1xf32>
    %723 = math.rsqrt %722 : vector<1x1xf32>
    %724 = vector.broadcast %720 : f32 to vector<1x1xf32>
    %725 = arith.mulf %724, %723 : vector<1x1xf32>
    %726 = vector.broadcast %725 : vector<1x1xf32> to vector<2x324xf32>
    %727 = arith.mulf %711, %726 : vector<2x324xf32>
    %c3_49 = arith.constant 3 : index
    %728 = memref.load %arg5[%c3_49] : memref<6xf32, #tpu.memory_space<smem>>
    %729 = vector.broadcast %728 : f32 to vector<2x324xf32>
    %730 = arith.addf %727, %729 : vector<2x324xf32>
    %731 = vector.broadcast %0 : vector<1x324xf32> to vector<2x324xf32>
    %732 = arith.mulf %730, %731 : vector<2x324xf32>
    %cst_50 = arith.constant 0.000000e+00 : f32
    %733 = vector.broadcast %cst_50 : f32 to vector<2x324xf32>
    %c108 = arith.constant 108 : index
    %734 = memref.load %arg2[%c108] : memref<162xf32, #tpu.memory_space<smem>>
    %735 = vector.broadcast %734 : f32 to vector<2x324xf32>
    %736 = arith.mulf %735, %526 : vector<2x324xf32>
    %737 = arith.addf %733, %736 : vector<2x324xf32>
    %c109 = arith.constant 109 : index
    %738 = memref.load %arg2[%c109] : memref<162xf32, #tpu.memory_space<smem>>
    %739 = vector.broadcast %738 : f32 to vector<2x324xf32>
    %740 = arith.mulf %739, %528 : vector<2x324xf32>
    %741 = arith.addf %737, %740 : vector<2x324xf32>
    %c110 = arith.constant 110 : index
    %742 = memref.load %arg2[%c110] : memref<162xf32, #tpu.memory_space<smem>>
    %743 = vector.broadcast %742 : f32 to vector<2x324xf32>
    %744 = arith.mulf %743, %530 : vector<2x324xf32>
    %745 = arith.addf %741, %744 : vector<2x324xf32>
    %c111 = arith.constant 111 : index
    %746 = memref.load %arg2[%c111] : memref<162xf32, #tpu.memory_space<smem>>
    %747 = vector.broadcast %746 : f32 to vector<2x324xf32>
    %748 = arith.mulf %747, %532 : vector<2x324xf32>
    %749 = arith.addf %745, %748 : vector<2x324xf32>
    %c112 = arith.constant 112 : index
    %750 = memref.load %arg2[%c112] : memref<162xf32, #tpu.memory_space<smem>>
    %751 = vector.broadcast %750 : f32 to vector<2x324xf32>
    %752 = arith.mulf %751, %534 : vector<2x324xf32>
    %753 = arith.addf %749, %752 : vector<2x324xf32>
    %c113 = arith.constant 113 : index
    %754 = memref.load %arg2[%c113] : memref<162xf32, #tpu.memory_space<smem>>
    %755 = vector.broadcast %754 : f32 to vector<2x324xf32>
    %756 = arith.mulf %755, %536 : vector<2x324xf32>
    %757 = arith.addf %753, %756 : vector<2x324xf32>
    %c114 = arith.constant 114 : index
    %758 = memref.load %arg2[%c114] : memref<162xf32, #tpu.memory_space<smem>>
    %759 = vector.broadcast %758 : f32 to vector<2x324xf32>
    %760 = arith.mulf %759, %538 : vector<2x324xf32>
    %761 = arith.addf %757, %760 : vector<2x324xf32>
    %c115 = arith.constant 115 : index
    %762 = memref.load %arg2[%c115] : memref<162xf32, #tpu.memory_space<smem>>
    %763 = vector.broadcast %762 : f32 to vector<2x324xf32>
    %764 = arith.mulf %763, %540 : vector<2x324xf32>
    %765 = arith.addf %761, %764 : vector<2x324xf32>
    %c116 = arith.constant 116 : index
    %766 = memref.load %arg2[%c116] : memref<162xf32, #tpu.memory_space<smem>>
    %767 = vector.broadcast %766 : f32 to vector<2x324xf32>
    %768 = arith.mulf %767, %542 : vector<2x324xf32>
    %769 = arith.addf %765, %768 : vector<2x324xf32>
    %c117 = arith.constant 117 : index
    %770 = memref.load %arg2[%c117] : memref<162xf32, #tpu.memory_space<smem>>
    %771 = vector.broadcast %770 : f32 to vector<2x324xf32>
    %772 = arith.mulf %771, %544 : vector<2x324xf32>
    %773 = arith.addf %769, %772 : vector<2x324xf32>
    %c118 = arith.constant 118 : index
    %774 = memref.load %arg2[%c118] : memref<162xf32, #tpu.memory_space<smem>>
    %775 = vector.broadcast %774 : f32 to vector<2x324xf32>
    %776 = arith.mulf %775, %546 : vector<2x324xf32>
    %777 = arith.addf %773, %776 : vector<2x324xf32>
    %c119 = arith.constant 119 : index
    %778 = memref.load %arg2[%c119] : memref<162xf32, #tpu.memory_space<smem>>
    %779 = vector.broadcast %778 : f32 to vector<2x324xf32>
    %780 = arith.mulf %779, %548 : vector<2x324xf32>
    %781 = arith.addf %777, %780 : vector<2x324xf32>
    %c120 = arith.constant 120 : index
    %782 = memref.load %arg2[%c120] : memref<162xf32, #tpu.memory_space<smem>>
    %783 = vector.broadcast %782 : f32 to vector<2x324xf32>
    %784 = arith.mulf %783, %550 : vector<2x324xf32>
    %785 = arith.addf %781, %784 : vector<2x324xf32>
    %c121 = arith.constant 121 : index
    %786 = memref.load %arg2[%c121] : memref<162xf32, #tpu.memory_space<smem>>
    %787 = vector.broadcast %786 : f32 to vector<2x324xf32>
    %788 = arith.mulf %787, %552 : vector<2x324xf32>
    %789 = arith.addf %785, %788 : vector<2x324xf32>
    %c122 = arith.constant 122 : index
    %790 = memref.load %arg2[%c122] : memref<162xf32, #tpu.memory_space<smem>>
    %791 = vector.broadcast %790 : f32 to vector<2x324xf32>
    %792 = arith.mulf %791, %554 : vector<2x324xf32>
    %793 = arith.addf %789, %792 : vector<2x324xf32>
    %c123 = arith.constant 123 : index
    %794 = memref.load %arg2[%c123] : memref<162xf32, #tpu.memory_space<smem>>
    %795 = vector.broadcast %794 : f32 to vector<2x324xf32>
    %796 = arith.mulf %795, %556 : vector<2x324xf32>
    %797 = arith.addf %793, %796 : vector<2x324xf32>
    %c124 = arith.constant 124 : index
    %798 = memref.load %arg2[%c124] : memref<162xf32, #tpu.memory_space<smem>>
    %799 = vector.broadcast %798 : f32 to vector<2x324xf32>
    %800 = arith.mulf %799, %558 : vector<2x324xf32>
    %801 = arith.addf %797, %800 : vector<2x324xf32>
    %c125 = arith.constant 125 : index
    %802 = memref.load %arg2[%c125] : memref<162xf32, #tpu.memory_space<smem>>
    %803 = vector.broadcast %802 : f32 to vector<2x324xf32>
    %804 = arith.mulf %803, %560 : vector<2x324xf32>
    %805 = arith.addf %801, %804 : vector<2x324xf32>
    %c126 = arith.constant 126 : index
    %806 = memref.load %arg2[%c126] : memref<162xf32, #tpu.memory_space<smem>>
    %807 = vector.broadcast %806 : f32 to vector<2x324xf32>
    %808 = arith.mulf %807, %562 : vector<2x324xf32>
    %809 = arith.addf %805, %808 : vector<2x324xf32>
    %c127 = arith.constant 127 : index
    %810 = memref.load %arg2[%c127] : memref<162xf32, #tpu.memory_space<smem>>
    %811 = vector.broadcast %810 : f32 to vector<2x324xf32>
    %812 = arith.mulf %811, %564 : vector<2x324xf32>
    %813 = arith.addf %809, %812 : vector<2x324xf32>
    %c128 = arith.constant 128 : index
    %814 = memref.load %arg2[%c128] : memref<162xf32, #tpu.memory_space<smem>>
    %815 = vector.broadcast %814 : f32 to vector<2x324xf32>
    %816 = arith.mulf %815, %566 : vector<2x324xf32>
    %817 = arith.addf %813, %816 : vector<2x324xf32>
    %c129 = arith.constant 129 : index
    %818 = memref.load %arg2[%c129] : memref<162xf32, #tpu.memory_space<smem>>
    %819 = vector.broadcast %818 : f32 to vector<2x324xf32>
    %820 = arith.mulf %819, %568 : vector<2x324xf32>
    %821 = arith.addf %817, %820 : vector<2x324xf32>
    %c130 = arith.constant 130 : index
    %822 = memref.load %arg2[%c130] : memref<162xf32, #tpu.memory_space<smem>>
    %823 = vector.broadcast %822 : f32 to vector<2x324xf32>
    %824 = arith.mulf %823, %570 : vector<2x324xf32>
    %825 = arith.addf %821, %824 : vector<2x324xf32>
    %c131 = arith.constant 131 : index
    %826 = memref.load %arg2[%c131] : memref<162xf32, #tpu.memory_space<smem>>
    %827 = vector.broadcast %826 : f32 to vector<2x324xf32>
    %828 = arith.mulf %827, %572 : vector<2x324xf32>
    %829 = arith.addf %825, %828 : vector<2x324xf32>
    %c132 = arith.constant 132 : index
    %830 = memref.load %arg2[%c132] : memref<162xf32, #tpu.memory_space<smem>>
    %831 = vector.broadcast %830 : f32 to vector<2x324xf32>
    %832 = arith.mulf %831, %574 : vector<2x324xf32>
    %833 = arith.addf %829, %832 : vector<2x324xf32>
    %c133 = arith.constant 133 : index
    %834 = memref.load %arg2[%c133] : memref<162xf32, #tpu.memory_space<smem>>
    %835 = vector.broadcast %834 : f32 to vector<2x324xf32>
    %836 = arith.mulf %835, %576 : vector<2x324xf32>
    %837 = arith.addf %833, %836 : vector<2x324xf32>
    %c134 = arith.constant 134 : index
    %838 = memref.load %arg2[%c134] : memref<162xf32, #tpu.memory_space<smem>>
    %839 = vector.broadcast %838 : f32 to vector<2x324xf32>
    %840 = arith.mulf %839, %578 : vector<2x324xf32>
    %841 = arith.addf %837, %840 : vector<2x324xf32>
    %c4_51 = arith.constant 4 : index
    %842 = memref.load %arg3[%c4_51] : memref<6xf32, #tpu.memory_space<smem>>
    %843 = vector.broadcast %842 : f32 to vector<2x324xf32>
    %844 = arith.addf %841, %843 : vector<2x324xf32>
    %cst_52 = arith.constant 0.000000e+00 : f32
    %845 = vector.broadcast %cst_52 : f32 to vector<2x324xf32>
    %846 = arith.cmpf oge, %844, %845 : vector<2x324xf32>
    %cst_53 = arith.constant 1.000000e-01 : f32
    %847 = vector.broadcast %cst_53 : f32 to vector<2x324xf32>
    %848 = arith.mulf %847, %844 : vector<2x324xf32>
    %849 = arith.select %846, %844, %848 : vector<2x324xi1>, vector<2x324xf32>
    %850 = vector.extract_strided_slice %524 {offsets = [1, 0, 30], sizes = [1, 2, 324], strides = [1, 1, 1]} : vector<3x2x384xf32> to vector<1x2x324xf32>
    %851 = vector.shape_cast %850 : vector<1x2x324xf32> to vector<2x324xf32>
    %852 = arith.addf %851, %849 : vector<2x324xf32>
    %853 = vector.broadcast %0 : vector<1x324xf32> to vector<2x324xf32>
    %854 = arith.mulf %852, %853 : vector<2x324xf32>
    %855 = vector.shape_cast %854 : vector<2x324xf32> to vector<1x2x324xf32>
    %cst_54 = arith.constant dense<0.000000e+00> : vector<1xf32>
    %856 = vector.multi_reduction <add>, %855, %cst_54 [1, 2] : vector<1x2x324xf32> to vector<1xf32>
    %857 = vector.shape_cast %856 : vector<1xf32> to vector<1x1x1xf32>
    %858 = vector.extract %857[0, 0, 0] : f32 from vector<1x1x1xf32>
    %859 = vector.broadcast %858 : f32 to vector<1x1xf32>
    %cst_55 = arith.constant 0.001953125 : f32
    %860 = vector.broadcast %cst_55 : f32 to vector<1x1xf32>
    %861 = arith.mulf %859, %860 : vector<1x1xf32>
    %862 = vector.broadcast %861 : vector<1x1xf32> to vector<2x324xf32>
    %863 = arith.subf %854, %862 : vector<2x324xf32>
    %864 = vector.broadcast %0 : vector<1x324xf32> to vector<2x324xf32>
    %865 = arith.mulf %863, %864 : vector<2x324xf32>
    %866 = arith.mulf %865, %865 : vector<2x324xf32>
    %867 = vector.shape_cast %866 : vector<2x324xf32> to vector<1x2x324xf32>
    %cst_56 = arith.constant dense<0.000000e+00> : vector<1xf32>
    %868 = vector.multi_reduction <add>, %867, %cst_56 [1, 2] : vector<1x2x324xf32> to vector<1xf32>
    %869 = vector.shape_cast %868 : vector<1xf32> to vector<1x1x1xf32>
    %870 = vector.extract %869[0, 0, 0] : f32 from vector<1x1x1xf32>
    %871 = vector.broadcast %870 : f32 to vector<1x1xf32>
    %cst_57 = arith.constant 0.001953125 : f32
    %872 = vector.broadcast %cst_57 : f32 to vector<1x1xf32>
    %873 = arith.mulf %871, %872 : vector<1x1xf32>
    %c4_58 = arith.constant 4 : index
    %874 = memref.load %arg4[%c4_58] : memref<6xf32, #tpu.memory_space<smem>>
    %cst_59 = arith.constant 9.99999974E-6 : f32
    %875 = vector.broadcast %cst_59 : f32 to vector<1x1xf32>
    %876 = arith.addf %873, %875 : vector<1x1xf32>
    %877 = math.rsqrt %876 : vector<1x1xf32>
    %878 = vector.broadcast %874 : f32 to vector<1x1xf32>
    %879 = arith.mulf %878, %877 : vector<1x1xf32>
    %880 = vector.broadcast %879 : vector<1x1xf32> to vector<2x324xf32>
    %881 = arith.mulf %865, %880 : vector<2x324xf32>
    %c4_60 = arith.constant 4 : index
    %882 = memref.load %arg5[%c4_60] : memref<6xf32, #tpu.memory_space<smem>>
    %883 = vector.broadcast %882 : f32 to vector<2x324xf32>
    %884 = arith.addf %881, %883 : vector<2x324xf32>
    %885 = vector.broadcast %0 : vector<1x324xf32> to vector<2x324xf32>
    %886 = arith.mulf %884, %885 : vector<2x324xf32>
    %cst_61 = arith.constant 0.000000e+00 : f32
    %887 = vector.broadcast %cst_61 : f32 to vector<2x324xf32>
    %c135 = arith.constant 135 : index
    %888 = memref.load %arg2[%c135] : memref<162xf32, #tpu.memory_space<smem>>
    %889 = vector.broadcast %888 : f32 to vector<2x324xf32>
    %890 = arith.mulf %889, %526 : vector<2x324xf32>
    %891 = arith.addf %887, %890 : vector<2x324xf32>
    %c136 = arith.constant 136 : index
    %892 = memref.load %arg2[%c136] : memref<162xf32, #tpu.memory_space<smem>>
    %893 = vector.broadcast %892 : f32 to vector<2x324xf32>
    %894 = arith.mulf %893, %528 : vector<2x324xf32>
    %895 = arith.addf %891, %894 : vector<2x324xf32>
    %c137 = arith.constant 137 : index
    %896 = memref.load %arg2[%c137] : memref<162xf32, #tpu.memory_space<smem>>
    %897 = vector.broadcast %896 : f32 to vector<2x324xf32>
    %898 = arith.mulf %897, %530 : vector<2x324xf32>
    %899 = arith.addf %895, %898 : vector<2x324xf32>
    %c138 = arith.constant 138 : index
    %900 = memref.load %arg2[%c138] : memref<162xf32, #tpu.memory_space<smem>>
    %901 = vector.broadcast %900 : f32 to vector<2x324xf32>
    %902 = arith.mulf %901, %532 : vector<2x324xf32>
    %903 = arith.addf %899, %902 : vector<2x324xf32>
    %c139 = arith.constant 139 : index
    %904 = memref.load %arg2[%c139] : memref<162xf32, #tpu.memory_space<smem>>
    %905 = vector.broadcast %904 : f32 to vector<2x324xf32>
    %906 = arith.mulf %905, %534 : vector<2x324xf32>
    %907 = arith.addf %903, %906 : vector<2x324xf32>
    %c140 = arith.constant 140 : index
    %908 = memref.load %arg2[%c140] : memref<162xf32, #tpu.memory_space<smem>>
    %909 = vector.broadcast %908 : f32 to vector<2x324xf32>
    %910 = arith.mulf %909, %536 : vector<2x324xf32>
    %911 = arith.addf %907, %910 : vector<2x324xf32>
    %c141 = arith.constant 141 : index
    %912 = memref.load %arg2[%c141] : memref<162xf32, #tpu.memory_space<smem>>
    %913 = vector.broadcast %912 : f32 to vector<2x324xf32>
    %914 = arith.mulf %913, %538 : vector<2x324xf32>
    %915 = arith.addf %911, %914 : vector<2x324xf32>
    %c142 = arith.constant 142 : index
    %916 = memref.load %arg2[%c142] : memref<162xf32, #tpu.memory_space<smem>>
    %917 = vector.broadcast %916 : f32 to vector<2x324xf32>
    %918 = arith.mulf %917, %540 : vector<2x324xf32>
    %919 = arith.addf %915, %918 : vector<2x324xf32>
    %c143 = arith.constant 143 : index
    %920 = memref.load %arg2[%c143] : memref<162xf32, #tpu.memory_space<smem>>
    %921 = vector.broadcast %920 : f32 to vector<2x324xf32>
    %922 = arith.mulf %921, %542 : vector<2x324xf32>
    %923 = arith.addf %919, %922 : vector<2x324xf32>
    %c144 = arith.constant 144 : index
    %924 = memref.load %arg2[%c144] : memref<162xf32, #tpu.memory_space<smem>>
    %925 = vector.broadcast %924 : f32 to vector<2x324xf32>
    %926 = arith.mulf %925, %544 : vector<2x324xf32>
    %927 = arith.addf %923, %926 : vector<2x324xf32>
    %c145 = arith.constant 145 : index
    %928 = memref.load %arg2[%c145] : memref<162xf32, #tpu.memory_space<smem>>
    %929 = vector.broadcast %928 : f32 to vector<2x324xf32>
    %930 = arith.mulf %929, %546 : vector<2x324xf32>
    %931 = arith.addf %927, %930 : vector<2x324xf32>
    %c146 = arith.constant 146 : index
    %932 = memref.load %arg2[%c146] : memref<162xf32, #tpu.memory_space<smem>>
    %933 = vector.broadcast %932 : f32 to vector<2x324xf32>
    %934 = arith.mulf %933, %548 : vector<2x324xf32>
    %935 = arith.addf %931, %934 : vector<2x324xf32>
    %c147 = arith.constant 147 : index
    %936 = memref.load %arg2[%c147] : memref<162xf32, #tpu.memory_space<smem>>
    %937 = vector.broadcast %936 : f32 to vector<2x324xf32>
    %938 = arith.mulf %937, %550 : vector<2x324xf32>
    %939 = arith.addf %935, %938 : vector<2x324xf32>
    %c148 = arith.constant 148 : index
    %940 = memref.load %arg2[%c148] : memref<162xf32, #tpu.memory_space<smem>>
    %941 = vector.broadcast %940 : f32 to vector<2x324xf32>
    %942 = arith.mulf %941, %552 : vector<2x324xf32>
    %943 = arith.addf %939, %942 : vector<2x324xf32>
    %c149 = arith.constant 149 : index
    %944 = memref.load %arg2[%c149] : memref<162xf32, #tpu.memory_space<smem>>
    %945 = vector.broadcast %944 : f32 to vector<2x324xf32>
    %946 = arith.mulf %945, %554 : vector<2x324xf32>
    %947 = arith.addf %943, %946 : vector<2x324xf32>
    %c150 = arith.constant 150 : index
    %948 = memref.load %arg2[%c150] : memref<162xf32, #tpu.memory_space<smem>>
    %949 = vector.broadcast %948 : f32 to vector<2x324xf32>
    %950 = arith.mulf %949, %556 : vector<2x324xf32>
    %951 = arith.addf %947, %950 : vector<2x324xf32>
    %c151 = arith.constant 151 : index
    %952 = memref.load %arg2[%c151] : memref<162xf32, #tpu.memory_space<smem>>
    %953 = vector.broadcast %952 : f32 to vector<2x324xf32>
    %954 = arith.mulf %953, %558 : vector<2x324xf32>
    %955 = arith.addf %951, %954 : vector<2x324xf32>
    %c152 = arith.constant 152 : index
    %956 = memref.load %arg2[%c152] : memref<162xf32, #tpu.memory_space<smem>>
    %957 = vector.broadcast %956 : f32 to vector<2x324xf32>
    %958 = arith.mulf %957, %560 : vector<2x324xf32>
    %959 = arith.addf %955, %958 : vector<2x324xf32>
    %c153 = arith.constant 153 : index
    %960 = memref.load %arg2[%c153] : memref<162xf32, #tpu.memory_space<smem>>
    %961 = vector.broadcast %960 : f32 to vector<2x324xf32>
    %962 = arith.mulf %961, %562 : vector<2x324xf32>
    %963 = arith.addf %959, %962 : vector<2x324xf32>
    %c154 = arith.constant 154 : index
    %964 = memref.load %arg2[%c154] : memref<162xf32, #tpu.memory_space<smem>>
    %965 = vector.broadcast %964 : f32 to vector<2x324xf32>
    %966 = arith.mulf %965, %564 : vector<2x324xf32>
    %967 = arith.addf %963, %966 : vector<2x324xf32>
    %c155 = arith.constant 155 : index
    %968 = memref.load %arg2[%c155] : memref<162xf32, #tpu.memory_space<smem>>
    %969 = vector.broadcast %968 : f32 to vector<2x324xf32>
    %970 = arith.mulf %969, %566 : vector<2x324xf32>
    %971 = arith.addf %967, %970 : vector<2x324xf32>
    %c156 = arith.constant 156 : index
    %972 = memref.load %arg2[%c156] : memref<162xf32, #tpu.memory_space<smem>>
    %973 = vector.broadcast %972 : f32 to vector<2x324xf32>
    %974 = arith.mulf %973, %568 : vector<2x324xf32>
    %975 = arith.addf %971, %974 : vector<2x324xf32>
    %c157 = arith.constant 157 : index
    %976 = memref.load %arg2[%c157] : memref<162xf32, #tpu.memory_space<smem>>
    %977 = vector.broadcast %976 : f32 to vector<2x324xf32>
    %978 = arith.mulf %977, %570 : vector<2x324xf32>
    %979 = arith.addf %975, %978 : vector<2x324xf32>
    %c158 = arith.constant 158 : index
    %980 = memref.load %arg2[%c158] : memref<162xf32, #tpu.memory_space<smem>>
    %981 = vector.broadcast %980 : f32 to vector<2x324xf32>
    %982 = arith.mulf %981, %572 : vector<2x324xf32>
    %983 = arith.addf %979, %982 : vector<2x324xf32>
    %c159 = arith.constant 159 : index
    %984 = memref.load %arg2[%c159] : memref<162xf32, #tpu.memory_space<smem>>
    %985 = vector.broadcast %984 : f32 to vector<2x324xf32>
    %986 = arith.mulf %985, %574 : vector<2x324xf32>
    %987 = arith.addf %983, %986 : vector<2x324xf32>
    %c160 = arith.constant 160 : index
    %988 = memref.load %arg2[%c160] : memref<162xf32, #tpu.memory_space<smem>>
    %989 = vector.broadcast %988 : f32 to vector<2x324xf32>
    %990 = arith.mulf %989, %576 : vector<2x324xf32>
    %991 = arith.addf %987, %990 : vector<2x324xf32>
    %c161 = arith.constant 161 : index
    %992 = memref.load %arg2[%c161] : memref<162xf32, #tpu.memory_space<smem>>
    %993 = vector.broadcast %992 : f32 to vector<2x324xf32>
    %994 = arith.mulf %993, %578 : vector<2x324xf32>
    %995 = arith.addf %991, %994 : vector<2x324xf32>
    %c5_62 = arith.constant 5 : index
    %996 = memref.load %arg3[%c5_62] : memref<6xf32, #tpu.memory_space<smem>>
    %997 = vector.broadcast %996 : f32 to vector<2x324xf32>
    %998 = arith.addf %995, %997 : vector<2x324xf32>
    %cst_63 = arith.constant 0.000000e+00 : f32
    %999 = vector.broadcast %cst_63 : f32 to vector<2x324xf32>
    %1000 = arith.cmpf oge, %998, %999 : vector<2x324xf32>
    %cst_64 = arith.constant 1.000000e-01 : f32
    %1001 = vector.broadcast %cst_64 : f32 to vector<2x324xf32>
    %1002 = arith.mulf %1001, %998 : vector<2x324xf32>
    %1003 = arith.select %1000, %998, %1002 : vector<2x324xi1>, vector<2x324xf32>
    %1004 = vector.extract_strided_slice %524 {offsets = [2, 0, 30], sizes = [1, 2, 324], strides = [1, 1, 1]} : vector<3x2x384xf32> to vector<1x2x324xf32>
    %1005 = vector.shape_cast %1004 : vector<1x2x324xf32> to vector<2x324xf32>
    %1006 = arith.addf %1005, %1003 : vector<2x324xf32>
    %1007 = vector.broadcast %0 : vector<1x324xf32> to vector<2x324xf32>
    %1008 = arith.mulf %1006, %1007 : vector<2x324xf32>
    %1009 = vector.shape_cast %1008 : vector<2x324xf32> to vector<1x2x324xf32>
    %cst_65 = arith.constant dense<0.000000e+00> : vector<1xf32>
    %1010 = vector.multi_reduction <add>, %1009, %cst_65 [1, 2] : vector<1x2x324xf32> to vector<1xf32>
    %1011 = vector.shape_cast %1010 : vector<1xf32> to vector<1x1x1xf32>
    %1012 = vector.extract %1011[0, 0, 0] : f32 from vector<1x1x1xf32>
    %1013 = vector.broadcast %1012 : f32 to vector<1x1xf32>
    %cst_66 = arith.constant 0.001953125 : f32
    %1014 = vector.broadcast %cst_66 : f32 to vector<1x1xf32>
    %1015 = arith.mulf %1013, %1014 : vector<1x1xf32>
    %1016 = vector.broadcast %1015 : vector<1x1xf32> to vector<2x324xf32>
    %1017 = arith.subf %1008, %1016 : vector<2x324xf32>
    %1018 = vector.broadcast %0 : vector<1x324xf32> to vector<2x324xf32>
    %1019 = arith.mulf %1017, %1018 : vector<2x324xf32>
    %1020 = arith.mulf %1019, %1019 : vector<2x324xf32>
    %1021 = vector.shape_cast %1020 : vector<2x324xf32> to vector<1x2x324xf32>
    %cst_67 = arith.constant dense<0.000000e+00> : vector<1xf32>
    %1022 = vector.multi_reduction <add>, %1021, %cst_67 [1, 2] : vector<1x2x324xf32> to vector<1xf32>
    %1023 = vector.shape_cast %1022 : vector<1xf32> to vector<1x1x1xf32>
    %1024 = vector.extract %1023[0, 0, 0] : f32 from vector<1x1x1xf32>
    %1025 = vector.broadcast %1024 : f32 to vector<1x1xf32>
    %cst_68 = arith.constant 0.001953125 : f32
    %1026 = vector.broadcast %cst_68 : f32 to vector<1x1xf32>
    %1027 = arith.mulf %1025, %1026 : vector<1x1xf32>
    %c5_69 = arith.constant 5 : index
    %1028 = memref.load %arg4[%c5_69] : memref<6xf32, #tpu.memory_space<smem>>
    %cst_70 = arith.constant 9.99999974E-6 : f32
    %1029 = vector.broadcast %cst_70 : f32 to vector<1x1xf32>
    %1030 = arith.addf %1027, %1029 : vector<1x1xf32>
    %1031 = math.rsqrt %1030 : vector<1x1xf32>
    %1032 = vector.broadcast %1028 : f32 to vector<1x1xf32>
    %1033 = arith.mulf %1032, %1031 : vector<1x1xf32>
    %1034 = vector.broadcast %1033 : vector<1x1xf32> to vector<2x324xf32>
    %1035 = arith.mulf %1019, %1034 : vector<2x324xf32>
    %c5_71 = arith.constant 5 : index
    %1036 = memref.load %arg5[%c5_71] : memref<6xf32, #tpu.memory_space<smem>>
    %1037 = vector.broadcast %1036 : f32 to vector<2x324xf32>
    %1038 = arith.addf %1035, %1037 : vector<2x324xf32>
    %1039 = vector.broadcast %0 : vector<1x324xf32> to vector<2x324xf32>
    %1040 = arith.mulf %1038, %1039 : vector<2x324xf32>
    %1041 = vector.shape_cast %732 : vector<2x324xf32> to vector<1x2x324xf32>
    %1042 = vector.shape_cast %886 : vector<2x324xf32> to vector<1x2x324xf32>
    %1043 = vector.shape_cast %1040 : vector<2x324xf32> to vector<1x2x324xf32>
    %1044 = tpu.concatenate %1041, %1042, %1043 in 0 : vector<1x2x324xf32>, vector<1x2x324xf32>, vector<1x2x324xf32> -> vector<3x2x324xf32>
    %1045 = tpu.concatenate %2, %1044, %3 in 2 : vector<3x2x30xf32>, vector<3x2x324xf32>, vector<3x2x30xf32> -> vector<3x2x384xf32>
    %c0_72 = arith.constant 0 : index
    %c0_73 = arith.constant 0 : index
    %c0_74 = arith.constant 0 : index
    %1046 = vector.load %arg6[%c0_72, %c0_73, %c0_74] : memref<3x2x384xf32, #tpu.memory_space<vmem>>, vector<3x2x384xf32>
    tpu.vector_store %arg6[%c0_72, %c0_73, %c0_74], %1045 {strides = array<i32>} : memref<3x2x384xf32, #tpu.memory_space<vmem>>, vector<3x2x384xf32>,
    return
  }
}

</mosaic_0001>

<llo_original>
// kernel: decoder_layer.1
$region0: #{decoder_layer.1}
  #allocation0 [shape = 'u32[]', space=smem, size = 0x4, offset = 0x4, fixed_abs, tag = 'smem constant byte address 0x4 - core index']
  #allocation1 [shape = 'u32[144,128]{1,0:T(1,128)}', space=vmem, size = 0x12000, scoped, tag = 'internal scratch']
  %s0 = inlined_call_operand.vmem [shape: f32[3,2,384], index: 0, kind: input, shape index: {}]
  %s1 = inlined_call_operand.vmem [shape: f32[1,324], index: 1, kind: input, shape index: {}]
  %s2 = inlined_call_operand.vmem [shape: f32[162], index: 2, kind: input, shape index: {}]
  %s3 = inlined_call_operand.vmem [shape: f32[6], index: 3, kind: input, shape index: {}]
  %s4 = inlined_call_operand.vmem [shape: f32[6], index: 4, kind: input, shape index: {}]
  %s5 = inlined_call_operand.vmem [shape: f32[6], index: 5, kind: input, shape index: {}]
  %s6 = inlined_call_operand.vmem [shape: f32[3,2,384], index: 6, kind: output, shape index: {}]
  %s7 = sld [smem:[#allocation0]]
  $region50: #{decoder_layer.1} parent=0
    _
  %s9 = ssub.s32 1, %s7
  %s10 = scalar_select 0, %s9, %s7
  $region1: #{decoder_layer.1} parent=0
    #allocation2 [shape = 'u8[1024]{0}', space=smem, size = 0x400, scoped, tag = 'input window, operand 2, single buffered']
    #allocation3 [shape = 's32[1]{0}', space=sflag, size = 0x4, scoped, tag = 'scoped memory for decoder_layer.1']
    #allocation4 [shape = 'u8[512]{0}', space=smem, size = 0x200, scoped, tag = 'input window, operand 3, single buffered']
    #allocation5 [shape = 's32[1]{0}', space=sflag, size = 0x4, scoped, tag = 'scoped memory for decoder_layer.1']
    #allocation6 [shape = 'u8[512]{0}', space=smem, size = 0x200, scoped, tag = 'input window, operand 4, single buffered']
    #allocation7 [shape = 'u8[512]{0}', space=smem, size = 0x200, scoped, tag = 'input window, operand 5, single buffered']
    #allocation8 [shape = 's32[1]{0}', space=sflag, size = 0x4, scoped, tag = 'scoped memory for decoder_layer.1']
    %11 = vsyncpa [#allocation3], 0
    %12 = vsyncpa [#allocation5], 0
    %13 = vsyncpa [#allocation8], 0
    // Predicated region
    $region2: #{decoder_layer.1} parent=1 // pred_check
      _
    $region3: #{decoder_layer.1} parent=1 // pred_check_branch
      %15 = sbr.rel (0) target = $region5
    $region4: #{decoder_layer.1} parent=1 // pred_region
      _
    $region5: #{decoder_layer.1} parent=1 // pred_fallthru
      _
    // Predicated region
    $region6: #{decoder_layer.1} parent=1 // pred_check
      _
    $region7: #{decoder_layer.1} parent=1 // pred_check_branch
      %17 = sbr.rel (0) target = $region9
    $region8: #{decoder_layer.1} parent=1 // pred_region
      _
    $region9: #{decoder_layer.1} parent=1 // pred_fallthru
      _
    // Predicated region
    $region10: #{decoder_layer.1} parent=1 // pred_check
      _
    $region11: #{decoder_layer.1} parent=1 // pred_check_branch
      %19 = sbr.rel (0) target = $region13
    $region12: #{decoder_layer.1} parent=1 // pred_region
      %s21 = ssub.s32 32, 32
      %22 = vsyncadd [#allocation3], %s21
      %s24 = sshll.u32 %s2, 4
      %s25 = int_to_ptr.vmem [resolvable:$true] %s24
      %27 = dma.vmem_to_smem %s25, 32, [#allocation2], [#allocation3]
    $region13: #{decoder_layer.1} parent=1 // pred_fallthru
      _
    // Predicated region
    $region14: #{decoder_layer.1} parent=1 // pred_check
      _
    $region15: #{decoder_layer.1} parent=1 // pred_check_branch
      %29 = sbr.rel (0) target = $region17
    $region16: #{decoder_layer.1} parent=1 // pred_region
      %s31 = ssub.s32 16, 16
      %32 = vsyncadd [#allocation5], %s31
      %s34 = sshll.u32 %s3, 4
      %s35 = int_to_ptr.vmem [resolvable:$true] %s34
      %37 = dma.vmem_to_smem %s35, 16, [#allocation4], [#allocation5]
    $region17: #{decoder_layer.1} parent=1 // pred_fallthru
      _
    // Predicated region
    $region18: #{decoder_layer.1} parent=1 // pred_check
      _
    $region19: #{decoder_layer.1} parent=1 // pred_check_branch
      %39 = sbr.rel (0) target = $region21
    $region20: #{decoder_layer.1} parent=1 // pred_region
      %s41 = ssub.s32 16, 16
      %42 = vsyncadd [#allocation5], %s41
      %s44 = sshll.u32 %s4, 4
      %s45 = int_to_ptr.vmem [resolvable:$true] %s44
      %47 = dma.vmem_to_smem %s45, 16, [#allocation6], [#allocation5]
    $region21: #{decoder_layer.1} parent=1 // pred_fallthru
      _
    // Predicated region
    $region22: #{decoder_layer.1} parent=1 // pred_check
      _
    $region23: #{decoder_layer.1} parent=1 // pred_check_branch
      %49 = sbr.rel (0) target = $region25
    $region24: #{decoder_layer.1} parent=1 // pred_region
      %s51 = ssub.s32 16, 16
      %52 = vsyncadd [#allocation8], %s51
      %s54 = sshll.u32 %s5, 4
      %s55 = int_to_ptr.vmem [resolvable:$true] %s54
      %57 = dma.vmem_to_smem %s55, 16, [#allocation7], [#allocation8]
    $region25: #{decoder_layer.1} parent=1 // pred_fallthru
      _
    // Predicated region
    $region26: #{decoder_layer.1} parent=1 // pred_check
      _
    $region27: #{decoder_layer.1} parent=1 // pred_check_branch
      %59 = sbr.rel (0) target = $region29
    $region28: #{decoder_layer.1} parent=1 // pred_region
      %60 = dma.done [#allocation3], 32
    $region29: #{decoder_layer.1} parent=1 // pred_fallthru
      _
    // Predicated region
    $region30: #{decoder_layer.1} parent=1 // pred_check
      _
    $region31: #{decoder_layer.1} parent=1 // pred_check_branch
      %62 = sbr.rel (0) target = $region33
    $region32: #{decoder_layer.1} parent=1 // pred_region
      %63 = dma.done [#allocation5], 16
    $region33: #{decoder_layer.1} parent=1 // pred_fallthru
      _
    // Predicated region
    $region34: #{decoder_layer.1} parent=1 // pred_check
      _
    $region35: #{decoder_layer.1} parent=1 // pred_check_branch
      %65 = sbr.rel (0) target = $region37
    $region36: #{decoder_layer.1} parent=1 // pred_region
      %66 = dma.done [#allocation5], 16
    $region37: #{decoder_layer.1} parent=1 // pred_fallthru
      _
    // Predicated region
    $region38: #{decoder_layer.1} parent=1 // pred_check
      _
    $region39: #{decoder_layer.1} parent=1 // pred_check_branch
      %68 = sbr.rel (0) target = $region41
    $region40: #{decoder_layer.1} parent=1 // pred_region
      %69 = dma.done [#allocation8], 16
    $region41: #{decoder_layer.1} parent=1 // pred_fallthru
      _
    %70 = sfence
    %v71 = vld [vmem:[%s1] sm:$0x7]
    %v72 = vld [vmem:[%s0] sm:$0x3f]
    %v73 = vld [vmem:[%s0 + $0x6] sm:$0x3f]
    %v74 = vld [vmem:[%s0 + $0xc] sm:$0x3f]
    %s75 = sld [smem:[#allocation2]]
    %v76 = vstv %s75
    %v77 = vmul.f32 %v76, %v72
    %v78 = vadd.f32 %v77, 0.0
    %s79 = sld [smem:[#allocation2 + $0x1]]
    %v80 = vstv %s79
    %v81 = vmul.f32 %v80, %v72
    %83 = vrot.lane.b32.xlu0 %v81, 127
    %v84 = vpop.permute.xlu0 %83
    %v85 = vrot.slane %v84, 2
    %vm86 = vcmask 1039360
    %v87 = vsel %vm86, %v84, %v85
    %v89 = vadd.f32 %v78, %v87
    %s90 = sld [smem:[#allocation2 + $0x2]]
    %v91 = vstv %s90
    %v92 = vmul.f32 %v91, %v72
    %94 = vrot.lane.b32.xlu0 %v92, 126
    %v95 = vpop.permute.xlu0 %94
    %v96 = vrot.slane %v95, 2
    %vm97 = vcmask 1031168
    %v98 = vsel %vm97, %v95, %v96
    %v100 = vadd.f32 %v89, %v98
    %s101 = sld [smem:[#allocation2 + $0x3]]
    %v102 = vstv %s101
    %v103 = vmul.f32 %v102, %v72
    %105 = vrot.lane.b32.xlu0 %v103, 110
    %v106 = vpop.permute.xlu0 %105
    %v107 = vrot.slane %v106, 2
    %vm108 = vcmask 900096
    %v109 = vsel %vm108, %v106, %v107
    %v111 = vadd.f32 %v100, %v109
    %s112 = sld [smem:[#allocation2 + $0x4]]
    %v113 = vstv %s112
    %v114 = vmul.f32 %v113, %v72
    %116 = vrot.lane.b32.xlu0 %v114, 109
    %v117 = vpop.permute.xlu0 %116
    %v118 = vrot.slane %v117, 2
    %vm119 = vcmask 891904
    %v120 = vsel %vm119, %v117, %v118
    %v122 = vadd.f32 %v111, %v120
    %s123 = sld [smem:[#allocation2 + $0x5]]
    %v124 = vstv %s123
    %v125 = vmul.f32 %v124, %v72
    %127 = vrot.lane.b32.xlu0 %v125, 108
    %v128 = vpop.permute.xlu0 %127
    %v129 = vrot.slane %v128, 2
    %vm130 = vcmask 883712
    %v131 = vsel %vm130, %v128, %v129
    %v133 = vadd.f32 %v122, %v131
    %s134 = sld [smem:[#allocation2 + $0x6]]
    %v135 = vstv %s134
    %v136 = vmul.f32 %v135, %v72
    %138 = vrot.lane.b32.xlu0 %v136, 92
    %v139 = vpop.permute.xlu0 %138
    %v140 = vrot.slane %v139, 2
    %vm141 = vcmask 752640
    %v142 = vsel %vm141, %v139, %v140
    %v144 = vadd.f32 %v133, %v142
    %s145 = sld [smem:[#allocation2 + $0x7]]
    %v146 = vstv %s145
    %v147 = vmul.f32 %v146, %v72
    %149 = vrot.lane.b32.xlu0 %v147, 91
    %v150 = vpop.permute.xlu0 %149
    %v151 = vrot.slane %v150, 2
    %vm152 = vcmask 744448
    %v153 = vsel %vm152, %v150, %v151
    %v155 = vadd.f32 %v144, %v153
    %s156 = sld [smem:[#allocation2 + $0x8]]
    %v157 = vstv %s156
    %v158 = vmul.f32 %v157, %v72
    %160 = vrot.lane.b32.xlu0 %v158, 90
    %v161 = vpop.permute.xlu0 %160
    %v162 = vrot.slane %v161, 2
    %vm163 = vcmask 736256
    %v164 = vsel %vm163, %v161, %v162
    %v166 = vadd.f32 %v155, %v164
    %s167 = sld [smem:[#allocation2 + $0x9]]
    %v168 = vstv %s167
    %v169 = vmul.f32 %v168, %v73
    %v170 = vadd.f32 %v166, %v169
    %s171 = sld [smem:[#allocation2 + $0xa]]
    %v172 = vstv %s171
    %v173 = vmul.f32 %v172, %v73
    %175 = vrot.lane.b32.xlu0 %v173, 127
    %v176 = vpop.permute.xlu0 %175
    %v177 = vrot.slane %v176, 2
    %v178 = vsel %vm86, %v176, %v177
    %v180 = vadd.f32 %v170, %v178
    %s181 = sld [smem:[#allocation2 + $0xb]]
    %v182 = vstv %s181
    %v183 = vmul.f32 %v182, %v73
    %185 = vrot.lane.b32.xlu0 %v183, 126
    %v186 = vpop.permute.xlu0 %185
    %v187 = vrot.slane %v186, 2
    %v188 = vsel %vm97, %v186, %v187
    %v190 = vadd.f32 %v180, %v188
    %s191 = sld [smem:[#allocation2 + $0xc]]
    %v192 = vstv %s191
    %v193 = vmul.f32 %v192, %v73
    %195 = vrot.lane.b32.xlu0 %v193, 110
    %v196 = vpop.permute.xlu0 %195
    %v197 = vrot.slane %v196, 2
    %v198 = vsel %vm108, %v196, %v197
    %v200 = vadd.f32 %v190, %v198
    %s201 = sld [smem:[#allocation2 + $0xd]]
    %v202 = vstv %s201
    %v203 = vmul.f32 %v202, %v73
    %205 = vrot.lane.b32.xlu0 %v203, 109
    %v206 = vpop.permute.xlu0 %205
    %v207 = vrot.slane %v206, 2
    %v208 = vsel %vm119, %v206, %v207
    %v210 = vadd.f32 %v200, %v208
    %s211 = sld [smem:[#allocation2 + $0xe]]
    %v212 = vstv %s211
    %v213 = vmul.f32 %v212, %v73
    %215 = vrot.lane.b32.xlu0 %v213, 108
    %v216 = vpop.permute.xlu0 %215
    %v217 = vrot.slane %v216, 2
    %v218 = vsel %vm130, %v216, %v217
    %v220 = vadd.f32 %v210, %v218
    %s221 = sld [smem:[#allocation2 + $0xf]]
    %v222 = vstv %s221
    %v223 = vmul.f32 %v222, %v73
    %225 = vrot.lane.b32.xlu0 %v223, 92
    %v226 = vpop.permute.xlu0 %225
    %v227 = vrot.slane %v226, 2
    %v228 = vsel %vm141, %v226, %v227
    %v230 = vadd.f32 %v220, %v228
    %s231 = sld [smem:[#allocation2 + $0x10]]
    %v232 = vstv %s231
    %v233 = vmul.f32 %v232, %v73
    %235 = vrot.lane.b32.xlu0 %v233, 91
    %v236 = vpop.permute.xlu0 %235
    %v237 = vrot.slane %v236, 2
    %v238 = vsel %vm152, %v236, %v237
    %v240 = vadd.f32 %v230, %v238
    %s241 = sld [smem:[#allocation2 + $0x11]]
    %v242 = vstv %s241
    %v243 = vmul.f32 %v242, %v73
    %245 = vrot.lane.b32.xlu0 %v243, 90
    %v246 = vpop.permute.xlu0 %245
    %v247 = vrot.slane %v246, 2
    %v248 = vsel %vm163, %v246, %v247
    %v250 = vadd.f32 %v240, %v248
    %s251 = sld [smem:[#allocation2 + $0x12]]
    %v252 = vstv %s251
    %v253 = vmul.f32 %v252, %v74
    %v254 = vadd.f32 %v250, %v253
    %s255 = sld [smem:[#allocation2 + $0x13]]
    %v256 = vstv %s255
    %v257 = vmul.f32 %v256, %v74
    %259 = vrot.lane.b32.xlu0 %v257, 127
    %v260 = vpop.permute.xlu0 %259
    %v261 = vrot.slane %v260, 2
    %v262 = vsel %vm86, %v260, %v261
    %v264 = vadd.f32 %v254, %v262
    %s265 = sld [smem:[#allocation2 + $0x14]]
    %v266 = vstv %s265
    %v267 = vmul.f32 %v266, %v74
    %269 = vrot.lane.b32.xlu0 %v267, 126
    %v270 = vpop.permute.xlu0 %269
    %v271 = vrot.slane %v270, 2
    %v272 = vsel %vm97, %v270, %v271
    %v274 = vadd.f32 %v264, %v272
    %s275 = sld [smem:[#allocation2 + $0x15]]
    %v276 = vstv %s275
    %v277 = vmul.f32 %v276, %v74
    %279 = vrot.lane.b32.xlu0 %v277, 110
    %v280 = vpop.permute.xlu0 %279
    %v281 = vrot.slane %v280, 2
    %v282 = vsel %vm108, %v280, %v281
    %v284 = vadd.f32 %v274, %v282
    %s285 = sld [smem:[#allocation2 + $0x16]]
    %v286 = vstv %s285
    %v287 = vmul.f32 %v286, %v74
    %289 = vrot.lane.b32.xlu0 %v287, 109
    %v290 = vpop.permute.xlu0 %289
    %v291 = vrot.slane %v290, 2
    %v292 = vsel %vm119, %v290, %v291
    %v294 = vadd.f32 %v284, %v292
    %s295 = sld [smem:[#allocation2 + $0x17]]
    %v296 = vstv %s295
    %v297 = vmul.f32 %v296, %v74
    %299 = vrot.lane.b32.xlu0 %v297, 108
    %v300 = vpop.permute.xlu0 %299
    %v301 = vrot.slane %v300, 2
    %v302 = vsel %vm130, %v300, %v301
    %v304 = vadd.f32 %v294, %v302
    %s305 = sld [smem:[#allocation2 + $0x18]]
    %v306 = vstv %s305
    %v307 = vmul.f32 %v306, %v74
    %309 = vrot.lane.b32.xlu0 %v307, 92
    %v310 = vpop.permute.xlu0 %309
    %v311 = vrot.slane %v310, 2
    %v312 = vsel %vm141, %v310, %v311
    %v314 = vadd.f32 %v304, %v312
    %s315 = sld [smem:[#allocation2 + $0x19]]
    %v316 = vstv %s315
    %v317 = vmul.f32 %v316, %v74
    %319 = vrot.lane.b32.xlu0 %v317, 91
    %v320 = vpop.permute.xlu0 %319
    %v321 = vrot.slane %v320, 2
    %v322 = vsel %vm152, %v320, %v321
    %v324 = vadd.f32 %v314, %v322
    %s325 = sld [smem:[#allocation2 + $0x1a]]
    %v326 = vstv %s325
    %v327 = vmul.f32 %v326, %v74
    %329 = vrot.lane.b32.xlu0 %v327, 90
    %v330 = vpop.permute.xlu0 %329
    %v331 = vrot.slane %v330, 2
    %v332 = vsel %vm163, %v330, %v331
    %v334 = vadd.f32 %v324, %v332
    %s335 = sld [smem:[#allocation4]]
    %v336 = vstv %s335
    %v337 = vadd.f32 %v334, %v336
    %vm338 = vcmp.ge.f32.partialorder %v337, 0.0
    %v339 = vmul.f32 %v337, 0.1
    %v340 = vsel %vm338, %v337, %v339
    %342 = vrot.lane.b32.xlu0 %v340, 19
    %v343 = vpop.permute.xlu0 %342
    %v344 = vrot.slane %v343, 6
    %vm345 = vcmask 154624
    %v346 = vsel %vm345, %v344, %v343
    %v348 = vadd.f32 %v72, %v346
    %v350 = vlaneseq
    %v351 = vshrl.u32 %v350, 7
    %v352 = vsub.s32 0, %v351
    %v353 = vrot.slane %v71, %v352
    %v354 = vlaneseq
    %v355 = vshrl.u32 %v354, 7
    %v356 = vsub.s32 1, %v355
    %v357 = vrot.slane %v71, %v356
    %v358 = vlaneseq
    %v359 = vshrl.u32 %v358, 7
    %v360 = vsub.s32 2, %v359
    %v361 = vrot.slane %v71, %v360
    %v362 = vcombine.low %v353, %v357
    %v364 = vunpack.c.l.s4 1983009808
    %v365 = vunpack.c.0.s8 %v364
    %v366 = vlaneseq
    %v367 = vshrl.u32 %v366, 7
    %v368 = vsub.s32 %v365, %v367
    %v369 = vrot.slane %v362, %v368
    %v371 = vunpack.c.l.s4 1983009808
    %v372 = vunpack.c.0.s8 %v371
    %v373 = vlaneseq
    %v374 = vshrl.u32 %v373, 7
    %v375 = vsub.s32 %v372, %v374
    %v376 = vrot.slane %v361, %v375
    %v377 = vcombine.low %v369, %v376
    %378 = vrot.lane.b32.xlu0 %v377, 30
    %v379 = vpop.permute.xlu0 %378
    %v380 = vrot.slane %v379, 6
    %vm381 = vcmask 244736
    %v382 = vsel %vm381, %v380, %v379
    %v384 = vmul.f32 %v348, %v382
    %v386 = vcombine.high %v384, %v384
    %v388 = vunpack.c.l.s4 1983009808
    %v389 = vunpack.c.0.s8 %v388
    %v390 = vlaneseq
    %v391 = vshrl.u32 %v390, 7
    %v392 = vsub.s32 %v389, %v391
    %v393 = vrot.slane %v384, %v392
    %v395 = vunpack.c.l.s4 1983009808
    %v396 = vunpack.c.0.s8 %v395
    %v397 = vlaneseq
    %v398 = vshrl.u32 %v397, 7
    %v399 = vsub.s32 %v396, %v398
    %v400 = vrot.slane %v386, %v399
    %v401 = vcombine.high %v393, %v393
    %402 = vrot.lane.b32.xlu0 %v393, 98
    %v403 = vpop.permute.xlu0 %402
    %404 = vrot.lane.b32.xlu0 %v401, 98
    %v405 = vpop.permute.xlu0 %404
    %406 = vrot.lane.b32.xlu0 %v400, 98
    %v407 = vpop.permute.xlu0 %406
    %vm408 = vcmask 801792
    %v409 = vsel %vm408, %v403, %v405
    %v410 = vsel %vm408, %v405, %v407
    %vm414 = vcmask 1041408
    %v415 = vsel %vm414, %v409, 0.0
    %v416 = vsel %vm414, %v410, 0.0
    %v417 = vadd.f32 %v415, %v416
    %vm418 = vcmask 549888
    %v419 = vsel %vm418, %v407, 0.0
    %v420 = vadd.f32 %v417, %v419
    %421 = vadd.xlane.f32.xlu0 %v420
    %v422 = vpop.xlane.xlu0 %421
    %v423 = vrot.slane %v422, 4
    %v424 = vadd.f32 %v422, %v423
    %v425 = vrot.slane %v424, 2
    %v426 = vadd.f32 %v424, %v425
    %v427 = vrot.slane %v426, 1
    %v428 = vadd.f32 %v426, %v427
    %s429 = vtos %v428
    %v430 = vstv %s429
    %v431 = vmul.f32 %v430, 0.001953125
    %v432 = vsub.f32 %v384, %v431
    %v433 = vmul.f32 %v432, %v382
    %v434 = vmul.f32 %v433, %v433
    %v436 = vcombine.high %v434, %v434
    %v438 = vunpack.c.l.s4 1983009808
    %v439 = vunpack.c.0.s8 %v438
    %v440 = vlaneseq
    %v441 = vshrl.u32 %v440, 7
    %v442 = vsub.s32 %v439, %v441
    %v443 = vrot.slane %v434, %v442
    %v445 = vunpack.c.l.s4 1983009808
    %v446 = vunpack.c.0.s8 %v445
    %v447 = vlaneseq
    %v448 = vshrl.u32 %v447, 7
    %v449 = vsub.s32 %v446, %v448
    %v450 = vrot.slane %v436, %v449
    %v451 = vcombine.high %v443, %v443
    %452 = vrot.lane.b32.xlu0 %v443, 98
    %v453 = vpop.permute.xlu0 %452
    %454 = vrot.lane.b32.xlu0 %v451, 98
    %v455 = vpop.permute.xlu0 %454
    %456 = vrot.lane.b32.xlu0 %v450, 98
    %v457 = vpop.permute.xlu0 %456
    %v458 = vsel %vm408, %v453, %v455
    %v459 = vsel %vm408, %v455, %v457
    %v463 = vsel %vm414, %v458, 0.0
    %v464 = vsel %vm414, %v459, 0.0
    %v465 = vadd.f32 %v463, %v464
    %v466 = vsel %vm418, %v457, 0.0
    %v467 = vadd.f32 %v465, %v466
    %468 = vadd.xlane.f32.xlu0 %v467
    %v469 = vpop.xlane.xlu0 %468
    %v470 = vrot.slane %v469, 4
    %v471 = vadd.f32 %v469, %v470
    %v472 = vrot.slane %v471, 2
    %v473 = vadd.f32 %v471, %v472
    %v474 = vrot.slane %v473, 1
    %v475 = vadd.f32 %v473, %v474
    %s476 = vtos %v475
    %v477 = vstv %s476
    %v478 = vmul.f32 %v477, 0.001953125
    %s479 = sld [smem:[#allocation6]]
    %v480 = vadd.f32 %v478, 1e-05
    %v481 = vrsqrt.pop %v480
    %v482 = vstv %s479
    %v483 = vmul.f32 %v482, %v481
    %v484 = vmul.f32 %v433, %v483
    %s485 = sld [smem:[#allocation7]]
    %v486 = vstv %s485
    %v487 = vadd.f32 %v484, %v486
    %v488 = vmul.f32 %v487, %v382
    %s489 = sld [smem:[#allocation2 + $0x1b]]
    %v490 = vstv %s489
    %v491 = vmul.f32 %v490, %v72
    %v492 = vadd.f32 %v491, 0.0
    %s493 = sld [smem:[#allocation2 + $0x1c]]
    %v494 = vstv %s493
    %v495 = vmul.f32 %v494, %v72
    %497 = vrot.lane.b32.xlu0 %v495, 127
    %v498 = vpop.permute.xlu0 %497
    %v499 = vrot.slane %v498, 2
    %v500 = vsel %vm86, %v498, %v499
    %v502 = vadd.f32 %v492, %v500
    %s503 = sld [smem:[#allocation2 + $0x1d]]
    %v504 = vstv %s503
    %v505 = vmul.f32 %v504, %v72
    %507 = vrot.lane.b32.xlu0 %v505, 126
    %v508 = vpop.permute.xlu0 %507
    %v509 = vrot.slane %v508, 2
    %v510 = vsel %vm97, %v508, %v509
    %v512 = vadd.f32 %v502, %v510
    %s513 = sld [smem:[#allocation2 + $0x1e]]
    %v514 = vstv %s513
    %v515 = vmul.f32 %v514, %v72
    %517 = vrot.lane.b32.xlu0 %v515, 110
    %v518 = vpop.permute.xlu0 %517
    %v519 = vrot.slane %v518, 2
    %v520 = vsel %vm108, %v518, %v519
    %v522 = vadd.f32 %v512, %v520
    %s523 = sld [smem:[#allocation2 + $0x1f]]
    %v524 = vstv %s523
    %v525 = vmul.f32 %v524, %v72
    %527 = vrot.lane.b32.xlu0 %v525, 109
    %v528 = vpop.permute.xlu0 %527
    %v529 = vrot.slane %v528, 2
    %v530 = vsel %vm119, %v528, %v529
    %v532 = vadd.f32 %v522, %v530
    %s533 = sld [smem:[#allocation2 + $0x20]]
    %v534 = vstv %s533
    %v535 = vmul.f32 %v534, %v72
    %537 = vrot.lane.b32.xlu0 %v535, 108
    %v538 = vpop.permute.xlu0 %537
    %v539 = vrot.slane %v538, 2
    %v540 = vsel %vm130, %v538, %v539
    %v542 = vadd.f32 %v532, %v540
    %s543 = sld [smem:[#allocation2 + $0x21]]
    %v544 = vstv %s543
    %v545 = vmul.f32 %v544, %v72
    %547 = vrot.lane.b32.xlu0 %v545, 92
    %v548 = vpop.permute.xlu0 %547
    %v549 = vrot.slane %v548, 2
    %v550 = vsel %vm141, %v548, %v549
    %v552 = vadd.f32 %v542, %v550
    %s553 = sld [smem:[#allocation2 + $0x22]]
    %v554 = vstv %s553
    %v555 = vmul.f32 %v554, %v72
    %557 = vrot.lane.b32.xlu0 %v555, 91
    %v558 = vpop.permute.xlu0 %557
    %v559 = vrot.slane %v558, 2
    %v560 = vsel %vm152, %v558, %v559
    %v562 = vadd.f32 %v552, %v560
    %s563 = sld [smem:[#allocation2 + $0x23]]
    %v564 = vstv %s563
    %v565 = vmul.f32 %v564, %v72
    %567 = vrot.lane.b32.xlu0 %v565, 90
    %v568 = vpop.permute.xlu0 %567
    %v569 = vrot.slane %v568, 2
    %v570 = vsel %vm163, %v568, %v569
    %v572 = vadd.f32 %v562, %v570
    %s573 = sld [smem:[#allocation2 + $0x24]]
    %v574 = vstv %s573
    %v575 = vmul.f32 %v574, %v73
    %v576 = vadd.f32 %v572, %v575
    %s577 = sld [smem:[#allocation2 + $0x25]]
    %v578 = vstv %s577
    %v579 = vmul.f32 %v578, %v73
    %581 = vrot.lane.b32.xlu0 %v579, 127
    %v582 = vpop.permute.xlu0 %581
    %v583 = vrot.slane %v582, 2
    %v584 = vsel %vm86, %v582, %v583
    %v586 = vadd.f32 %v576, %v584
    %s587 = sld [smem:[#allocation2 + $0x26]]
    %v588 = vstv %s587
    %v589 = vmul.f32 %v588, %v73
    %591 = vrot.lane.b32.xlu0 %v589, 126
    %v592 = vpop.permute.xlu0 %591
    %v593 = vrot.slane %v592, 2
    %v594 = vsel %vm97, %v592, %v593
    %v596 = vadd.f32 %v586, %v594
    %s597 = sld [smem:[#allocation2 + $0x27]]
    %v598 = vstv %s597
    %v599 = vmul.f32 %v598, %v73
    %601 = vrot.lane.b32.xlu0 %v599, 110
    %v602 = vpop.permute.xlu0 %601
    %v603 = vrot.slane %v602, 2
    %v604 = vsel %vm108, %v602, %v603
    %v606 = vadd.f32 %v596, %v604
    %s607 = sld [smem:[#allocation2 + $0x28]]
    %v608 = vstv %s607
    %v609 = vmul.f32 %v608, %v73
    %611 = vrot.lane.b32.xlu0 %v609, 109
    %v612 = vpop.permute.xlu0 %611
    %v613 = vrot.slane %v612, 2
    %v614 = vsel %vm119, %v612, %v613
    %v616 = vadd.f32 %v606, %v614
    %s617 = sld [smem:[#allocation2 + $0x29]]
    %v618 = vstv %s617
    %v619 = vmul.f32 %v618, %v73
    %621 = vrot.lane.b32.xlu0 %v619, 108
    %v622 = vpop.permute.xlu0 %621
    %v623 = vrot.slane %v622, 2
    %v624 = vsel %vm130, %v622, %v623
    %v626 = vadd.f32 %v616, %v624
    %s627 = sld [smem:[#allocation2 + $0x2a]]
    %v628 = vstv %s627
    %v629 = vmul.f32 %v628, %v73
    %631 = vrot.lane.b32.xlu0 %v629, 92
    %v632 = vpop.permute.xlu0 %631
    %v633 = vrot.slane %v632, 2
    %v634 = vsel %vm141, %v632, %v633
    %v636 = vadd.f32 %v626, %v634
    %s637 = sld [smem:[#allocation2 + $0x2b]]
    %v638 = vstv %s637
    %v639 = vmul.f32 %v638, %v73
    %641 = vrot.lane.b32.xlu0 %v639, 91
    %v642 = vpop.permute.xlu0 %641
    %v643 = vrot.slane %v642, 2
    %v644 = vsel %vm152, %v642, %v643
    %v646 = vadd.f32 %v636, %v644
    %s647 = sld [smem:[#allocation2 + $0x2c]]
    %v648 = vstv %s647
    %v649 = vmul.f32 %v648, %v73
    %651 = vrot.lane.b32.xlu0 %v649, 90
    %v652 = vpop.permute.xlu0 %651
    %v653 = vrot.slane %v652, 2
    %v654 = vsel %vm163, %v652, %v653
    %v656 = vadd.f32 %v646, %v654
    %s657 = sld [smem:[#allocation2 + $0x2d]]
    %v658 = vstv %s657
    %v659 = vmul.f32 %v658, %v74
    %v660 = vadd.f32 %v656, %v659
    %s661 = sld [smem:[#allocation2 + $0x2e]]
    %v662 = vstv %s661
    %v663 = vmul.f32 %v662, %v74
    %665 = vrot.lane.b32.xlu0 %v663, 127
    %v666 = vpop.permute.xlu0 %665
    %v667 = vrot.slane %v666, 2
    %v668 = vsel %vm86, %v666, %v667
    %v670 = vadd.f32 %v660, %v668
    %s671 = sld [smem:[#allocation2 + $0x2f]]
    %v672 = vstv %s671
    %v673 = vmul.f32 %v672, %v74
    %675 = vrot.lane.b32.xlu0 %v673, 126
    %v676 = vpop.permute.xlu0 %675
    %v677 = vrot.slane %v676, 2
    %v678 = vsel %vm97, %v676, %v677
    %v680 = vadd.f32 %v670, %v678
    %s681 = sld [smem:[#allocation2 + $0x30]]
    %v682 = vstv %s681
    %v683 = vmul.f32 %v682, %v74
    %685 = vrot.lane.b32.xlu0 %v683, 110
    %v686 = vpop.permute.xlu0 %685
    %v687 = vrot.slane %v686, 2
    %v688 = vsel %vm108, %v686, %v687
    %v690 = vadd.f32 %v680, %v688
    %s691 = sld [smem:[#allocation2 + $0x31]]
    %v692 = vstv %s691
    %v693 = vmul.f32 %v692, %v74
    %695 = vrot.lane.b32.xlu0 %v693, 109
    %v696 = vpop.permute.xlu0 %695
    %v697 = vrot.slane %v696, 2
    %v698 = vsel %vm119, %v696, %v697
    %v700 = vadd.f32 %v690, %v698
    %s701 = sld [smem:[#allocation2 + $0x32]]
    %v702 = vstv %s701
    %v703 = vmul.f32 %v702, %v74
    %705 = vrot.lane.b32.xlu0 %v703, 108
    %v706 = vpop.permute.xlu0 %705
    %v707 = vrot.slane %v706, 2
    %v708 = vsel %vm130, %v706, %v707
    %v710 = vadd.f32 %v700, %v708
    %s711 = sld [smem:[#allocation2 + $0x33]]
    %v712 = vstv %s711
    %v713 = vmul.f32 %v712, %v74
    %715 = vrot.lane.b32.xlu0 %v713, 92
    %v716 = vpop.permute.xlu0 %715
    %v717 = vrot.slane %v716, 2
    %v718 = vsel %vm141, %v716, %v717
    %v720 = vadd.f32 %v710, %v718
    %s721 = sld [smem:[#allocation2 + $0x34]]
    %v722 = vstv %s721
    %v723 = vmul.f32 %v722, %v74
    %725 = vrot.lane.b32.xlu0 %v723, 91
    %v726 = vpop.permute.xlu0 %725
    %v727 = vrot.slane %v726, 2
    %v728 = vsel %vm152, %v726, %v727
    %v730 = vadd.f32 %v720, %v728
    %s731 = sld [smem:[#allocation2 + $0x35]]
    %v732 = vstv %s731
    %v733 = vmul.f32 %v732, %v74
    %735 = vrot.lane.b32.xlu0 %v733, 90
    %v736 = vpop.permute.xlu0 %735
    %v737 = vrot.slane %v736, 2
    %v738 = vsel %vm163, %v736, %v737
    %v740 = vadd.f32 %v730, %v738
    %s741 = sld [smem:[#allocation4 + $0x1]]
    %v742 = vstv %s741
    %v743 = vadd.f32 %v740, %v742
    %vm744 = vcmp.ge.f32.partialorder %v743, 0.0
    %v745 = vmul.f32 %v743, 0.1
    %v746 = vsel %vm744, %v743, %v745
    %748 = vrot.lane.b32.xlu0 %v746, 19
    %v749 = vpop.permute.xlu0 %748
    %v750 = vrot.slane %v749, 6
    %v751 = vsel %vm345, %v750, %v749
    %v753 = vadd.f32 %v73, %v751
    %v754 = vmul.f32 %v753, %v382
    %v756 = vcombine.high %v754, %v754
    %v758 = vunpack.c.l.s4 1983009808
    %v759 = vunpack.c.0.s8 %v758
    %v760 = vlaneseq
    %v761 = vshrl.u32 %v760, 7
    %v762 = vsub.s32 %v759, %v761
    %v763 = vrot.slane %v754, %v762
    %v765 = vunpack.c.l.s4 1983009808
    %v766 = vunpack.c.0.s8 %v765
    %v767 = vlaneseq
    %v768 = vshrl.u32 %v767, 7
    %v769 = vsub.s32 %v766, %v768
    %v770 = vrot.slane %v756, %v769
    %v771 = vcombine.high %v763, %v763
    %772 = vrot.lane.b32.xlu0 %v763, 98
    %v773 = vpop.permute.xlu0 %772
    %774 = vrot.lane.b32.xlu0 %v771, 98
    %v775 = vpop.permute.xlu0 %774
    %776 = vrot.lane.b32.xlu0 %v770, 98
    %v777 = vpop.permute.xlu0 %776
    %v778 = vsel %vm408, %v773, %v775
    %v779 = vsel %vm408, %v775, %v777
    %v783 = vsel %vm414, %v778, 0.0
    %v784 = vsel %vm414, %v779, 0.0
    %v785 = vadd.f32 %v783, %v784
    %v786 = vsel %vm418, %v777, 0.0
    %v787 = vadd.f32 %v785, %v786
    %788 = vadd.xlane.f32.xlu0 %v787
    %v789 = vpop.xlane.xlu0 %788
    %v790 = vrot.slane %v789, 4
    %v791 = vadd.f32 %v789, %v790
    %v792 = vrot.slane %v791, 2
    %v793 = vadd.f32 %v791, %v792
    %v794 = vrot.slane %v793, 1
    %v795 = vadd.f32 %v793, %v794
    %s796 = vtos %v795
    %v797 = vstv %s796
    %v798 = vmul.f32 %v797, 0.001953125
    %v799 = vsub.f32 %v754, %v798
    %v800 = vmul.f32 %v799, %v382
    %v801 = vmul.f32 %v800, %v800
    %v803 = vcombine.high %v801, %v801
    %v805 = vunpack.c.l.s4 1983009808
    %v806 = vunpack.c.0.s8 %v805
    %v807 = vlaneseq
    %v808 = vshrl.u32 %v807, 7
    %v809 = vsub.s32 %v806, %v808
    %v810 = vrot.slane %v801, %v809
    %v812 = vunpack.c.l.s4 1983009808
    %v813 = vunpack.c.0.s8 %v812
    %v814 = vlaneseq
    %v815 = vshrl.u32 %v814, 7
    %v816 = vsub.s32 %v813, %v815
    %v817 = vrot.slane %v803, %v816
    %v818 = vcombine.high %v810, %v810
    %819 = vrot.lane.b32.xlu0 %v810, 98
    %v820 = vpop.permute.xlu0 %819
    %821 = vrot.lane.b32.xlu0 %v818, 98
    %v822 = vpop.permute.xlu0 %821
    %823 = vrot.lane.b32.xlu0 %v817, 98
    %v824 = vpop.permute.xlu0 %823
    %v825 = vsel %vm408, %v820, %v822
    %v826 = vsel %vm408, %v822, %v824
    %v830 = vsel %vm414, %v825, 0.0
    %v831 = vsel %vm414, %v826, 0.0
    %v832 = vadd.f32 %v830, %v831
    %v833 = vsel %vm418, %v824, 0.0
    %v834 = vadd.f32 %v832, %v833
    %835 = vadd.xlane.f32.xlu0 %v834
    %v836 = vpop.xlane.xlu0 %835
    %v837 = vrot.slane %v836, 4
    %v838 = vadd.f32 %v836, %v837
    %v839 = vrot.slane %v838, 2
    %v840 = vadd.f32 %v838, %v839
    %v841 = vrot.slane %v840, 1
    %v842 = vadd.f32 %v840, %v841
    %s843 = vtos %v842
    %v844 = vstv %s843
    %v845 = vmul.f32 %v844, 0.001953125
    %s846 = sld [smem:[#allocation6 + $0x1]]
    %v847 = vadd.f32 %v845, 1e-05
    %v848 = vrsqrt.pop %v847
    %v849 = vstv %s846
    %v850 = vmul.f32 %v849, %v848
    %v851 = vmul.f32 %v800, %v850
    %s852 = sld [smem:[#allocation7 + $0x1]]
    %v853 = vstv %s852
    %v854 = vadd.f32 %v851, %v853
    %v855 = vmul.f32 %v854, %v382
    %s856 = sld [smem:[#allocation2 + $0x36]]
    %v857 = vstv %s856
    %v858 = vmul.f32 %v857, %v72
    %v859 = vadd.f32 %v858, 0.0
    %s860 = sld [smem:[#allocation2 + $0x37]]
    %v861 = vstv %s860
    %v862 = vmul.f32 %v861, %v72
    %864 = vrot.lane.b32.xlu0 %v862, 127
    %v865 = vpop.permute.xlu0 %864
    %v866 = vrot.slane %v865, 2
    %v867 = vsel %vm86, %v865, %v866
    %v869 = vadd.f32 %v859, %v867
    %s870 = sld [smem:[#allocation2 + $0x38]]
    %v871 = vstv %s870
    %v872 = vmul.f32 %v871, %v72
    %874 = vrot.lane.b32.xlu0 %v872, 126
    %v875 = vpop.permute.xlu0 %874
    %v876 = vrot.slane %v875, 2
    %v877 = vsel %vm97, %v875, %v876
    %v879 = vadd.f32 %v869, %v877
    %s880 = sld [smem:[#allocation2 + $0x39]]
    %v881 = vstv %s880
    %v882 = vmul.f32 %v881, %v72
    %884 = vrot.lane.b32.xlu0 %v882, 110
    %v885 = vpop.permute.xlu0 %884
    %v886 = vrot.slane %v885, 2
    %v887 = vsel %vm108, %v885, %v886
    %v889 = vadd.f32 %v879, %v887
    %s890 = sld [smem:[#allocation2 + $0x3a]]
    %v891 = vstv %s890
    %v892 = vmul.f32 %v891, %v72
    %894 = vrot.lane.b32.xlu0 %v892, 109
    %v895 = vpop.permute.xlu0 %894
    %v896 = vrot.slane %v895, 2
    %v897 = vsel %vm119, %v895, %v896
    %v899 = vadd.f32 %v889, %v897
    %s900 = sld [smem:[#allocation2 + $0x3b]]
    %v901 = vstv %s900
    %v902 = vmul.f32 %v901, %v72
    %904 = vrot.lane.b32.xlu0 %v902, 108
    %v905 = vpop.permute.xlu0 %904
    %v906 = vrot.slane %v905, 2
    %v907 = vsel %vm130, %v905, %v906
    %v909 = vadd.f32 %v899, %v907
    %s910 = sld [smem:[#allocation2 + $0x3c]]
    %v911 = vstv %s910
    %v912 = vmul.f32 %v911, %v72
    %914 = vrot.lane.b32.xlu0 %v912, 92
    %v915 = vpop.permute.xlu0 %914
    %v916 = vrot.slane %v915, 2
    %v917 = vsel %vm141, %v915, %v916
    %v919 = vadd.f32 %v909, %v917
    %s920 = sld [smem:[#allocation2 + $0x3d]]
    %v921 = vstv %s920
    %v922 = vmul.f32 %v921, %v72
    %924 = vrot.lane.b32.xlu0 %v922, 91
    %v925 = vpop.permute.xlu0 %924
    %v926 = vrot.slane %v925, 2
    %v927 = vsel %vm152, %v925, %v926
    %v929 = vadd.f32 %v919, %v927
    %s930 = sld [smem:[#allocation2 + $0x3e]]
    %v931 = vstv %s930
    %v932 = vmul.f32 %v931, %v72
    %934 = vrot.lane.b32.xlu0 %v932, 90
    %v935 = vpop.permute.xlu0 %934
    %v936 = vrot.slane %v935, 2
    %v937 = vsel %vm163, %v935, %v936
    %v939 = vadd.f32 %v929, %v937
    %s940 = sld [smem:[#allocation2 + $0x3f]]
    %v941 = vstv %s940
    %v942 = vmul.f32 %v941, %v73
    %v943 = vadd.f32 %v939, %v942
    %s944 = sld [smem:[#allocation2 + $0x40]]
    %v945 = vstv %s944
    %v946 = vmul.f32 %v945, %v73
    %948 = vrot.lane.b32.xlu0 %v946, 127
    %v949 = vpop.permute.xlu0 %948
    %v950 = vrot.slane %v949, 2
    %v951 = vsel %vm86, %v949, %v950
    %v953 = vadd.f32 %v943, %v951
    %s954 = sld [smem:[#allocation2 + $0x41]]
    %v955 = vstv %s954
    %v956 = vmul.f32 %v955, %v73
    %958 = vrot.lane.b32.xlu0 %v956, 126
    %v959 = vpop.permute.xlu0 %958
    %v960 = vrot.slane %v959, 2
    %v961 = vsel %vm97, %v959, %v960
    %v963 = vadd.f32 %v953, %v961
    %s964 = sld [smem:[#allocation2 + $0x42]]
    %v965 = vstv %s964
    %v966 = vmul.f32 %v965, %v73
    %968 = vrot.lane.b32.xlu0 %v966, 110
    %v969 = vpop.permute.xlu0 %968
    %v970 = vrot.slane %v969, 2
    %v971 = vsel %vm108, %v969, %v970
    %v973 = vadd.f32 %v963, %v971
    %s974 = sld [smem:[#allocation2 + $0x43]]
    %v975 = vstv %s974
    %v976 = vmul.f32 %v975, %v73
    %978 = vrot.lane.b32.xlu0 %v976, 109
    %v979 = vpop.permute.xlu0 %978
    %v980 = vrot.slane %v979, 2
    %v981 = vsel %vm119, %v979, %v980
    %v983 = vadd.f32 %v973, %v981
    %s984 = sld [smem:[#allocation2 + $0x44]]
    %v985 = vstv %s984
    %v986 = vmul.f32 %v985, %v73
    %988 = vrot.lane.b32.xlu0 %v986, 108
    %v989 = vpop.permute.xlu0 %988
    %v990 = vrot.slane %v989, 2
    %v991 = vsel %vm130, %v989, %v990
    %v993 = vadd.f32 %v983, %v991
    %s994 = sld [smem:[#allocation2 + $0x45]]
    %v995 = vstv %s994
    %v996 = vmul.f32 %v995, %v73
    %998 = vrot.lane.b32.xlu0 %v996, 92
    %v999 = vpop.permute.xlu0 %998
    %v1000 = vrot.slane %v999, 2
    %v1001 = vsel %vm141, %v999, %v1000
    %v1003 = vadd.f32 %v993, %v1001
    %s1004 = sld [smem:[#allocation2 + $0x46]]
    %v1005 = vstv %s1004
    %v1006 = vmul.f32 %v1005, %v73
    %1008 = vrot.lane.b32.xlu0 %v1006, 91
    %v1009 = vpop.permute.xlu0 %1008
    %v1010 = vrot.slane %v1009, 2
    %v1011 = vsel %vm152, %v1009, %v1010
    %v1013 = vadd.f32 %v1003, %v1011
    %s1014 = sld [smem:[#allocation2 + $0x47]]
    %v1015 = vstv %s1014
    %v1016 = vmul.f32 %v1015, %v73
    %1018 = vrot.lane.b32.xlu0 %v1016, 90
    %v1019 = vpop.permute.xlu0 %1018
    %v1020 = vrot.slane %v1019, 2
    %v1021 = vsel %vm163, %v1019, %v1020
    %v1023 = vadd.f32 %v1013, %v1021
    %s1024 = sld [smem:[#allocation2 + $0x48]]
    %v1025 = vstv %s1024
    %v1026 = vmul.f32 %v1025, %v74
    %v1027 = vadd.f32 %v1023, %v1026
    %s1028 = sld [smem:[#allocation2 + $0x49]]
    %v1029 = vstv %s1028
    %v1030 = vmul.f32 %v1029, %v74
    %1032 = vrot.lane.b32.xlu0 %v1030, 127
    %v1033 = vpop.permute.xlu0 %1032
    %v1034 = vrot.slane %v1033, 2
    %v1035 = vsel %vm86, %v1033, %v1034
    %v1037 = vadd.f32 %v1027, %v1035
    %s1038 = sld [smem:[#allocation2 + $0x4a]]
    %v1039 = vstv %s1038
    %v1040 = vmul.f32 %v1039, %v74
    %1042 = vrot.lane.b32.xlu0 %v1040, 126
    %v1043 = vpop.permute.xlu0 %1042
    %v1044 = vrot.slane %v1043, 2
    %v1045 = vsel %vm97, %v1043, %v1044
    %v1047 = vadd.f32 %v1037, %v1045
    %s1048 = sld [smem:[#allocation2 + $0x4b]]
    %v1049 = vstv %s1048
    %v1050 = vmul.f32 %v1049, %v74
    %1052 = vrot.lane.b32.xlu0 %v1050, 110
    %v1053 = vpop.permute.xlu0 %1052
    %v1054 = vrot.slane %v1053, 2
    %v1055 = vsel %vm108, %v1053, %v1054
    %v1057 = vadd.f32 %v1047, %v1055
    %s1058 = sld [smem:[#allocation2 + $0x4c]]
    %v1059 = vstv %s1058
    %v1060 = vmul.f32 %v1059, %v74
    %1062 = vrot.lane.b32.xlu0 %v1060, 109
    %v1063 = vpop.permute.xlu0 %1062
    %v1064 = vrot.slane %v1063, 2
    %v1065 = vsel %vm119, %v1063, %v1064
    %v1067 = vadd.f32 %v1057, %v1065
    %s1068 = sld [smem:[#allocation2 + $0x4d]]
    %v1069 = vstv %s1068
    %v1070 = vmul.f32 %v1069, %v74
    %1072 = vrot.lane.b32.xlu0 %v1070, 108
    %v1073 = vpop.permute.xlu0 %1072
    %v1074 = vrot.slane %v1073, 2
    %v1075 = vsel %vm130, %v1073, %v1074
    %v1077 = vadd.f32 %v1067, %v1075
    %s1078 = sld [smem:[#allocation2 + $0x4e]]
    %v1079 = vstv %s1078
    %v1080 = vmul.f32 %v1079, %v74
    %1082 = vrot.lane.b32.xlu0 %v1080, 92
    %v1083 = vpop.permute.xlu0 %1082
    %v1084 = vrot.slane %v1083, 2
    %v1085 = vsel %vm141, %v1083, %v1084
    %v1087 = vadd.f32 %v1077, %v1085
    %s1088 = sld [smem:[#allocation2 + $0x4f]]
    %v1089 = vstv %s1088
    %v1090 = vmul.f32 %v1089, %v74
    %1092 = vrot.lane.b32.xlu0 %v1090, 91
    %v1093 = vpop.permute.xlu0 %1092
    %v1094 = vrot.slane %v1093, 2
    %v1095 = vsel %vm152, %v1093, %v1094
    %v1097 = vadd.f32 %v1087, %v1095
    %s1098 = sld [smem:[#allocation2 + $0x50]]
    %v1099 = vstv %s1098
    %v1100 = vmul.f32 %v1099, %v74
    %1102 = vrot.lane.b32.xlu0 %v1100, 90
    %v1103 = vpop.permute.xlu0 %1102
    %v1104 = vrot.slane %v1103, 2
    %v1105 = vsel %vm163, %v1103, %v1104
    %v1107 = vadd.f32 %v1097, %v1105
    %s1108 = sld [smem:[#allocation4 + $0x2]]
    %v1109 = vstv %s1108
    %v1110 = vadd.f32 %v1107, %v1109
    %vm1111 = vcmp.ge.f32.partialorder %v1110, 0.0
    %v1112 = vmul.f32 %v1110, 0.1
    %v1113 = vsel %vm1111, %v1110, %v1112
    %1115 = vrot.lane.b32.xlu0 %v1113, 19
    %v1116 = vpop.permute.xlu0 %1115
    %v1117 = vrot.slane %v1116, 6
    %v1118 = vsel %vm345, %v1117, %v1116
    %v1120 = vadd.f32 %v74, %v1118
    %v1121 = vmul.f32 %v1120, %v382
    %v1123 = vcombine.high %v1121, %v1121
    %v1125 = vunpack.c.l.s4 1983009808
    %v1126 = vunpack.c.0.s8 %v1125
    %v1127 = vlaneseq
    %v1128 = vshrl.u32 %v1127, 7
    %v1129 = vsub.s32 %v1126, %v1128
    %v1130 = vrot.slane %v1121, %v1129
    %v1132 = vunpack.c.l.s4 1983009808
    %v1133 = vunpack.c.0.s8 %v1132
    %v1134 = vlaneseq
    %v1135 = vshrl.u32 %v1134, 7
    %v1136 = vsub.s32 %v1133, %v1135
    %v1137 = vrot.slane %v1123, %v1136
    %v1138 = vcombine.high %v1130, %v1130
    %1139 = vrot.lane.b32.xlu0 %v1130, 98
    %v1140 = vpop.permute.xlu0 %1139
    %1141 = vrot.lane.b32.xlu0 %v1138, 98
    %v1142 = vpop.permute.xlu0 %1141
    %1143 = vrot.lane.b32.xlu0 %v1137, 98
    %v1144 = vpop.permute.xlu0 %1143
    %v1145 = vsel %vm408, %v1140, %v1142
    %v1146 = vsel %vm408, %v1142, %v1144
    %v1150 = vsel %vm414, %v1145, 0.0
    %v1151 = vsel %vm414, %v1146, 0.0
    %v1152 = vadd.f32 %v1150, %v1151
    %v1153 = vsel %vm418, %v1144, 0.0
    %v1154 = vadd.f32 %v1152, %v1153
    %1155 = vadd.xlane.f32.xlu0 %v1154
    %v1156 = vpop.xlane.xlu0 %1155
    %v1157 = vrot.slane %v1156, 4
    %v1158 = vadd.f32 %v1156, %v1157
    %v1159 = vrot.slane %v1158, 2
    %v1160 = vadd.f32 %v1158, %v1159
    %v1161 = vrot.slane %v1160, 1
    %v1162 = vadd.f32 %v1160, %v1161
    %s1163 = vtos %v1162
    %v1164 = vstv %s1163
    %v1165 = vmul.f32 %v1164, 0.001953125
    %v1166 = vsub.f32 %v1121, %v1165
    %v1167 = vmul.f32 %v1166, %v382
    %v1168 = vmul.f32 %v1167, %v1167
    %v1170 = vcombine.high %v1168, %v1168
    %v1172 = vunpack.c.l.s4 1983009808
    %v1173 = vunpack.c.0.s8 %v1172
    %v1174 = vlaneseq
    %v1175 = vshrl.u32 %v1174, 7
    %v1176 = vsub.s32 %v1173, %v1175
    %v1177 = vrot.slane %v1168, %v1176
    %v1179 = vunpack.c.l.s4 1983009808
    %v1180 = vunpack.c.0.s8 %v1179
    %v1181 = vlaneseq
    %v1182 = vshrl.u32 %v1181, 7
    %v1183 = vsub.s32 %v1180, %v1182
    %v1184 = vrot.slane %v1170, %v1183
    %v1185 = vcombine.high %v1177, %v1177
    %1186 = vrot.lane.b32.xlu0 %v1177, 98
    %v1187 = vpop.permute.xlu0 %1186
    %1188 = vrot.lane.b32.xlu0 %v1185, 98
    %v1189 = vpop.permute.xlu0 %1188
    %1190 = vrot.lane.b32.xlu0 %v1184, 98
    %v1191 = vpop.permute.xlu0 %1190
    %v1192 = vsel %vm408, %v1187, %v1189
    %v1193 = vsel %vm408, %v1189, %v1191
    %v1197 = vsel %vm414, %v1192, 0.0
    %v1198 = vsel %vm414, %v1193, 0.0
    %v1199 = vadd.f32 %v1197, %v1198
    %v1200 = vsel %vm418, %v1191, 0.0
    %v1201 = vadd.f32 %v1199, %v1200
    %1202 = vadd.xlane.f32.xlu0 %v1201
    %v1203 = vpop.xlane.xlu0 %1202
    %v1204 = vrot.slane %v1203, 4
    %v1205 = vadd.f32 %v1203, %v1204
    %v1206 = vrot.slane %v1205, 2
    %v1207 = vadd.f32 %v1205, %v1206
    %v1208 = vrot.slane %v1207, 1
    %v1209 = vadd.f32 %v1207, %v1208
    %s1210 = vtos %v1209
    %v1211 = vstv %s1210
    %v1212 = vmul.f32 %v1211, 0.001953125
    %s1213 = sld [smem:[#allocation6 + $0x2]]
    %v1214 = vadd.f32 %v1212, 1e-05
    %v1215 = vrsqrt.pop %v1214
    %v1216 = vstv %s1213
    %v1217 = vmul.f32 %v1216, %v1215
    %v1218 = vmul.f32 %v1167, %v1217
    %s1219 = sld [smem:[#allocation7 + $0x2]]
    %v1220 = vstv %s1219
    %v1221 = vadd.f32 %v1218, %v1220
    %v1222 = vmul.f32 %v1221, %v382
    %v1226 = vcombine.high %v488, %v488
    %v1228 = vunpack.c.l.s4 1983009808
    %v1229 = vunpack.c.0.s8 %v1228
    %v1230 = vlaneseq
    %v1231 = vshrl.u32 %v1230, 7
    %v1232 = vsub.s32 %v1229, %v1231
    %v1233 = vrot.slane %v488, %v1232
    %v1235 = vunpack.c.l.s4 1983009808
    %v1236 = vunpack.c.0.s8 %v1235
    %v1237 = vlaneseq
    %v1238 = vshrl.u32 %v1237, 7
    %v1239 = vsub.s32 %v1236, %v1238
    %v1240 = vrot.slane %v1226, %v1239
    %v1241 = vcombine.high %v1233, %v1233
    %v1242 = vcombine.high %v855, %v855
    %v1244 = vunpack.c.l.s4 1983009808
    %v1245 = vunpack.c.0.s8 %v1244
    %v1246 = vlaneseq
    %v1247 = vshrl.u32 %v1246, 7
    %v1248 = vsub.s32 %v1245, %v1247
    %v1249 = vrot.slane %v855, %v1248
    %v1251 = vunpack.c.l.s4 1983009808
    %v1252 = vunpack.c.0.s8 %v1251
    %v1253 = vlaneseq
    %v1254 = vshrl.u32 %v1253, 7
    %v1255 = vsub.s32 %v1252, %v1254
    %v1256 = vrot.slane %v1242, %v1255
    %v1257 = vcombine.high %v1249, %v1249
    %v1258 = vcombine.high %v1222, %v1222
    %v1260 = vunpack.c.l.s4 1983009808
    %v1261 = vunpack.c.0.s8 %v1260
    %v1262 = vlaneseq
    %v1263 = vshrl.u32 %v1262, 7
    %v1264 = vsub.s32 %v1261, %v1263
    %v1265 = vrot.slane %v1222, %v1264
    %v1267 = vunpack.c.l.s4 1983009808
    %v1268 = vunpack.c.0.s8 %v1267
    %v1269 = vlaneseq
    %v1270 = vshrl.u32 %v1269, 7
    %v1271 = vsub.s32 %v1268, %v1270
    %v1272 = vrot.slane %v1258, %v1271
    %v1273 = vcombine.high %v1265, %v1265
    %v1283 = vsel %vm381, 0.0, %v1233
    %v1284 = vsel %vm381, 0.0, %v1249
    %v1285 = vsel %vm381, 0.0, %v1265
    %v1286 = vsel %vm408, %v1240, 0.0
    %v1287 = vsel %vm408, %v1256, 0.0
    %v1288 = vsel %vm408, %v1272, 0.0
    %s1289 = sld [smem:[#allocation2 + $0x51]]
    %v1290 = vstv %s1289
    %v1291 = vmul.f32 %v1290, %v1283
    %v1292 = vmul.f32 %v1290, %v1241
    %v1293 = vmul.f32 %v1290, %v1286
    %v1294 = vadd.f32 %v1291, 0.0
    %v1295 = vadd.f32 %v1292, 0.0
    %v1296 = vadd.f32 %v1293, 0.0
    %s1297 = sld [smem:[#allocation2 + $0x52]]
    %v1298 = vstv %s1297
    %v1299 = vmul.f32 %v1298, %v1283
    %v1300 = vmul.f32 %v1298, %v1241
    %v1301 = vmul.f32 %v1298, %v1286
    %1305 = vrot.lane.b32.xlu0 %v1299, 127
    %v1306 = vpop.permute.xlu0 %1305
    %1307 = vrot.lane.b32.xlu0 %v1300, 127
    %v1308 = vpop.permute.xlu0 %1307
    %1309 = vrot.lane.b32.xlu0 %v1301, 127
    %v1310 = vpop.permute.xlu0 %1309
    %v1311 = vsel %vm86, %v1306, %v1308
    %v1312 = vsel %vm86, %v1308, %v1310
    %v1316 = vadd.f32 %v1294, %v1311
    %v1317 = vadd.f32 %v1295, %v1312
    %v1318 = vadd.f32 %v1296, %v1310
    %s1319 = sld [smem:[#allocation2 + $0x53]]
    %v1320 = vstv %s1319
    %v1321 = vmul.f32 %v1320, %v1283
    %v1322 = vmul.f32 %v1320, %v1241
    %v1323 = vmul.f32 %v1320, %v1286
    %1327 = vrot.lane.b32.xlu0 %v1321, 126
    %v1328 = vpop.permute.xlu0 %1327
    %1329 = vrot.lane.b32.xlu0 %v1322, 126
    %v1330 = vpop.permute.xlu0 %1329
    %1331 = vrot.lane.b32.xlu0 %v1323, 126
    %v1332 = vpop.permute.xlu0 %1331
    %v1333 = vsel %vm97, %v1328, %v1330
    %v1334 = vsel %vm97, %v1330, %v1332
    %v1338 = vadd.f32 %v1316, %v1333
    %v1339 = vadd.f32 %v1317, %v1334
    %v1340 = vadd.f32 %v1318, %v1332
    %s1341 = sld [smem:[#allocation2 + $0x54]]
    %v1342 = vstv %s1341
    %v1343 = vmul.f32 %v1342, %v1283
    %v1344 = vmul.f32 %v1342, %v1241
    %v1345 = vmul.f32 %v1342, %v1286
    %1349 = vrot.lane.b32.xlu0 %v1343, 110
    %v1350 = vpop.permute.xlu0 %1349
    %1351 = vrot.lane.b32.xlu0 %v1344, 110
    %v1352 = vpop.permute.xlu0 %1351
    %1353 = vrot.lane.b32.xlu0 %v1345, 110
    %v1354 = vpop.permute.xlu0 %1353
    %v1355 = vsel %vm108, %v1350, %v1352
    %v1356 = vsel %vm108, %v1352, %v1354
    %v1360 = vadd.f32 %v1338, %v1355
    %v1361 = vadd.f32 %v1339, %v1356
    %v1362 = vadd.f32 %v1340, %v1354
    %s1363 = sld [smem:[#allocation2 + $0x55]]
    %v1364 = vstv %s1363
    %v1365 = vmul.f32 %v1364, %v1283
    %v1366 = vmul.f32 %v1364, %v1241
    %v1367 = vmul.f32 %v1364, %v1286
    %1371 = vrot.lane.b32.xlu0 %v1365, 109
    %v1372 = vpop.permute.xlu0 %1371
    %1373 = vrot.lane.b32.xlu0 %v1366, 109
    %v1374 = vpop.permute.xlu0 %1373
    %1375 = vrot.lane.b32.xlu0 %v1367, 109
    %v1376 = vpop.permute.xlu0 %1375
    %v1377 = vsel %vm119, %v1372, %v1374
    %v1378 = vsel %vm119, %v1374, %v1376
    %v1382 = vadd.f32 %v1360, %v1377
    %v1383 = vadd.f32 %v1361, %v1378
    %v1384 = vadd.f32 %v1362, %v1376
    %s1385 = sld [smem:[#allocation2 + $0x56]]
    %v1386 = vstv %s1385
    %v1387 = vmul.f32 %v1386, %v1283
    %v1388 = vmul.f32 %v1386, %v1241
    %v1389 = vmul.f32 %v1386, %v1286
    %1393 = vrot.lane.b32.xlu0 %v1387, 108
    %v1394 = vpop.permute.xlu0 %1393
    %1395 = vrot.lane.b32.xlu0 %v1388, 108
    %v1396 = vpop.permute.xlu0 %1395
    %1397 = vrot.lane.b32.xlu0 %v1389, 108
    %v1398 = vpop.permute.xlu0 %1397
    %v1399 = vsel %vm130, %v1394, %v1396
    %v1400 = vsel %vm130, %v1396, %v1398
    %v1404 = vadd.f32 %v1382, %v1399
    %v1405 = vadd.f32 %v1383, %v1400
    %v1406 = vadd.f32 %v1384, %v1398
    %s1407 = sld [smem:[#allocation2 + $0x57]]
    %v1408 = vstv %s1407
    %v1409 = vmul.f32 %v1408, %v1283
    %v1410 = vmul.f32 %v1408, %v1241
    %v1411 = vmul.f32 %v1408, %v1286
    %1415 = vrot.lane.b32.xlu0 %v1409, 92
    %v1416 = vpop.permute.xlu0 %1415
    %1417 = vrot.lane.b32.xlu0 %v1410, 92
    %v1418 = vpop.permute.xlu0 %1417
    %1419 = vrot.lane.b32.xlu0 %v1411, 92
    %v1420 = vpop.permute.xlu0 %1419
    %v1421 = vsel %vm141, %v1416, %v1418
    %v1422 = vsel %vm141, %v1418, %v1420
    %v1426 = vadd.f32 %v1404, %v1421
    %v1427 = vadd.f32 %v1405, %v1422
    %v1428 = vadd.f32 %v1406, %v1420
    %s1429 = sld [smem:[#allocation2 + $0x58]]
    %v1430 = vstv %s1429
    %v1431 = vmul.f32 %v1430, %v1283
    %v1432 = vmul.f32 %v1430, %v1241
    %v1433 = vmul.f32 %v1430, %v1286
    %1437 = vrot.lane.b32.xlu0 %v1431, 91
    %v1438 = vpop.permute.xlu0 %1437
    %1439 = vrot.lane.b32.xlu0 %v1432, 91
    %v1440 = vpop.permute.xlu0 %1439
    %1441 = vrot.lane.b32.xlu0 %v1433, 91
    %v1442 = vpop.permute.xlu0 %1441
    %v1443 = vsel %vm152, %v1438, %v1440
    %v1444 = vsel %vm152, %v1440, %v1442
    %v1448 = vadd.f32 %v1426, %v1443
    %v1449 = vadd.f32 %v1427, %v1444
    %v1450 = vadd.f32 %v1428, %v1442
    %s1451 = sld [smem:[#allocation2 + $0x59]]
    %v1452 = vstv %s1451
    %v1453 = vmul.f32 %v1452, %v1283
    %v1454 = vmul.f32 %v1452, %v1241
    %v1455 = vmul.f32 %v1452, %v1286
    %1459 = vrot.lane.b32.xlu0 %v1453, 90
    %v1460 = vpop.permute.xlu0 %1459
    %1461 = vrot.lane.b32.xlu0 %v1454, 90
    %v1462 = vpop.permute.xlu0 %1461
    %1463 = vrot.lane.b32.xlu0 %v1455, 90
    %v1464 = vpop.permute.xlu0 %1463
    %v1465 = vsel %vm163, %v1460, %v1462
    %v1466 = vsel %vm163, %v1462, %v1464
    %v1470 = vadd.f32 %v1448, %v1465
    %v1471 = vadd.f32 %v1449, %v1466
    %v1472 = vadd.f32 %v1450, %v1464
    %s1473 = sld [smem:[#allocation2 + $0x5a]]
    %v1474 = vstv %s1473
    %v1475 = vmul.f32 %v1474, %v1284
    %v1476 = vmul.f32 %v1474, %v1257
    %v1477 = vmul.f32 %v1474, %v1287
    %v1478 = vadd.f32 %v1470, %v1475
    %v1479 = vadd.f32 %v1471, %v1476
    %v1480 = vadd.f32 %v1472, %v1477
    %s1481 = sld [smem:[#allocation2 + $0x5b]]
    %v1482 = vstv %s1481
    %v1483 = vmul.f32 %v1482, %v1284
    %v1484 = vmul.f32 %v1482, %v1257
    %v1485 = vmul.f32 %v1482, %v1287
    %1489 = vrot.lane.b32.xlu0 %v1483, 127
    %v1490 = vpop.permute.xlu0 %1489
    %1491 = vrot.lane.b32.xlu0 %v1484, 127
    %v1492 = vpop.permute.xlu0 %1491
    %1493 = vrot.lane.b32.xlu0 %v1485, 127
    %v1494 = vpop.permute.xlu0 %1493
    %v1495 = vsel %vm86, %v1490, %v1492
    %v1496 = vsel %vm86, %v1492, %v1494
    %v1500 = vadd.f32 %v1478, %v1495
    %v1501 = vadd.f32 %v1479, %v1496
    %v1502 = vadd.f32 %v1480, %v1494
    %s1503 = sld [smem:[#allocation2 + $0x5c]]
    %v1504 = vstv %s1503
    %v1505 = vmul.f32 %v1504, %v1284
    %v1506 = vmul.f32 %v1504, %v1257
    %v1507 = vmul.f32 %v1504, %v1287
    %1511 = vrot.lane.b32.xlu0 %v1505, 126
    %v1512 = vpop.permute.xlu0 %1511
    %1513 = vrot.lane.b32.xlu0 %v1506, 126
    %v1514 = vpop.permute.xlu0 %1513
    %1515 = vrot.lane.b32.xlu0 %v1507, 126
    %v1516 = vpop.permute.xlu0 %1515
    %v1517 = vsel %vm97, %v1512, %v1514
    %v1518 = vsel %vm97, %v1514, %v1516
    %v1522 = vadd.f32 %v1500, %v1517
    %v1523 = vadd.f32 %v1501, %v1518
    %v1524 = vadd.f32 %v1502, %v1516
    %s1525 = sld [smem:[#allocation2 + $0x5d]]
    %v1526 = vstv %s1525
    %v1527 = vmul.f32 %v1526, %v1284
    %v1528 = vmul.f32 %v1526, %v1257
    %v1529 = vmul.f32 %v1526, %v1287
    %1533 = vrot.lane.b32.xlu0 %v1527, 110
    %v1534 = vpop.permute.xlu0 %1533
    %1535 = vrot.lane.b32.xlu0 %v1528, 110
    %v1536 = vpop.permute.xlu0 %1535
    %1537 = vrot.lane.b32.xlu0 %v1529, 110
    %v1538 = vpop.permute.xlu0 %1537
    %v1539 = vsel %vm108, %v1534, %v1536
    %v1540 = vsel %vm108, %v1536, %v1538
    %v1544 = vadd.f32 %v1522, %v1539
    %v1545 = vadd.f32 %v1523, %v1540
    %v1546 = vadd.f32 %v1524, %v1538
    %s1547 = sld [smem:[#allocation2 + $0x5e]]
    %v1548 = vstv %s1547
    %v1549 = vmul.f32 %v1548, %v1284
    %v1550 = vmul.f32 %v1548, %v1257
    %v1551 = vmul.f32 %v1548, %v1287
    %1555 = vrot.lane.b32.xlu0 %v1549, 109
    %v1556 = vpop.permute.xlu0 %1555
    %1557 = vrot.lane.b32.xlu0 %v1550, 109
    %v1558 = vpop.permute.xlu0 %1557
    %1559 = vrot.lane.b32.xlu0 %v1551, 109
    %v1560 = vpop.permute.xlu0 %1559
    %v1561 = vsel %vm119, %v1556, %v1558
    %v1562 = vsel %vm119, %v1558, %v1560
    %v1566 = vadd.f32 %v1544, %v1561
    %v1567 = vadd.f32 %v1545, %v1562
    %v1568 = vadd.f32 %v1546, %v1560
    %s1569 = sld [smem:[#allocation2 + $0x5f]]
    %v1570 = vstv %s1569
    %v1571 = vmul.f32 %v1570, %v1284
    %v1572 = vmul.f32 %v1570, %v1257
    %v1573 = vmul.f32 %v1570, %v1287
    %1577 = vrot.lane.b32.xlu0 %v1571, 108
    %v1578 = vpop.permute.xlu0 %1577
    %1579 = vrot.lane.b32.xlu0 %v1572, 108
    %v1580 = vpop.permute.xlu0 %1579
    %1581 = vrot.lane.b32.xlu0 %v1573, 108
    %v1582 = vpop.permute.xlu0 %1581
    %v1583 = vsel %vm130, %v1578, %v1580
    %v1584 = vsel %vm130, %v1580, %v1582
    %v1588 = vadd.f32 %v1566, %v1583
    %v1589 = vadd.f32 %v1567, %v1584
    %v1590 = vadd.f32 %v1568, %v1582
    %s1591 = sld [smem:[#allocation2 + $0x60]]
    %v1592 = vstv %s1591
    %v1593 = vmul.f32 %v1592, %v1284
    %v1594 = vmul.f32 %v1592, %v1257
    %v1595 = vmul.f32 %v1592, %v1287
    %1599 = vrot.lane.b32.xlu0 %v1593, 92
    %v1600 = vpop.permute.xlu0 %1599
    %1601 = vrot.lane.b32.xlu0 %v1594, 92
    %v1602 = vpop.permute.xlu0 %1601
    %1603 = vrot.lane.b32.xlu0 %v1595, 92
    %v1604 = vpop.permute.xlu0 %1603
    %v1605 = vsel %vm141, %v1600, %v1602
    %v1606 = vsel %vm141, %v1602, %v1604
    %v1610 = vadd.f32 %v1588, %v1605
    %v1611 = vadd.f32 %v1589, %v1606
    %v1612 = vadd.f32 %v1590, %v1604
    %s1613 = sld [smem:[#allocation2 + $0x61]]
    %v1614 = vstv %s1613
    %v1615 = vmul.f32 %v1614, %v1284
    %v1616 = vmul.f32 %v1614, %v1257
    %v1617 = vmul.f32 %v1614, %v1287
    %1621 = vrot.lane.b32.xlu0 %v1615, 91
    %v1622 = vpop.permute.xlu0 %1621
    %1623 = vrot.lane.b32.xlu0 %v1616, 91
    %v1624 = vpop.permute.xlu0 %1623
    %1625 = vrot.lane.b32.xlu0 %v1617, 91
    %v1626 = vpop.permute.xlu0 %1625
    %v1627 = vsel %vm152, %v1622, %v1624
    %v1628 = vsel %vm152, %v1624, %v1626
    %v1632 = vadd.f32 %v1610, %v1627
    %v1633 = vadd.f32 %v1611, %v1628
    %v1634 = vadd.f32 %v1612, %v1626
    %s1635 = sld [smem:[#allocation2 + $0x62]]
    %v1636 = vstv %s1635
    %v1637 = vmul.f32 %v1636, %v1284
    %v1638 = vmul.f32 %v1636, %v1257
    %v1639 = vmul.f32 %v1636, %v1287
    %1643 = vrot.lane.b32.xlu0 %v1637, 90
    %v1644 = vpop.permute.xlu0 %1643
    %1645 = vrot.lane.b32.xlu0 %v1638, 90
    %v1646 = vpop.permute.xlu0 %1645
    %1647 = vrot.lane.b32.xlu0 %v1639, 90
    %v1648 = vpop.permute.xlu0 %1647
    %v1649 = vsel %vm163, %v1644, %v1646
    %v1650 = vsel %vm163, %v1646, %v1648
    %v1654 = vadd.f32 %v1632, %v1649
    %v1655 = vadd.f32 %v1633, %v1650
    %v1656 = vadd.f32 %v1634, %v1648
    %s1657 = sld [smem:[#allocation2 + $0x63]]
    %v1658 = vstv %s1657
    %v1659 = vmul.f32 %v1658, %v1285
    %v1660 = vmul.f32 %v1658, %v1273
    %v1661 = vmul.f32 %v1658, %v1288
    %v1662 = vadd.f32 %v1654, %v1659
    %v1663 = vadd.f32 %v1655, %v1660
    %v1664 = vadd.f32 %v1656, %v1661
    %s1665 = sld [smem:[#allocation2 + $0x64]]
    %v1666 = vstv %s1665
    %v1667 = vmul.f32 %v1666, %v1285
    %v1668 = vmul.f32 %v1666, %v1273
    %v1669 = vmul.f32 %v1666, %v1288
    %1673 = vrot.lane.b32.xlu0 %v1667, 127
    %v1674 = vpop.permute.xlu0 %1673
    %1675 = vrot.lane.b32.xlu0 %v1668, 127
    %v1676 = vpop.permute.xlu0 %1675
    %1677 = vrot.lane.b32.xlu0 %v1669, 127
    %v1678 = vpop.permute.xlu0 %1677
    %v1679 = vsel %vm86, %v1674, %v1676
    %v1680 = vsel %vm86, %v1676, %v1678
    %v1684 = vadd.f32 %v1662, %v1679
    %v1685 = vadd.f32 %v1663, %v1680
    %v1686 = vadd.f32 %v1664, %v1678
    %s1687 = sld [smem:[#allocation2 + $0x65]]
    %v1688 = vstv %s1687
    %v1689 = vmul.f32 %v1688, %v1285
    %v1690 = vmul.f32 %v1688, %v1273
    %v1691 = vmul.f32 %v1688, %v1288
    %1695 = vrot.lane.b32.xlu0 %v1689, 126
    %v1696 = vpop.permute.xlu0 %1695
    %1697 = vrot.lane.b32.xlu0 %v1690, 126
    %v1698 = vpop.permute.xlu0 %1697
    %1699 = vrot.lane.b32.xlu0 %v1691, 126
    %v1700 = vpop.permute.xlu0 %1699
    %v1701 = vsel %vm97, %v1696, %v1698
    %v1702 = vsel %vm97, %v1698, %v1700
    %v1706 = vadd.f32 %v1684, %v1701
    %v1707 = vadd.f32 %v1685, %v1702
    %v1708 = vadd.f32 %v1686, %v1700
    %s1709 = sld [smem:[#allocation2 + $0x66]]
    %v1710 = vstv %s1709
    %v1711 = vmul.f32 %v1710, %v1285
    %v1712 = vmul.f32 %v1710, %v1273
    %v1713 = vmul.f32 %v1710, %v1288
    %1717 = vrot.lane.b32.xlu0 %v1711, 110
    %v1718 = vpop.permute.xlu0 %1717
    %1719 = vrot.lane.b32.xlu0 %v1712, 110
    %v1720 = vpop.permute.xlu0 %1719
    %1721 = vrot.lane.b32.xlu0 %v1713, 110
    %v1722 = vpop.permute.xlu0 %1721
    %v1723 = vsel %vm108, %v1718, %v1720
    %v1724 = vsel %vm108, %v1720, %v1722
    %v1728 = vadd.f32 %v1706, %v1723
    %v1729 = vadd.f32 %v1707, %v1724
    %v1730 = vadd.f32 %v1708, %v1722
    %s1731 = sld [smem:[#allocation2 + $0x67]]
    %v1732 = vstv %s1731
    %v1733 = vmul.f32 %v1732, %v1285
    %v1734 = vmul.f32 %v1732, %v1273
    %v1735 = vmul.f32 %v1732, %v1288
    %1739 = vrot.lane.b32.xlu0 %v1733, 109
    %v1740 = vpop.permute.xlu0 %1739
    %1741 = vrot.lane.b32.xlu0 %v1734, 109
    %v1742 = vpop.permute.xlu0 %1741
    %1743 = vrot.lane.b32.xlu0 %v1735, 109
    %v1744 = vpop.permute.xlu0 %1743
    %v1745 = vsel %vm119, %v1740, %v1742
    %v1746 = vsel %vm119, %v1742, %v1744
    %v1750 = vadd.f32 %v1728, %v1745
    %v1751 = vadd.f32 %v1729, %v1746
    %v1752 = vadd.f32 %v1730, %v1744
    %s1753 = sld [smem:[#allocation2 + $0x68]]
    %v1754 = vstv %s1753
    %v1755 = vmul.f32 %v1754, %v1285
    %v1756 = vmul.f32 %v1754, %v1273
    %v1757 = vmul.f32 %v1754, %v1288
    %1761 = vrot.lane.b32.xlu0 %v1755, 108
    %v1762 = vpop.permute.xlu0 %1761
    %1763 = vrot.lane.b32.xlu0 %v1756, 108
    %v1764 = vpop.permute.xlu0 %1763
    %1765 = vrot.lane.b32.xlu0 %v1757, 108
    %v1766 = vpop.permute.xlu0 %1765
    %v1767 = vsel %vm130, %v1762, %v1764
    %v1768 = vsel %vm130, %v1764, %v1766
    %v1772 = vadd.f32 %v1750, %v1767
    %v1773 = vadd.f32 %v1751, %v1768
    %v1774 = vadd.f32 %v1752, %v1766
    %s1775 = sld [smem:[#allocation2 + $0x69]]
    %v1776 = vstv %s1775
    %v1777 = vmul.f32 %v1776, %v1285
    %v1778 = vmul.f32 %v1776, %v1273
    %v1779 = vmul.f32 %v1776, %v1288
    %1783 = vrot.lane.b32.xlu0 %v1777, 92
    %v1784 = vpop.permute.xlu0 %1783
    %1785 = vrot.lane.b32.xlu0 %v1778, 92
    %v1786 = vpop.permute.xlu0 %1785
    %1787 = vrot.lane.b32.xlu0 %v1779, 92
    %v1788 = vpop.permute.xlu0 %1787
    %v1789 = vsel %vm141, %v1784, %v1786
    %v1790 = vsel %vm141, %v1786, %v1788
    %v1794 = vadd.f32 %v1772, %v1789
    %v1795 = vadd.f32 %v1773, %v1790
    %v1796 = vadd.f32 %v1774, %v1788
    %s1797 = sld [smem:[#allocation2 + $0x6a]]
    %v1798 = vstv %s1797
    %v1799 = vmul.f32 %v1798, %v1285
    %v1800 = vmul.f32 %v1798, %v1273
    %v1801 = vmul.f32 %v1798, %v1288
    %1805 = vrot.lane.b32.xlu0 %v1799, 91
    %v1806 = vpop.permute.xlu0 %1805
    %1807 = vrot.lane.b32.xlu0 %v1800, 91
    %v1808 = vpop.permute.xlu0 %1807
    %1809 = vrot.lane.b32.xlu0 %v1801, 91
    %v1810 = vpop.permute.xlu0 %1809
    %v1811 = vsel %vm152, %v1806, %v1808
    %v1812 = vsel %vm152, %v1808, %v1810
    %v1816 = vadd.f32 %v1794, %v1811
    %v1817 = vadd.f32 %v1795, %v1812
    %v1818 = vadd.f32 %v1796, %v1810
    %s1819 = sld [smem:[#allocation2 + $0x6b]]
    %v1820 = vstv %s1819
    %v1821 = vmul.f32 %v1820, %v1285
    %v1822 = vmul.f32 %v1820, %v1273
    %v1823 = vmul.f32 %v1820, %v1288
    %1827 = vrot.lane.b32.xlu0 %v1821, 90
    %v1828 = vpop.permute.xlu0 %1827
    %1829 = vrot.lane.b32.xlu0 %v1822, 90
    %v1830 = vpop.permute.xlu0 %1829
    %1831 = vrot.lane.b32.xlu0 %v1823, 90
    %v1832 = vpop.permute.xlu0 %1831
    %v1833 = vsel %vm163, %v1828, %v1830
    %v1834 = vsel %vm163, %v1830, %v1832
    %v1838 = vadd.f32 %v1816, %v1833
    %v1839 = vadd.f32 %v1817, %v1834
    %v1840 = vadd.f32 %v1818, %v1832
    %s1841 = sld [smem:[#allocation4 + $0x3]]
    %v1842 = vstv %s1841
    %v1843 = vadd.f32 %v1838, %v1842
    %v1844 = vadd.f32 %v1839, %v1842
    %v1845 = vadd.f32 %v1840, %v1842
    %vm1846 = vcmp.ge.f32.partialorder %v1843, 0.0
    %vm1847 = vcmp.ge.f32.partialorder %v1844, 0.0
    %vm1848 = vcmp.ge.f32.partialorder %v1845, 0.0
    %v1849 = vmul.f32 %v1843, 0.1
    %v1850 = vmul.f32 %v1844, 0.1
    %v1851 = vmul.f32 %v1845, 0.1
    %v1852 = vsel %vm1846, %v1843, %v1849
    %v1853 = vsel %vm1847, %v1844, %v1850
    %v1854 = vsel %vm1848, %v1845, %v1851
    %1858 = vrot.lane.b32.xlu0 %v1852, 19
    %v1859 = vpop.permute.xlu0 %1858
    %1860 = vrot.lane.b32.xlu0 %v1853, 19
    %v1861 = vpop.permute.xlu0 %1860
    %1862 = vrot.lane.b32.xlu0 %v1854, 19
    %v1863 = vpop.permute.xlu0 %1862
    %v1864 = vsel %vm345, %v1859, %v1861
    %v1865 = vsel %vm345, %v1861, %v1863
    %v1869 = vadd.f32 %v1283, %v1859
    %v1870 = vadd.f32 %v1241, %v1864
    %v1871 = vadd.f32 %v1286, %v1865
    %1872 = vrot.lane.b32.xlu0 %v353, 30
    %v1873 = vpop.permute.xlu0 %1872
    %1874 = vrot.lane.b32.xlu0 %v357, 30
    %v1875 = vpop.permute.xlu0 %1874
    %1876 = vrot.lane.b32.xlu0 %v361, 30
    %v1877 = vpop.permute.xlu0 %1876
    %v1878 = vsel %vm381, %v1873, %v1875
    %v1879 = vsel %vm381, %v1875, %v1877
    %v1883 = vmul.f32 %v1869, %v1873
    %v1884 = vmul.f32 %v1870, %v1878
    %v1885 = vmul.f32 %v1871, %v1879
    %1889 = vrot.lane.b32.xlu0 %v1883, 98
    %v1890 = vpop.permute.xlu0 %1889
    %1891 = vrot.lane.b32.xlu0 %v1884, 98
    %v1892 = vpop.permute.xlu0 %1891
    %1893 = vrot.lane.b32.xlu0 %v1885, 98
    %v1894 = vpop.permute.xlu0 %1893
    %v1895 = vsel %vm408, %v1890, %v1892
    %v1896 = vsel %vm408, %v1892, %v1894
    %v1900 = vsel %vm414, %v1895, 0.0
    %v1901 = vsel %vm414, %v1896, 0.0
    %v1902 = vadd.f32 %v1900, %v1901
    %v1903 = vsel %vm418, %v1894, 0.0
    %v1904 = vadd.f32 %v1902, %v1903
    %1905 = vadd.xlane.f32.xlu0 %v1904
    %v1906 = vpop.xlane.xlu0 %1905
    %v1907 = vrot.slane %v1906, 4
    %v1908 = vadd.f32 %v1906, %v1907
    %v1909 = vrot.slane %v1908, 2
    %v1910 = vadd.f32 %v1908, %v1909
    %v1911 = vrot.slane %v1910, 1
    %v1912 = vadd.f32 %v1910, %v1911
    %s1913 = vtos %v1912
    %v1914 = vstv %s1913
    %v1915 = vmul.f32 %v1914, 0.001953125
    %v1916 = vsub.f32 %v1883, %v1915
    %v1917 = vsub.f32 %v1884, %v1915
    %v1918 = vsub.f32 %v1885, %v1915
    %v1919 = vmul.f32 %v1916, %v1873
    %v1920 = vmul.f32 %v1917, %v1878
    %v1921 = vmul.f32 %v1918, %v1879
    %v1922 = vmul.f32 %v1919, %v1919
    %v1923 = vmul.f32 %v1920, %v1920
    %v1924 = vmul.f32 %v1921, %v1921
    %1928 = vrot.lane.b32.xlu0 %v1922, 98
    %v1929 = vpop.permute.xlu0 %1928
    %1930 = vrot.lane.b32.xlu0 %v1923, 98
    %v1931 = vpop.permute.xlu0 %1930
    %1932 = vrot.lane.b32.xlu0 %v1924, 98
    %v1933 = vpop.permute.xlu0 %1932
    %v1934 = vsel %vm408, %v1929, %v1931
    %v1935 = vsel %vm408, %v1931, %v1933
    %v1939 = vsel %vm414, %v1934, 0.0
    %v1940 = vsel %vm414, %v1935, 0.0
    %v1941 = vadd.f32 %v1939, %v1940
    %v1942 = vsel %vm418, %v1933, 0.0
    %v1943 = vadd.f32 %v1941, %v1942
    %1944 = vadd.xlane.f32.xlu0 %v1943
    %v1945 = vpop.xlane.xlu0 %1944
    %v1946 = vrot.slane %v1945, 4
    %v1947 = vadd.f32 %v1945, %v1946
    %v1948 = vrot.slane %v1947, 2
    %v1949 = vadd.f32 %v1947, %v1948
    %v1950 = vrot.slane %v1949, 1
    %v1951 = vadd.f32 %v1949, %v1950
    %s1952 = vtos %v1951
    %v1953 = vstv %s1952
    %v1954 = vmul.f32 %v1953, 0.001953125
    %s1955 = sld [smem:[#allocation6 + $0x3]]
    %v1956 = vadd.f32 %v1954, 1e-05
    %v1957 = vrsqrt.pop %v1956
    %v1958 = vstv %s1955
    %v1959 = vmul.f32 %v1958, %v1957
    %v1960 = vmul.f32 %v1919, %v1959
    %v1961 = vmul.f32 %v1920, %v1959
    %v1962 = vmul.f32 %v1921, %v1959
    %s1963 = sld [smem:[#allocation7 + $0x3]]
    %v1964 = vstv %s1963
    %v1965 = vadd.f32 %v1960, %v1964
    %v1966 = vadd.f32 %v1961, %v1964
    %v1967 = vadd.f32 %v1962, %v1964
    %v1968 = vmul.f32 %v1965, %v1873
    %v1969 = vmul.f32 %v1966, %v1878
    %v1970 = vmul.f32 %v1967, %v1879
    %s1971 = sld [smem:[#allocation2 + $0x6c]]
    %v1972 = vstv %s1971
    %v1973 = vmul.f32 %v1972, %v1283
    %v1974 = vmul.f32 %v1972, %v1241
    %v1975 = vmul.f32 %v1972, %v1286
    %v1976 = vadd.f32 %v1973, 0.0
    %v1977 = vadd.f32 %v1974, 0.0
    %v1978 = vadd.f32 %v1975, 0.0
    %s1979 = sld [smem:[#allocation2 + $0x6d]]
    %v1980 = vstv %s1979
    %v1981 = vmul.f32 %v1980, %v1283
    %v1982 = vmul.f32 %v1980, %v1241
    %v1983 = vmul.f32 %v1980, %v1286
    %1987 = vrot.lane.b32.xlu0 %v1981, 127
    %v1988 = vpop.permute.xlu0 %1987
    %1989 = vrot.lane.b32.xlu0 %v1982, 127
    %v1990 = vpop.permute.xlu0 %1989
    %1991 = vrot.lane.b32.xlu0 %v1983, 127
    %v1992 = vpop.permute.xlu0 %1991
    %v1993 = vsel %vm86, %v1988, %v1990
    %v1994 = vsel %vm86, %v1990, %v1992
    %v1998 = vadd.f32 %v1976, %v1993
    %v1999 = vadd.f32 %v1977, %v1994
    %v2000 = vadd.f32 %v1978, %v1992
    %s2001 = sld [smem:[#allocation2 + $0x6e]]
    %v2002 = vstv %s2001
    %v2003 = vmul.f32 %v2002, %v1283
    %v2004 = vmul.f32 %v2002, %v1241
    %v2005 = vmul.f32 %v2002, %v1286
    %2009 = vrot.lane.b32.xlu0 %v2003, 126
    %v2010 = vpop.permute.xlu0 %2009
    %2011 = vrot.lane.b32.xlu0 %v2004, 126
    %v2012 = vpop.permute.xlu0 %2011
    %2013 = vrot.lane.b32.xlu0 %v2005, 126
    %v2014 = vpop.permute.xlu0 %2013
    %v2015 = vsel %vm97, %v2010, %v2012
    %v2016 = vsel %vm97, %v2012, %v2014
    %v2020 = vadd.f32 %v1998, %v2015
    %v2021 = vadd.f32 %v1999, %v2016
    %v2022 = vadd.f32 %v2000, %v2014
    %s2023 = sld [smem:[#allocation2 + $0x6f]]
    %v2024 = vstv %s2023
    %v2025 = vmul.f32 %v2024, %v1283
    %v2026 = vmul.f32 %v2024, %v1241
    %v2027 = vmul.f32 %v2024, %v1286
    %2031 = vrot.lane.b32.xlu0 %v2025, 110
    %v2032 = vpop.permute.xlu0 %2031
    %2033 = vrot.lane.b32.xlu0 %v2026, 110
    %v2034 = vpop.permute.xlu0 %2033
    %2035 = vrot.lane.b32.xlu0 %v2027, 110
    %v2036 = vpop.permute.xlu0 %2035
    %v2037 = vsel %vm108, %v2032, %v2034
    %v2038 = vsel %vm108, %v2034, %v2036
    %v2042 = vadd.f32 %v2020, %v2037
    %v2043 = vadd.f32 %v2021, %v2038
    %v2044 = vadd.f32 %v2022, %v2036
    %s2045 = sld [smem:[#allocation2 + $0x70]]
    %v2046 = vstv %s2045
    %v2047 = vmul.f32 %v2046, %v1283
    %v2048 = vmul.f32 %v2046, %v1241
    %v2049 = vmul.f32 %v2046, %v1286
    %2053 = vrot.lane.b32.xlu0 %v2047, 109
    %v2054 = vpop.permute.xlu0 %2053
    %2055 = vrot.lane.b32.xlu0 %v2048, 109
    %v2056 = vpop.permute.xlu0 %2055
    %2057 = vrot.lane.b32.xlu0 %v2049, 109
    %v2058 = vpop.permute.xlu0 %2057
    %v2059 = vsel %vm119, %v2054, %v2056
    %v2060 = vsel %vm119, %v2056, %v2058
    %v2064 = vadd.f32 %v2042, %v2059
    %v2065 = vadd.f32 %v2043, %v2060
    %v2066 = vadd.f32 %v2044, %v2058
    %s2067 = sld [smem:[#allocation2 + $0x71]]
    %v2068 = vstv %s2067
    %v2069 = vmul.f32 %v2068, %v1283
    %v2070 = vmul.f32 %v2068, %v1241
    %v2071 = vmul.f32 %v2068, %v1286
    %2075 = vrot.lane.b32.xlu0 %v2069, 108
    %v2076 = vpop.permute.xlu0 %2075
    %2077 = vrot.lane.b32.xlu0 %v2070, 108
    %v2078 = vpop.permute.xlu0 %2077
    %2079 = vrot.lane.b32.xlu0 %v2071, 108
    %v2080 = vpop.permute.xlu0 %2079
    %v2081 = vsel %vm130, %v2076, %v2078
    %v2082 = vsel %vm130, %v2078, %v2080
    %v2086 = vadd.f32 %v2064, %v2081
    %v2087 = vadd.f32 %v2065, %v2082
    %v2088 = vadd.f32 %v2066, %v2080
    %s2089 = sld [smem:[#allocation2 + $0x72]]
    %v2090 = vstv %s2089
    %v2091 = vmul.f32 %v2090, %v1283
    %v2092 = vmul.f32 %v2090, %v1241
    %v2093 = vmul.f32 %v2090, %v1286
    %2097 = vrot.lane.b32.xlu0 %v2091, 92
    %v2098 = vpop.permute.xlu0 %2097
    %2099 = vrot.lane.b32.xlu0 %v2092, 92
    %v2100 = vpop.permute.xlu0 %2099
    %2101 = vrot.lane.b32.xlu0 %v2093, 92
    %v2102 = vpop.permute.xlu0 %2101
    %v2103 = vsel %vm141, %v2098, %v2100
    %v2104 = vsel %vm141, %v2100, %v2102
    %v2108 = vadd.f32 %v2086, %v2103
    %v2109 = vadd.f32 %v2087, %v2104
    %v2110 = vadd.f32 %v2088, %v2102
    %s2111 = sld [smem:[#allocation2 + $0x73]]
    %v2112 = vstv %s2111
    %v2113 = vmul.f32 %v2112, %v1283
    %v2114 = vmul.f32 %v2112, %v1241
    %v2115 = vmul.f32 %v2112, %v1286
    %2119 = vrot.lane.b32.xlu0 %v2113, 91
    %v2120 = vpop.permute.xlu0 %2119
    %2121 = vrot.lane.b32.xlu0 %v2114, 91
    %v2122 = vpop.permute.xlu0 %2121
    %2123 = vrot.lane.b32.xlu0 %v2115, 91
    %v2124 = vpop.permute.xlu0 %2123
    %v2125 = vsel %vm152, %v2120, %v2122
    %v2126 = vsel %vm152, %v2122, %v2124
    %v2130 = vadd.f32 %v2108, %v2125
    %v2131 = vadd.f32 %v2109, %v2126
    %v2132 = vadd.f32 %v2110, %v2124
    %s2133 = sld [smem:[#allocation2 + $0x74]]
    %v2134 = vstv %s2133
    %v2135 = vmul.f32 %v2134, %v1283
    %v2136 = vmul.f32 %v2134, %v1241
    %v2137 = vmul.f32 %v2134, %v1286
    %2141 = vrot.lane.b32.xlu0 %v2135, 90
    %v2142 = vpop.permute.xlu0 %2141
    %2143 = vrot.lane.b32.xlu0 %v2136, 90
    %v2144 = vpop.permute.xlu0 %2143
    %2145 = vrot.lane.b32.xlu0 %v2137, 90
    %v2146 = vpop.permute.xlu0 %2145
    %v2147 = vsel %vm163, %v2142, %v2144
    %v2148 = vsel %vm163, %v2144, %v2146
    %v2152 = vadd.f32 %v2130, %v2147
    %v2153 = vadd.f32 %v2131, %v2148
    %v2154 = vadd.f32 %v2132, %v2146
    %s2155 = sld [smem:[#allocation2 + $0x75]]
    %v2156 = vstv %s2155
    %v2157 = vmul.f32 %v2156, %v1284
    %v2158 = vmul.f32 %v2156, %v1257
    %v2159 = vmul.f32 %v2156, %v1287
    %v2160 = vadd.f32 %v2152, %v2157
    %v2161 = vadd.f32 %v2153, %v2158
    %v2162 = vadd.f32 %v2154, %v2159
    %s2163 = sld [smem:[#allocation2 + $0x76]]
    %v2164 = vstv %s2163
    %v2165 = vmul.f32 %v2164, %v1284
    %v2166 = vmul.f32 %v2164, %v1257
    %v2167 = vmul.f32 %v2164, %v1287
    %2171 = vrot.lane.b32.xlu0 %v2165, 127
    %v2172 = vpop.permute.xlu0 %2171
    %2173 = vrot.lane.b32.xlu0 %v2166, 127
    %v2174 = vpop.permute.xlu0 %2173
    %2175 = vrot.lane.b32.xlu0 %v2167, 127
    %v2176 = vpop.permute.xlu0 %2175
    %v2177 = vsel %vm86, %v2172, %v2174
    %v2178 = vsel %vm86, %v2174, %v2176
    %v2182 = vadd.f32 %v2160, %v2177
    %v2183 = vadd.f32 %v2161, %v2178
    %v2184 = vadd.f32 %v2162, %v2176
    %s2185 = sld [smem:[#allocation2 + $0x77]]
    %v2186 = vstv %s2185
    %v2187 = vmul.f32 %v2186, %v1284
    %v2188 = vmul.f32 %v2186, %v1257
    %v2189 = vmul.f32 %v2186, %v1287
    %2193 = vrot.lane.b32.xlu0 %v2187, 126
    %v2194 = vpop.permute.xlu0 %2193
    %2195 = vrot.lane.b32.xlu0 %v2188, 126
    %v2196 = vpop.permute.xlu0 %2195
    %2197 = vrot.lane.b32.xlu0 %v2189, 126
    %v2198 = vpop.permute.xlu0 %2197
    %v2199 = vsel %vm97, %v2194, %v2196
    %v2200 = vsel %vm97, %v2196, %v2198
    %v2204 = vadd.f32 %v2182, %v2199
    %v2205 = vadd.f32 %v2183, %v2200
    %v2206 = vadd.f32 %v2184, %v2198
    %s2207 = sld [smem:[#allocation2 + $0x78]]
    %v2208 = vstv %s2207
    %v2209 = vmul.f32 %v2208, %v1284
    %v2210 = vmul.f32 %v2208, %v1257
    %v2211 = vmul.f32 %v2208, %v1287
    %2215 = vrot.lane.b32.xlu0 %v2209, 110
    %v2216 = vpop.permute.xlu0 %2215
    %2217 = vrot.lane.b32.xlu0 %v2210, 110
    %v2218 = vpop.permute.xlu0 %2217
    %2219 = vrot.lane.b32.xlu0 %v2211, 110
    %v2220 = vpop.permute.xlu0 %2219
    %v2221 = vsel %vm108, %v2216, %v2218
    %v2222 = vsel %vm108, %v2218, %v2220
    %v2226 = vadd.f32 %v2204, %v2221
    %v2227 = vadd.f32 %v2205, %v2222
    %v2228 = vadd.f32 %v2206, %v2220
    %s2229 = sld [smem:[#allocation2 + $0x79]]
    %v2230 = vstv %s2229
    %v2231 = vmul.f32 %v2230, %v1284
    %v2232 = vmul.f32 %v2230, %v1257
    %v2233 = vmul.f32 %v2230, %v1287
    %2237 = vrot.lane.b32.xlu0 %v2231, 109
    %v2238 = vpop.permute.xlu0 %2237
    %2239 = vrot.lane.b32.xlu0 %v2232, 109
    %v2240 = vpop.permute.xlu0 %2239
    %2241 = vrot.lane.b32.xlu0 %v2233, 109
    %v2242 = vpop.permute.xlu0 %2241
    %v2243 = vsel %vm119, %v2238, %v2240
    %v2244 = vsel %vm119, %v2240, %v2242
    %v2248 = vadd.f32 %v2226, %v2243
    %v2249 = vadd.f32 %v2227, %v2244
    %v2250 = vadd.f32 %v2228, %v2242
    %s2251 = sld [smem:[#allocation2 + $0x7a]]
    %v2252 = vstv %s2251
    %v2253 = vmul.f32 %v2252, %v1284
    %v2254 = vmul.f32 %v2252, %v1257
    %v2255 = vmul.f32 %v2252, %v1287
    %2259 = vrot.lane.b32.xlu0 %v2253, 108
    %v2260 = vpop.permute.xlu0 %2259
    %2261 = vrot.lane.b32.xlu0 %v2254, 108
    %v2262 = vpop.permute.xlu0 %2261
    %2263 = vrot.lane.b32.xlu0 %v2255, 108
    %v2264 = vpop.permute.xlu0 %2263
    %v2265 = vsel %vm130, %v2260, %v2262
    %v2266 = vsel %vm130, %v2262, %v2264
    %v2270 = vadd.f32 %v2248, %v2265
    %v2271 = vadd.f32 %v2249, %v2266
    %v2272 = vadd.f32 %v2250, %v2264
    %s2273 = sld [smem:[#allocation2 + $0x7b]]
    %v2274 = vstv %s2273
    %v2275 = vmul.f32 %v2274, %v1284
    %v2276 = vmul.f32 %v2274, %v1257
    %v2277 = vmul.f32 %v2274, %v1287
    %2281 = vrot.lane.b32.xlu0 %v2275, 92
    %v2282 = vpop.permute.xlu0 %2281
    %2283 = vrot.lane.b32.xlu0 %v2276, 92
    %v2284 = vpop.permute.xlu0 %2283
    %2285 = vrot.lane.b32.xlu0 %v2277, 92
    %v2286 = vpop.permute.xlu0 %2285
    %v2287 = vsel %vm141, %v2282, %v2284
    %v2288 = vsel %vm141, %v2284, %v2286
    %v2292 = vadd.f32 %v2270, %v2287
    %v2293 = vadd.f32 %v2271, %v2288
    %v2294 = vadd.f32 %v2272, %v2286
    %s2295 = sld [smem:[#allocation2 + $0x7c]]
    %v2296 = vstv %s2295
    %v2297 = vmul.f32 %v2296, %v1284
    %v2298 = vmul.f32 %v2296, %v1257
    %v2299 = vmul.f32 %v2296, %v1287
    %2303 = vrot.lane.b32.xlu0 %v2297, 91
    %v2304 = vpop.permute.xlu0 %2303
    %2305 = vrot.lane.b32.xlu0 %v2298, 91
    %v2306 = vpop.permute.xlu0 %2305
    %2307 = vrot.lane.b32.xlu0 %v2299, 91
    %v2308 = vpop.permute.xlu0 %2307
    %v2309 = vsel %vm152, %v2304, %v2306
    %v2310 = vsel %vm152, %v2306, %v2308
    %v2314 = vadd.f32 %v2292, %v2309
    %v2315 = vadd.f32 %v2293, %v2310
    %v2316 = vadd.f32 %v2294, %v2308
    %s2317 = sld [smem:[#allocation2 + $0x7d]]
    %v2318 = vstv %s2317
    %v2319 = vmul.f32 %v2318, %v1284
    %v2320 = vmul.f32 %v2318, %v1257
    %v2321 = vmul.f32 %v2318, %v1287
    %2325 = vrot.lane.b32.xlu0 %v2319, 90
    %v2326 = vpop.permute.xlu0 %2325
    %2327 = vrot.lane.b32.xlu0 %v2320, 90
    %v2328 = vpop.permute.xlu0 %2327
    %2329 = vrot.lane.b32.xlu0 %v2321, 90
    %v2330 = vpop.permute.xlu0 %2329
    %v2331 = vsel %vm163, %v2326, %v2328
    %v2332 = vsel %vm163, %v2328, %v2330
    %v2336 = vadd.f32 %v2314, %v2331
    %v2337 = vadd.f32 %v2315, %v2332
    %v2338 = vadd.f32 %v2316, %v2330
    %s2339 = sld [smem:[#allocation2 + $0x7e]]
    %v2340 = vstv %s2339
    %v2341 = vmul.f32 %v2340, %v1285
    %v2342 = vmul.f32 %v2340, %v1273
    %v2343 = vmul.f32 %v2340, %v1288
    %v2344 = vadd.f32 %v2336, %v2341
    %v2345 = vadd.f32 %v2337, %v2342
    %v2346 = vadd.f32 %v2338, %v2343
    %s2347 = sld [smem:[#allocation2 + $0x7f]]
    %v2348 = vstv %s2347
    %v2349 = vmul.f32 %v2348, %v1285
    %v2350 = vmul.f32 %v2348, %v1273
    %v2351 = vmul.f32 %v2348, %v1288
    %2355 = vrot.lane.b32.xlu0 %v2349, 127
    %v2356 = vpop.permute.xlu0 %2355
    %2357 = vrot.lane.b32.xlu0 %v2350, 127
    %v2358 = vpop.permute.xlu0 %2357
    %2359 = vrot.lane.b32.xlu0 %v2351, 127
    %v2360 = vpop.permute.xlu0 %2359
    %v2361 = vsel %vm86, %v2356, %v2358
    %v2362 = vsel %vm86, %v2358, %v2360
    %v2366 = vadd.f32 %v2344, %v2361
    %v2367 = vadd.f32 %v2345, %v2362
    %v2368 = vadd.f32 %v2346, %v2360
    %s2369 = sld [smem:[#allocation2 + $0x80]]
    %v2370 = vstv %s2369
    %v2371 = vmul.f32 %v2370, %v1285
    %v2372 = vmul.f32 %v2370, %v1273
    %v2373 = vmul.f32 %v2370, %v1288
    %2377 = vrot.lane.b32.xlu0 %v2371, 126
    %v2378 = vpop.permute.xlu0 %2377
    %2379 = vrot.lane.b32.xlu0 %v2372, 126
    %v2380 = vpop.permute.xlu0 %2379
    %2381 = vrot.lane.b32.xlu0 %v2373, 126
    %v2382 = vpop.permute.xlu0 %2381
    %v2383 = vsel %vm97, %v2378, %v2380
    %v2384 = vsel %vm97, %v2380, %v2382
    %v2388 = vadd.f32 %v2366, %v2383
    %v2389 = vadd.f32 %v2367, %v2384
    %v2390 = vadd.f32 %v2368, %v2382
    %s2391 = sld [smem:[#allocation2 + $0x81]]
    %v2392 = vstv %s2391
    %v2393 = vmul.f32 %v2392, %v1285
    %v2394 = vmul.f32 %v2392, %v1273
    %v2395 = vmul.f32 %v2392, %v1288
    %2399 = vrot.lane.b32.xlu0 %v2393, 110
    %v2400 = vpop.permute.xlu0 %2399
    %2401 = vrot.lane.b32.xlu0 %v2394, 110
    %v2402 = vpop.permute.xlu0 %2401
    %2403 = vrot.lane.b32.xlu0 %v2395, 110
    %v2404 = vpop.permute.xlu0 %2403
    %v2405 = vsel %vm108, %v2400, %v2402
    %v2406 = vsel %vm108, %v2402, %v2404
    %v2410 = vadd.f32 %v2388, %v2405
    %v2411 = vadd.f32 %v2389, %v2406
    %v2412 = vadd.f32 %v2390, %v2404
    %s2413 = sld [smem:[#allocation2 + $0x82]]
    %v2414 = vstv %s2413
    %v2415 = vmul.f32 %v2414, %v1285
    %v2416 = vmul.f32 %v2414, %v1273
    %v2417 = vmul.f32 %v2414, %v1288
    %2421 = vrot.lane.b32.xlu0 %v2415, 109
    %v2422 = vpop.permute.xlu0 %2421
    %2423 = vrot.lane.b32.xlu0 %v2416, 109
    %v2424 = vpop.permute.xlu0 %2423
    %2425 = vrot.lane.b32.xlu0 %v2417, 109
    %v2426 = vpop.permute.xlu0 %2425
    %v2427 = vsel %vm119, %v2422, %v2424
    %v2428 = vsel %vm119, %v2424, %v2426
    %v2432 = vadd.f32 %v2410, %v2427
    %v2433 = vadd.f32 %v2411, %v2428
    %v2434 = vadd.f32 %v2412, %v2426
    %s2435 = sld [smem:[#allocation2 + $0x83]]
    %v2436 = vstv %s2435
    %v2437 = vmul.f32 %v2436, %v1285
    %v2438 = vmul.f32 %v2436, %v1273
    %v2439 = vmul.f32 %v2436, %v1288
    %2443 = vrot.lane.b32.xlu0 %v2437, 108
    %v2444 = vpop.permute.xlu0 %2443
    %2445 = vrot.lane.b32.xlu0 %v2438, 108
    %v2446 = vpop.permute.xlu0 %2445
    %2447 = vrot.lane.b32.xlu0 %v2439, 108
    %v2448 = vpop.permute.xlu0 %2447
    %v2449 = vsel %vm130, %v2444, %v2446
    %v2450 = vsel %vm130, %v2446, %v2448
    %v2454 = vadd.f32 %v2432, %v2449
    %v2455 = vadd.f32 %v2433, %v2450
    %v2456 = vadd.f32 %v2434, %v2448
    %s2457 = sld [smem:[#allocation2 + $0x84]]
    %v2458 = vstv %s2457
    %v2459 = vmul.f32 %v2458, %v1285
    %v2460 = vmul.f32 %v2458, %v1273
    %v2461 = vmul.f32 %v2458, %v1288
    %2465 = vrot.lane.b32.xlu0 %v2459, 92
    %v2466 = vpop.permute.xlu0 %2465
    %2467 = vrot.lane.b32.xlu0 %v2460, 92
    %v2468 = vpop.permute.xlu0 %2467
    %2469 = vrot.lane.b32.xlu0 %v2461, 92
    %v2470 = vpop.permute.xlu0 %2469
    %v2471 = vsel %vm141, %v2466, %v2468
    %v2472 = vsel %vm141, %v2468, %v2470
    %v2476 = vadd.f32 %v2454, %v2471
    %v2477 = vadd.f32 %v2455, %v2472
    %v2478 = vadd.f32 %v2456, %v2470
    %s2479 = sld [smem:[#allocation2 + $0x85]]
    %v2480 = vstv %s2479
    %v2481 = vmul.f32 %v2480, %v1285
    %v2482 = vmul.f32 %v2480, %v1273
    %v2483 = vmul.f32 %v2480, %v1288
    %2487 = vrot.lane.b32.xlu0 %v2481, 91
    %v2488 = vpop.permute.xlu0 %2487
    %2489 = vrot.lane.b32.xlu0 %v2482, 91
    %v2490 = vpop.permute.xlu0 %2489
    %2491 = vrot.lane.b32.xlu0 %v2483, 91
    %v2492 = vpop.permute.xlu0 %2491
    %v2493 = vsel %vm152, %v2488, %v2490
    %v2494 = vsel %vm152, %v2490, %v2492
    %v2498 = vadd.f32 %v2476, %v2493
    %v2499 = vadd.f32 %v2477, %v2494
    %v2500 = vadd.f32 %v2478, %v2492
    %s2501 = sld [smem:[#allocation2 + $0x86]]
    %v2502 = vstv %s2501
    %v2503 = vmul.f32 %v2502, %v1285
    %v2504 = vmul.f32 %v2502, %v1273
    %v2505 = vmul.f32 %v2502, %v1288
    %2509 = vrot.lane.b32.xlu0 %v2503, 90
    %v2510 = vpop.permute.xlu0 %2509
    %2511 = vrot.lane.b32.xlu0 %v2504, 90
    %v2512 = vpop.permute.xlu0 %2511
    %2513 = vrot.lane.b32.xlu0 %v2505, 90
    %v2514 = vpop.permute.xlu0 %2513
    %v2515 = vsel %vm163, %v2510, %v2512
    %v2516 = vsel %vm163, %v2512, %v2514
    %v2520 = vadd.f32 %v2498, %v2515
    %v2521 = vadd.f32 %v2499, %v2516
    %v2522 = vadd.f32 %v2500, %v2514
    %s2523 = sld [smem:[#allocation4 + $0x4]]
    %v2524 = vstv %s2523
    %v2525 = vadd.f32 %v2520, %v2524
    %v2526 = vadd.f32 %v2521, %v2524
    %v2527 = vadd.f32 %v2522, %v2524
    %vm2528 = vcmp.ge.f32.partialorder %v2525, 0.0
    %vm2529 = vcmp.ge.f32.partialorder %v2526, 0.0
    %vm2530 = vcmp.ge.f32.partialorder %v2527, 0.0
    %v2531 = vmul.f32 %v2525, 0.1
    %v2532 = vmul.f32 %v2526, 0.1
    %v2533 = vmul.f32 %v2527, 0.1
    %v2534 = vsel %vm2528, %v2525, %v2531
    %v2535 = vsel %vm2529, %v2526, %v2532
    %v2536 = vsel %vm2530, %v2527, %v2533
    %2540 = vrot.lane.b32.xlu0 %v2534, 19
    %v2541 = vpop.permute.xlu0 %2540
    %2542 = vrot.lane.b32.xlu0 %v2535, 19
    %v2543 = vpop.permute.xlu0 %2542
    %2544 = vrot.lane.b32.xlu0 %v2536, 19
    %v2545 = vpop.permute.xlu0 %2544
    %v2546 = vsel %vm345, %v2541, %v2543
    %v2547 = vsel %vm345, %v2543, %v2545
    %v2551 = vadd.f32 %v1284, %v2541
    %v2552 = vadd.f32 %v1257, %v2546
    %v2553 = vadd.f32 %v1287, %v2547
    %v2554 = vmul.f32 %v2551, %v1873
    %v2555 = vmul.f32 %v2552, %v1878
    %v2556 = vmul.f32 %v2553, %v1879
    %2560 = vrot.lane.b32.xlu0 %v2554, 98
    %v2561 = vpop.permute.xlu0 %2560
    %2562 = vrot.lane.b32.xlu0 %v2555, 98
    %v2563 = vpop.permute.xlu0 %2562
    %2564 = vrot.lane.b32.xlu0 %v2556, 98
    %v2565 = vpop.permute.xlu0 %2564
    %v2566 = vsel %vm408, %v2561, %v2563
    %v2567 = vsel %vm408, %v2563, %v2565
    %v2571 = vsel %vm414, %v2566, 0.0
    %v2572 = vsel %vm414, %v2567, 0.0
    %v2573 = vadd.f32 %v2571, %v2572
    %v2574 = vsel %vm418, %v2565, 0.0
    %v2575 = vadd.f32 %v2573, %v2574
    %2576 = vadd.xlane.f32.xlu0 %v2575
    %v2577 = vpop.xlane.xlu0 %2576
    %v2578 = vrot.slane %v2577, 4
    %v2579 = vadd.f32 %v2577, %v2578
    %v2580 = vrot.slane %v2579, 2
    %v2581 = vadd.f32 %v2579, %v2580
    %v2582 = vrot.slane %v2581, 1
    %v2583 = vadd.f32 %v2581, %v2582
    %s2584 = vtos %v2583
    %v2585 = vstv %s2584
    %v2586 = vmul.f32 %v2585, 0.001953125
    %v2587 = vsub.f32 %v2554, %v2586
    %v2588 = vsub.f32 %v2555, %v2586
    %v2589 = vsub.f32 %v2556, %v2586
    %v2590 = vmul.f32 %v2587, %v1873
    %v2591 = vmul.f32 %v2588, %v1878
    %v2592 = vmul.f32 %v2589, %v1879
    %v2593 = vmul.f32 %v2590, %v2590
    %v2594 = vmul.f32 %v2591, %v2591
    %v2595 = vmul.f32 %v2592, %v2592
    %2599 = vrot.lane.b32.xlu0 %v2593, 98
    %v2600 = vpop.permute.xlu0 %2599
    %2601 = vrot.lane.b32.xlu0 %v2594, 98
    %v2602 = vpop.permute.xlu0 %2601
    %2603 = vrot.lane.b32.xlu0 %v2595, 98
    %v2604 = vpop.permute.xlu0 %2603
    %v2605 = vsel %vm408, %v2600, %v2602
    %v2606 = vsel %vm408, %v2602, %v2604
    %v2610 = vsel %vm414, %v2605, 0.0
    %v2611 = vsel %vm414, %v2606, 0.0
    %v2612 = vadd.f32 %v2610, %v2611
    %v2613 = vsel %vm418, %v2604, 0.0
    %v2614 = vadd.f32 %v2612, %v2613
    %2615 = vadd.xlane.f32.xlu0 %v2614
    %v2616 = vpop.xlane.xlu0 %2615
    %v2617 = vrot.slane %v2616, 4
    %v2618 = vadd.f32 %v2616, %v2617
    %v2619 = vrot.slane %v2618, 2
    %v2620 = vadd.f32 %v2618, %v2619
    %v2621 = vrot.slane %v2620, 1
    %v2622 = vadd.f32 %v2620, %v2621
    %s2623 = vtos %v2622
    %v2624 = vstv %s2623
    %v2625 = vmul.f32 %v2624, 0.001953125
    %s2626 = sld [smem:[#allocation6 + $0x4]]
    %v2627 = vadd.f32 %v2625, 1e-05
    %v2628 = vrsqrt.pop %v2627
    %v2629 = vstv %s2626
    %v2630 = vmul.f32 %v2629, %v2628
    %v2631 = vmul.f32 %v2590, %v2630
    %v2632 = vmul.f32 %v2591, %v2630
    %v2633 = vmul.f32 %v2592, %v2630
    %s2634 = sld [smem:[#allocation7 + $0x4]]
    %v2635 = vstv %s2634
    %v2636 = vadd.f32 %v2631, %v2635
    %v2637 = vadd.f32 %v2632, %v2635
    %v2638 = vadd.f32 %v2633, %v2635
    %v2639 = vmul.f32 %v2636, %v1873
    %v2640 = vmul.f32 %v2637, %v1878
    %v2641 = vmul.f32 %v2638, %v1879
    %s2642 = sld [smem:[#allocation2 + $0x87]]
    %v2643 = vstv %s2642
    %v2644 = vmul.f32 %v2643, %v1283
    %v2645 = vmul.f32 %v2643, %v1241
    %v2646 = vmul.f32 %v2643, %v1286
    %v2647 = vadd.f32 %v2644, 0.0
    %v2648 = vadd.f32 %v2645, 0.0
    %v2649 = vadd.f32 %v2646, 0.0
    %s2650 = sld [smem:[#allocation2 + $0x88]]
    %v2651 = vstv %s2650
    %v2652 = vmul.f32 %v2651, %v1283
    %v2653 = vmul.f32 %v2651, %v1241
    %v2654 = vmul.f32 %v2651, %v1286
    %2658 = vrot.lane.b32.xlu0 %v2652, 127
    %v2659 = vpop.permute.xlu0 %2658
    %2660 = vrot.lane.b32.xlu0 %v2653, 127
    %v2661 = vpop.permute.xlu0 %2660
    %2662 = vrot.lane.b32.xlu0 %v2654, 127
    %v2663 = vpop.permute.xlu0 %2662
    %v2664 = vsel %vm86, %v2659, %v2661
    %v2665 = vsel %vm86, %v2661, %v2663
    %v2669 = vadd.f32 %v2647, %v2664
    %v2670 = vadd.f32 %v2648, %v2665
    %v2671 = vadd.f32 %v2649, %v2663
    %s2672 = sld [smem:[#allocation2 + $0x89]]
    %v2673 = vstv %s2672
    %v2674 = vmul.f32 %v2673, %v1283
    %v2675 = vmul.f32 %v2673, %v1241
    %v2676 = vmul.f32 %v2673, %v1286
    %2680 = vrot.lane.b32.xlu0 %v2674, 126
    %v2681 = vpop.permute.xlu0 %2680
    %2682 = vrot.lane.b32.xlu0 %v2675, 126
    %v2683 = vpop.permute.xlu0 %2682
    %2684 = vrot.lane.b32.xlu0 %v2676, 126
    %v2685 = vpop.permute.xlu0 %2684
    %v2686 = vsel %vm97, %v2681, %v2683
    %v2687 = vsel %vm97, %v2683, %v2685
    %v2691 = vadd.f32 %v2669, %v2686
    %v2692 = vadd.f32 %v2670, %v2687
    %v2693 = vadd.f32 %v2671, %v2685
    %s2694 = sld [smem:[#allocation2 + $0x8a]]
    %v2695 = vstv %s2694
    %v2696 = vmul.f32 %v2695, %v1283
    %v2697 = vmul.f32 %v2695, %v1241
    %v2698 = vmul.f32 %v2695, %v1286
    %2702 = vrot.lane.b32.xlu0 %v2696, 110
    %v2703 = vpop.permute.xlu0 %2702
    %2704 = vrot.lane.b32.xlu0 %v2697, 110
    %v2705 = vpop.permute.xlu0 %2704
    %2706 = vrot.lane.b32.xlu0 %v2698, 110
    %v2707 = vpop.permute.xlu0 %2706
    %v2708 = vsel %vm108, %v2703, %v2705
    %v2709 = vsel %vm108, %v2705, %v2707
    %v2713 = vadd.f32 %v2691, %v2708
    %v2714 = vadd.f32 %v2692, %v2709
    %v2715 = vadd.f32 %v2693, %v2707
    %s2716 = sld [smem:[#allocation2 + $0x8b]]
    %v2717 = vstv %s2716
    %v2718 = vmul.f32 %v2717, %v1283
    %v2719 = vmul.f32 %v2717, %v1241
    %v2720 = vmul.f32 %v2717, %v1286
    %2724 = vrot.lane.b32.xlu0 %v2718, 109
    %v2725 = vpop.permute.xlu0 %2724
    %2726 = vrot.lane.b32.xlu0 %v2719, 109
    %v2727 = vpop.permute.xlu0 %2726
    %2728 = vrot.lane.b32.xlu0 %v2720, 109
    %v2729 = vpop.permute.xlu0 %2728
    %v2730 = vsel %vm119, %v2725, %v2727
    %v2731 = vsel %vm119, %v2727, %v2729
    %v2735 = vadd.f32 %v2713, %v2730
    %v2736 = vadd.f32 %v2714, %v2731
    %v2737 = vadd.f32 %v2715, %v2729
    %s2738 = sld [smem:[#allocation2 + $0x8c]]
    %v2739 = vstv %s2738
    %v2740 = vmul.f32 %v2739, %v1283
    %v2741 = vmul.f32 %v2739, %v1241
    %v2742 = vmul.f32 %v2739, %v1286
    %2746 = vrot.lane.b32.xlu0 %v2740, 108
    %v2747 = vpop.permute.xlu0 %2746
    %2748 = vrot.lane.b32.xlu0 %v2741, 108
    %v2749 = vpop.permute.xlu0 %2748
    %2750 = vrot.lane.b32.xlu0 %v2742, 108
    %v2751 = vpop.permute.xlu0 %2750
    %v2752 = vsel %vm130, %v2747, %v2749
    %v2753 = vsel %vm130, %v2749, %v2751
    %v2757 = vadd.f32 %v2735, %v2752
    %v2758 = vadd.f32 %v2736, %v2753
    %v2759 = vadd.f32 %v2737, %v2751
    %s2760 = sld [smem:[#allocation2 + $0x8d]]
    %v2761 = vstv %s2760
    %v2762 = vmul.f32 %v2761, %v1283
    %v2763 = vmul.f32 %v2761, %v1241
    %v2764 = vmul.f32 %v2761, %v1286
    %2768 = vrot.lane.b32.xlu0 %v2762, 92
    %v2769 = vpop.permute.xlu0 %2768
    %2770 = vrot.lane.b32.xlu0 %v2763, 92
    %v2771 = vpop.permute.xlu0 %2770
    %2772 = vrot.lane.b32.xlu0 %v2764, 92
    %v2773 = vpop.permute.xlu0 %2772
    %v2774 = vsel %vm141, %v2769, %v2771
    %v2775 = vsel %vm141, %v2771, %v2773
    %v2779 = vadd.f32 %v2757, %v2774
    %v2780 = vadd.f32 %v2758, %v2775
    %v2781 = vadd.f32 %v2759, %v2773
    %s2782 = sld [smem:[#allocation2 + $0x8e]]
    %v2783 = vstv %s2782
    %v2784 = vmul.f32 %v2783, %v1283
    %v2785 = vmul.f32 %v2783, %v1241
    %v2786 = vmul.f32 %v2783, %v1286
    %2790 = vrot.lane.b32.xlu0 %v2784, 91
    %v2791 = vpop.permute.xlu0 %2790
    %2792 = vrot.lane.b32.xlu0 %v2785, 91
    %v2793 = vpop.permute.xlu0 %2792
    %2794 = vrot.lane.b32.xlu0 %v2786, 91
    %v2795 = vpop.permute.xlu0 %2794
    %v2796 = vsel %vm152, %v2791, %v2793
    %v2797 = vsel %vm152, %v2793, %v2795
    %v2801 = vadd.f32 %v2779, %v2796
    %v2802 = vadd.f32 %v2780, %v2797
    %v2803 = vadd.f32 %v2781, %v2795
    %s2804 = sld [smem:[#allocation2 + $0x8f]]
    %v2805 = vstv %s2804
    %v2806 = vmul.f32 %v2805, %v1283
    %v2807 = vmul.f32 %v2805, %v1241
    %v2808 = vmul.f32 %v2805, %v1286
    %2812 = vrot.lane.b32.xlu0 %v2806, 90
    %v2813 = vpop.permute.xlu0 %2812
    %2814 = vrot.lane.b32.xlu0 %v2807, 90
    %v2815 = vpop.permute.xlu0 %2814
    %2816 = vrot.lane.b32.xlu0 %v2808, 90
    %v2817 = vpop.permute.xlu0 %2816
    %v2818 = vsel %vm163, %v2813, %v2815
    %v2819 = vsel %vm163, %v2815, %v2817
    %v2823 = vadd.f32 %v2801, %v2818
    %v2824 = vadd.f32 %v2802, %v2819
    %v2825 = vadd.f32 %v2803, %v2817
    %s2826 = sld [smem:[#allocation2 + $0x90]]
    %v2827 = vstv %s2826
    %v2828 = vmul.f32 %v2827, %v1284
    %v2829 = vmul.f32 %v2827, %v1257
    %v2830 = vmul.f32 %v2827, %v1287
    %v2831 = vadd.f32 %v2823, %v2828
    %v2832 = vadd.f32 %v2824, %v2829
    %v2833 = vadd.f32 %v2825, %v2830
    %s2834 = sld [smem:[#allocation2 + $0x91]]
    %v2835 = vstv %s2834
    %v2836 = vmul.f32 %v2835, %v1284
    %v2837 = vmul.f32 %v2835, %v1257
    %v2838 = vmul.f32 %v2835, %v1287
    %2842 = vrot.lane.b32.xlu0 %v2836, 127
    %v2843 = vpop.permute.xlu0 %2842
    %2844 = vrot.lane.b32.xlu0 %v2837, 127
    %v2845 = vpop.permute.xlu0 %2844
    %2846 = vrot.lane.b32.xlu0 %v2838, 127
    %v2847 = vpop.permute.xlu0 %2846
    %v2848 = vsel %vm86, %v2843, %v2845
    %v2849 = vsel %vm86, %v2845, %v2847
    %v2853 = vadd.f32 %v2831, %v2848
    %v2854 = vadd.f32 %v2832, %v2849
    %v2855 = vadd.f32 %v2833, %v2847
    %s2856 = sld [smem:[#allocation2 + $0x92]]
    %v2857 = vstv %s2856
    %v2858 = vmul.f32 %v2857, %v1284
    %v2859 = vmul.f32 %v2857, %v1257
    %v2860 = vmul.f32 %v2857, %v1287
    %2864 = vrot.lane.b32.xlu0 %v2858, 126
    %v2865 = vpop.permute.xlu0 %2864
    %2866 = vrot.lane.b32.xlu0 %v2859, 126
    %v2867 = vpop.permute.xlu0 %2866
    %2868 = vrot.lane.b32.xlu0 %v2860, 126
    %v2869 = vpop.permute.xlu0 %2868
    %v2870 = vsel %vm97, %v2865, %v2867
    %v2871 = vsel %vm97, %v2867, %v2869
    %v2875 = vadd.f32 %v2853, %v2870
    %v2876 = vadd.f32 %v2854, %v2871
    %v2877 = vadd.f32 %v2855, %v2869
    %s2878 = sld [smem:[#allocation2 + $0x93]]
    %v2879 = vstv %s2878
    %v2880 = vmul.f32 %v2879, %v1284
    %v2881 = vmul.f32 %v2879, %v1257
    %v2882 = vmul.f32 %v2879, %v1287
    %2886 = vrot.lane.b32.xlu0 %v2880, 110
    %v2887 = vpop.permute.xlu0 %2886
    %2888 = vrot.lane.b32.xlu0 %v2881, 110
    %v2889 = vpop.permute.xlu0 %2888
    %2890 = vrot.lane.b32.xlu0 %v2882, 110
    %v2891 = vpop.permute.xlu0 %2890
    %v2892 = vsel %vm108, %v2887, %v2889
    %v2893 = vsel %vm108, %v2889, %v2891
    %v2897 = vadd.f32 %v2875, %v2892
    %v2898 = vadd.f32 %v2876, %v2893
    %v2899 = vadd.f32 %v2877, %v2891
    %s2900 = sld [smem:[#allocation2 + $0x94]]
    %v2901 = vstv %s2900
    %v2902 = vmul.f32 %v2901, %v1284
    %v2903 = vmul.f32 %v2901, %v1257
    %v2904 = vmul.f32 %v2901, %v1287
    %2908 = vrot.lane.b32.xlu0 %v2902, 109
    %v2909 = vpop.permute.xlu0 %2908
    %2910 = vrot.lane.b32.xlu0 %v2903, 109
    %v2911 = vpop.permute.xlu0 %2910
    %2912 = vrot.lane.b32.xlu0 %v2904, 109
    %v2913 = vpop.permute.xlu0 %2912
    %v2914 = vsel %vm119, %v2909, %v2911
    %v2915 = vsel %vm119, %v2911, %v2913
    %v2919 = vadd.f32 %v2897, %v2914
    %v2920 = vadd.f32 %v2898, %v2915
    %v2921 = vadd.f32 %v2899, %v2913
    %s2922 = sld [smem:[#allocation2 + $0x95]]
    %v2923 = vstv %s2922
    %v2924 = vmul.f32 %v2923, %v1284
    %v2925 = vmul.f32 %v2923, %v1257
    %v2926 = vmul.f32 %v2923, %v1287
    %2930 = vrot.lane.b32.xlu0 %v2924, 108
    %v2931 = vpop.permute.xlu0 %2930
    %2932 = vrot.lane.b32.xlu0 %v2925, 108
    %v2933 = vpop.permute.xlu0 %2932
    %2934 = vrot.lane.b32.xlu0 %v2926, 108
    %v2935 = vpop.permute.xlu0 %2934
    %v2936 = vsel %vm130, %v2931, %v2933
    %v2937 = vsel %vm130, %v2933, %v2935
    %v2941 = vadd.f32 %v2919, %v2936
    %v2942 = vadd.f32 %v2920, %v2937
    %v2943 = vadd.f32 %v2921, %v2935
    %s2944 = sld [smem:[#allocation2 + $0x96]]
    %v2945 = vstv %s2944
    %v2946 = vmul.f32 %v2945, %v1284
    %v2947 = vmul.f32 %v2945, %v1257
    %v2948 = vmul.f32 %v2945, %v1287
    %2952 = vrot.lane.b32.xlu0 %v2946, 92
    %v2953 = vpop.permute.xlu0 %2952
    %2954 = vrot.lane.b32.xlu0 %v2947, 92
    %v2955 = vpop.permute.xlu0 %2954
    %2956 = vrot.lane.b32.xlu0 %v2948, 92
    %v2957 = vpop.permute.xlu0 %2956
    %v2958 = vsel %vm141, %v2953, %v2955
    %v2959 = vsel %vm141, %v2955, %v2957
    %v2963 = vadd.f32 %v2941, %v2958
    %v2964 = vadd.f32 %v2942, %v2959
    %v2965 = vadd.f32 %v2943, %v2957
    %s2966 = sld [smem:[#allocation2 + $0x97]]
    %v2967 = vstv %s2966
    %v2968 = vmul.f32 %v2967, %v1284
    %v2969 = vmul.f32 %v2967, %v1257
    %v2970 = vmul.f32 %v2967, %v1287
    %2974 = vrot.lane.b32.xlu0 %v2968, 91
    %v2975 = vpop.permute.xlu0 %2974
    %2976 = vrot.lane.b32.xlu0 %v2969, 91
    %v2977 = vpop.permute.xlu0 %2976
    %2978 = vrot.lane.b32.xlu0 %v2970, 91
    %v2979 = vpop.permute.xlu0 %2978
    %v2980 = vsel %vm152, %v2975, %v2977
    %v2981 = vsel %vm152, %v2977, %v2979
    %v2985 = vadd.f32 %v2963, %v2980
    %v2986 = vadd.f32 %v2964, %v2981
    %v2987 = vadd.f32 %v2965, %v2979
    %s2988 = sld [smem:[#allocation2 + $0x98]]
    %v2989 = vstv %s2988
    %v2990 = vmul.f32 %v2989, %v1284
    %v2991 = vmul.f32 %v2989, %v1257
    %v2992 = vmul.f32 %v2989, %v1287
    %2996 = vrot.lane.b32.xlu0 %v2990, 90
    %v2997 = vpop.permute.xlu0 %2996
    %2998 = vrot.lane.b32.xlu0 %v2991, 90
    %v2999 = vpop.permute.xlu0 %2998
    %3000 = vrot.lane.b32.xlu0 %v2992, 90
    %v3001 = vpop.permute.xlu0 %3000
    %v3002 = vsel %vm163, %v2997, %v2999
    %v3003 = vsel %vm163, %v2999, %v3001
    %v3007 = vadd.f32 %v2985, %v3002
    %v3008 = vadd.f32 %v2986, %v3003
    %v3009 = vadd.f32 %v2987, %v3001
    %s3010 = sld [smem:[#allocation2 + $0x99]]
    %v3011 = vstv %s3010
    %v3012 = vmul.f32 %v3011, %v1285
    %v3013 = vmul.f32 %v3011, %v1273
    %v3014 = vmul.f32 %v3011, %v1288
    %v3015 = vadd.f32 %v3007, %v3012
    %v3016 = vadd.f32 %v3008, %v3013
    %v3017 = vadd.f32 %v3009, %v3014
    %s3018 = sld [smem:[#allocation2 + $0x9a]]
    %v3019 = vstv %s3018
    %v3020 = vmul.f32 %v3019, %v1285
    %v3021 = vmul.f32 %v3019, %v1273
    %v3022 = vmul.f32 %v3019, %v1288
    %3026 = vrot.lane.b32.xlu0 %v3020, 127
    %v3027 = vpop.permute.xlu0 %3026
    %3028 = vrot.lane.b32.xlu0 %v3021, 127
    %v3029 = vpop.permute.xlu0 %3028
    %3030 = vrot.lane.b32.xlu0 %v3022, 127
    %v3031 = vpop.permute.xlu0 %3030
    %v3032 = vsel %vm86, %v3027, %v3029
    %v3033 = vsel %vm86, %v3029, %v3031
    %v3037 = vadd.f32 %v3015, %v3032
    %v3038 = vadd.f32 %v3016, %v3033
    %v3039 = vadd.f32 %v3017, %v3031
    %s3040 = sld [smem:[#allocation2 + $0x9b]]
    %v3041 = vstv %s3040
    %v3042 = vmul.f32 %v3041, %v1285
    %v3043 = vmul.f32 %v3041, %v1273
    %v3044 = vmul.f32 %v3041, %v1288
    %3048 = vrot.lane.b32.xlu0 %v3042, 126
    %v3049 = vpop.permute.xlu0 %3048
    %3050 = vrot.lane.b32.xlu0 %v3043, 126
    %v3051 = vpop.permute.xlu0 %3050
    %3052 = vrot.lane.b32.xlu0 %v3044, 126
    %v3053 = vpop.permute.xlu0 %3052
    %v3054 = vsel %vm97, %v3049, %v3051
    %v3055 = vsel %vm97, %v3051, %v3053
    %v3059 = vadd.f32 %v3037, %v3054
    %v3060 = vadd.f32 %v3038, %v3055
    %v3061 = vadd.f32 %v3039, %v3053
    %s3062 = sld [smem:[#allocation2 + $0x9c]]
    %v3063 = vstv %s3062
    %v3064 = vmul.f32 %v3063, %v1285
    %v3065 = vmul.f32 %v3063, %v1273
    %v3066 = vmul.f32 %v3063, %v1288
    %3070 = vrot.lane.b32.xlu0 %v3064, 110
    %v3071 = vpop.permute.xlu0 %3070
    %3072 = vrot.lane.b32.xlu0 %v3065, 110
    %v3073 = vpop.permute.xlu0 %3072
    %3074 = vrot.lane.b32.xlu0 %v3066, 110
    %v3075 = vpop.permute.xlu0 %3074
    %v3076 = vsel %vm108, %v3071, %v3073
    %v3077 = vsel %vm108, %v3073, %v3075
    %v3081 = vadd.f32 %v3059, %v3076
    %v3082 = vadd.f32 %v3060, %v3077
    %v3083 = vadd.f32 %v3061, %v3075
    %s3084 = sld [smem:[#allocation2 + $0x9d]]
    %v3085 = vstv %s3084
    %v3086 = vmul.f32 %v3085, %v1285
    %v3087 = vmul.f32 %v3085, %v1273
    %v3088 = vmul.f32 %v3085, %v1288
    %3092 = vrot.lane.b32.xlu0 %v3086, 109
    %v3093 = vpop.permute.xlu0 %3092
    %3094 = vrot.lane.b32.xlu0 %v3087, 109
    %v3095 = vpop.permute.xlu0 %3094
    %3096 = vrot.lane.b32.xlu0 %v3088, 109
    %v3097 = vpop.permute.xlu0 %3096
    %v3098 = vsel %vm119, %v3093, %v3095
    %v3099 = vsel %vm119, %v3095, %v3097
    %v3103 = vadd.f32 %v3081, %v3098
    %v3104 = vadd.f32 %v3082, %v3099
    %v3105 = vadd.f32 %v3083, %v3097
    %s3106 = sld [smem:[#allocation2 + $0x9e]]
    %v3107 = vstv %s3106
    %v3108 = vmul.f32 %v3107, %v1285
    %v3109 = vmul.f32 %v3107, %v1273
    %v3110 = vmul.f32 %v3107, %v1288
    %3114 = vrot.lane.b32.xlu0 %v3108, 108
    %v3115 = vpop.permute.xlu0 %3114
    %3116 = vrot.lane.b32.xlu0 %v3109, 108
    %v3117 = vpop.permute.xlu0 %3116
    %3118 = vrot.lane.b32.xlu0 %v3110, 108
    %v3119 = vpop.permute.xlu0 %3118
    %v3120 = vsel %vm130, %v3115, %v3117
    %v3121 = vsel %vm130, %v3117, %v3119
    %v3125 = vadd.f32 %v3103, %v3120
    %v3126 = vadd.f32 %v3104, %v3121
    %v3127 = vadd.f32 %v3105, %v3119
    %s3128 = sld [smem:[#allocation2 + $0x9f]]
    %v3129 = vstv %s3128
    %v3130 = vmul.f32 %v3129, %v1285
    %v3131 = vmul.f32 %v3129, %v1273
    %v3132 = vmul.f32 %v3129, %v1288
    %3136 = vrot.lane.b32.xlu0 %v3130, 92
    %v3137 = vpop.permute.xlu0 %3136
    %3138 = vrot.lane.b32.xlu0 %v3131, 92
    %v3139 = vpop.permute.xlu0 %3138
    %3140 = vrot.lane.b32.xlu0 %v3132, 92
    %v3141 = vpop.permute.xlu0 %3140
    %v3142 = vsel %vm141, %v3137, %v3139
    %v3143 = vsel %vm141, %v3139, %v3141
    %v3147 = vadd.f32 %v3125, %v3142
    %v3148 = vadd.f32 %v3126, %v3143
    %v3149 = vadd.f32 %v3127, %v3141
    %s3150 = sld [smem:[#allocation2 + $0xa0]]
    %v3151 = vstv %s3150
    %v3152 = vmul.f32 %v3151, %v1285
    %v3153 = vmul.f32 %v3151, %v1273
    %v3154 = vmul.f32 %v3151, %v1288
    %3158 = vrot.lane.b32.xlu0 %v3152, 91
    %v3159 = vpop.permute.xlu0 %3158
    %3160 = vrot.lane.b32.xlu0 %v3153, 91
    %v3161 = vpop.permute.xlu0 %3160
    %3162 = vrot.lane.b32.xlu0 %v3154, 91
    %v3163 = vpop.permute.xlu0 %3162
    %v3164 = vsel %vm152, %v3159, %v3161
    %v3165 = vsel %vm152, %v3161, %v3163
    %v3169 = vadd.f32 %v3147, %v3164
    %v3170 = vadd.f32 %v3148, %v3165
    %v3171 = vadd.f32 %v3149, %v3163
    %s3172 = sld [smem:[#allocation2 + $0xa1]]
    %v3173 = vstv %s3172
    %v3174 = vmul.f32 %v3173, %v1285
    %v3175 = vmul.f32 %v3173, %v1273
    %v3176 = vmul.f32 %v3173, %v1288
    %3180 = vrot.lane.b32.xlu0 %v3174, 90
    %v3181 = vpop.permute.xlu0 %3180
    %3182 = vrot.lane.b32.xlu0 %v3175, 90
    %v3183 = vpop.permute.xlu0 %3182
    %3184 = vrot.lane.b32.xlu0 %v3176, 90
    %v3185 = vpop.permute.xlu0 %3184
    %v3186 = vsel %vm163, %v3181, %v3183
    %v3187 = vsel %vm163, %v3183, %v3185
    %v3191 = vadd.f32 %v3169, %v3186
    %v3192 = vadd.f32 %v3170, %v3187
    %v3193 = vadd.f32 %v3171, %v3185
    %s3194 = sld [smem:[#allocation4 + $0x5]]
    %v3195 = vstv %s3194
    %v3196 = vadd.f32 %v3191, %v3195
    %v3197 = vadd.f32 %v3192, %v3195
    %v3198 = vadd.f32 %v3193, %v3195
    %vm3199 = vcmp.ge.f32.partialorder %v3196, 0.0
    %vm3200 = vcmp.ge.f32.partialorder %v3197, 0.0
    %vm3201 = vcmp.ge.f32.partialorder %v3198, 0.0
    %v3202 = vmul.f32 %v3196, 0.1
    %v3203 = vmul.f32 %v3197, 0.1
    %v3204 = vmul.f32 %v3198, 0.1
    %v3205 = vsel %vm3199, %v3196, %v3202
    %v3206 = vsel %vm3200, %v3197, %v3203
    %v3207 = vsel %vm3201, %v3198, %v3204
    %3211 = vrot.lane.b32.xlu0 %v3205, 19
    %v3212 = vpop.permute.xlu0 %3211
    %3213 = vrot.lane.b32.xlu0 %v3206, 19
    %v3214 = vpop.permute.xlu0 %3213
    %3215 = vrot.lane.b32.xlu0 %v3207, 19
    %v3216 = vpop.permute.xlu0 %3215
    %v3217 = vsel %vm345, %v3212, %v3214
    %v3218 = vsel %vm345, %v3214, %v3216
    %v3222 = vadd.f32 %v1285, %v3212
    %v3223 = vadd.f32 %v1273, %v3217
    %v3224 = vadd.f32 %v1288, %v3218
    %v3225 = vmul.f32 %v3222, %v1873
    %v3226 = vmul.f32 %v3223, %v1878
    %v3227 = vmul.f32 %v3224, %v1879
    %3231 = vrot.lane.b32.xlu0 %v3225, 98
    %v3232 = vpop.permute.xlu0 %3231
    %3233 = vrot.lane.b32.xlu0 %v3226, 98
    %v3234 = vpop.permute.xlu0 %3233
    %3235 = vrot.lane.b32.xlu0 %v3227, 98
    %v3236 = vpop.permute.xlu0 %3235
    %v3237 = vsel %vm408, %v3232, %v3234
    %v3238 = vsel %vm408, %v3234, %v3236
    %v3242 = vsel %vm414, %v3237, 0.0
    %v3243 = vsel %vm414, %v3238, 0.0
    %v3244 = vadd.f32 %v3242, %v3243
    %v3245 = vsel %vm418, %v3236, 0.0
    %v3246 = vadd.f32 %v3244, %v3245
    %3247 = vadd.xlane.f32.xlu0 %v3246
    %v3248 = vpop.xlane.xlu0 %3247
    %v3249 = vrot.slane %v3248, 4
    %v3250 = vadd.f32 %v3248, %v3249
    %v3251 = vrot.slane %v3250, 2
    %v3252 = vadd.f32 %v3250, %v3251
    %v3253 = vrot.slane %v3252, 1
    %v3254 = vadd.f32 %v3252, %v3253
    %s3255 = vtos %v3254
    %v3256 = vstv %s3255
    %v3257 = vmul.f32 %v3256, 0.001953125
    %v3258 = vsub.f32 %v3225, %v3257
    %v3259 = vsub.f32 %v3226, %v3257
    %v3260 = vsub.f32 %v3227, %v3257
    %v3261 = vmul.f32 %v3258, %v1873
    %v3262 = vmul.f32 %v3259, %v1878
    %v3263 = vmul.f32 %v3260, %v1879
    %v3264 = vmul.f32 %v3261, %v3261
    %v3265 = vmul.f32 %v3262, %v3262
    %v3266 = vmul.f32 %v3263, %v3263
    %3270 = vrot.lane.b32.xlu0 %v3264, 98
    %v3271 = vpop.permute.xlu0 %3270
    %3272 = vrot.lane.b32.xlu0 %v3265, 98
    %v3273 = vpop.permute.xlu0 %3272
    %3274 = vrot.lane.b32.xlu0 %v3266, 98
    %v3275 = vpop.permute.xlu0 %3274
    %v3276 = vsel %vm408, %v3271, %v3273
    %v3277 = vsel %vm408, %v3273, %v3275
    %v3281 = vsel %vm414, %v3276, 0.0
    %v3282 = vsel %vm414, %v3277, 0.0
    %v3283 = vadd.f32 %v3281, %v3282
    %v3284 = vsel %vm418, %v3275, 0.0
    %v3285 = vadd.f32 %v3283, %v3284
    %3286 = vadd.xlane.f32.xlu0 %v3285
    %v3287 = vpop.xlane.xlu0 %3286
    %v3288 = vrot.slane %v3287, 4
    %v3289 = vadd.f32 %v3287, %v3288
    %v3290 = vrot.slane %v3289, 2
    %v3291 = vadd.f32 %v3289, %v3290
    %v3292 = vrot.slane %v3291, 1
    %v3293 = vadd.f32 %v3291, %v3292
    %s3294 = vtos %v3293
    %v3295 = vstv %s3294
    %v3296 = vmul.f32 %v3295, 0.001953125
    %s3297 = sld [smem:[#allocation6 + $0x5]]
    %v3298 = vadd.f32 %v3296, 1e-05
    %v3299 = vrsqrt.pop %v3298
    %v3300 = vstv %s3297
    %v3301 = vmul.f32 %v3300, %v3299
    %v3302 = vmul.f32 %v3261, %v3301
    %v3303 = vmul.f32 %v3262, %v3301
    %v3304 = vmul.f32 %v3263, %v3301
    %s3305 = sld [smem:[#allocation7 + $0x5]]
    %v3306 = vstv %s3305
    %v3307 = vadd.f32 %v3302, %v3306
    %v3308 = vadd.f32 %v3303, %v3306
    %v3309 = vadd.f32 %v3304, %v3306
    %v3310 = vmul.f32 %v3307, %v1873
    %v3311 = vmul.f32 %v3308, %v1878
    %v3312 = vmul.f32 %v3309, %v1879
    %v3313 = vsel %vm381, 0.0, %v1968
    %v3314 = vsel %vm381, 0.0, %v2639
    %v3315 = vsel %vm381, 0.0, %v3310
    %v3316 = vsel %vm408, %v1970, 0.0
    %v3317 = vsel %vm408, %v2641, 0.0
    %v3318 = vsel %vm408, %v3312, 0.0
    %v3328 = vcombine.low %v3313, %v1969
    %v3330 = vunpack.c.l.s4 1983009808
    %v3331 = vunpack.c.0.s8 %v3330
    %v3332 = vlaneseq
    %v3333 = vshrl.u32 %v3332, 7
    %v3334 = vsub.s32 %v3331, %v3333
    %v3335 = vrot.slane %v3328, %v3334
    %v3337 = vunpack.c.l.s4 1983009808
    %v3338 = vunpack.c.0.s8 %v3337
    %v3339 = vlaneseq
    %v3340 = vshrl.u32 %v3339, 7
    %v3341 = vsub.s32 %v3338, %v3340
    %v3342 = vrot.slane %v3316, %v3341
    %v3343 = vcombine.low %v3335, %v3342
    %v3344 = vcombine.low %v3314, %v2640
    %v3346 = vunpack.c.l.s4 1983009808
    %v3347 = vunpack.c.0.s8 %v3346
    %v3348 = vlaneseq
    %v3349 = vshrl.u32 %v3348, 7
    %v3350 = vsub.s32 %v3347, %v3349
    %v3351 = vrot.slane %v3344, %v3350
    %v3353 = vunpack.c.l.s4 1983009808
    %v3354 = vunpack.c.0.s8 %v3353
    %v3355 = vlaneseq
    %v3356 = vshrl.u32 %v3355, 7
    %v3357 = vsub.s32 %v3354, %v3356
    %v3358 = vrot.slane %v3317, %v3357
    %v3359 = vcombine.low %v3351, %v3358
    %v3360 = vcombine.low %v3315, %v3311
    %v3362 = vunpack.c.l.s4 1983009808
    %v3363 = vunpack.c.0.s8 %v3362
    %v3364 = vlaneseq
    %v3365 = vshrl.u32 %v3364, 7
    %v3366 = vsub.s32 %v3363, %v3365
    %v3367 = vrot.slane %v3360, %v3366
    %v3369 = vunpack.c.l.s4 1983009808
    %v3370 = vunpack.c.0.s8 %v3369
    %v3371 = vlaneseq
    %v3372 = vshrl.u32 %v3371, 7
    %v3373 = vsub.s32 %v3370, %v3372
    %v3374 = vrot.slane %v3318, %v3373
    %v3375 = vcombine.low %v3367, %v3374
    %3379 = vst [vmem:[%s6] sm:$0x3f] %v3343
    %3380 = vst [vmem:[%s6 + $0x6] sm:$0x3f] %v3359
    %3381 = vst [vmem:[%s6 + $0xc] sm:$0x3f] %v3375
    // Predicated region
    $region42: #{decoder_layer.1} parent=1 // pred_check
      _
    $region43: #{decoder_layer.1} parent=1 // pred_check_branch
      %3383 = sbr.rel (0) target = $region45
    $region44: #{decoder_layer.1} parent=1 // pred_region
      _
    $region45: #{decoder_layer.1} parent=1 // pred_fallthru
      _
    // Predicated region
    $region46: #{decoder_layer.1} parent=1 // pred_check
      _
    $region47: #{decoder_layer.1} parent=1 // pred_check_branch
      %3385 = sbr.rel (0) target = $region49
    $region48: #{decoder_layer.1} parent=1 // pred_region
      _
    $region49: #{decoder_layer.1} parent=1 // pred_fallthru
      _
    %3386 = vsyncpa [#allocation3], 1
    %3387 = vsyncpa [#allocation5], 1
    %3388 = vsyncpa [#allocation8], 1

</llo_original>
